<compile_context>
chip_gen: v5e
topology: v5e:2x2
jax: 0.10.0
libtpu: 0.0.40
codegen_flags: <defaults>
</compile_context>

<pallas_src>
import jax
import jax.numpy as jnp
import numpy as np
from jax import lax
from jax.experimental import pallas as pl
from jax.experimental.pallas import tpu as pltpu


def _round_up(x, m):
    return (x + m - 1) // m * m


def _pick_tile(n_pad, batch):
    """Event/slot tile size: a multiple of 128 (lane-dense stores), divides the
    padded event count, and keeps the dominant (B, TILE, N_pad) int32 compare
    matrix (x2 headroom for the double-buffered I/O blocks) within ~8 MiB so it
    fits v5e's 16 MiB scoped-VMEM default and v7x's 64 MiB physical VMEM."""
    if n_pad <= 256:
        return n_pad
    budget = 8 << 20
    ti = (budget // (batch * n_pad * 4 * 2)) // 128 * 128
    ti = max(128, min(256, ti))          # 128-256 per the v7x/v5e sizing guidance
    while n_pad % ti:
        ti -= 128
    return ti


def _surface_sample_pallas(xy, dim=(128, 128)):
    """Quantize events and compute, per batch element, the compacted list of
    "surface" events (the first event on each occupied pixel) and its length.

    Returns:
      xy_norm: (B, N, 2) f32  -- trunc(xy * (min(dim)-1)) / min(dim)
      elig:    (B, N)    i32  -- elig[b, :count[b]] = surface-event indices
                                 (ascending original order); 0-padded after
      count:   (B, 1)    i32  -- number of surface events per batch
    """
    B, N, C = xy.shape
    assert C == 2, "xy must have last dim 2"
    W, H = dim
    m = float(min(dim))

    # ---- hoisted elementwise prologue (plain JAX; XLA fuses it) ------------
    qi = (xy.astype(jnp.float32) * (m - 1.0)).astype(jnp.int32)  # trunc, like torch .int()
    xy_norm = qi.astype(jnp.float32) / jnp.float32(m)            # torch.true_divide(xy, min(dim))
    code = qi[..., 0] + W * qi[..., 1]                           # (B, N) per-batch pixel id (>= 0)

    # Pad the event axis to a lane multiple; padded events get code -1 so they
    # can never be a "first occurrence" of a real pixel, and they are masked
    # out of `keep` below so they never inflate `count`.
    Np = _round_up(max(N, 1), 128)
    if Np != N:
        code = jnp.pad(code, ((0, 0), (0, Np - N)), constant_values=-1)
    TI = _pick_tile(Np, B)
    n_tiles = Np // TI

    # ---- phase 1: first-occurrence test + compacted slot assignment --------
    def dedup_kernel(code_all_ref, code_tile_ref, slot_ref, count_ref, carry_ref):
        step = pl.program_id(0)

        @pl.when(step == 0)
        def _():
            carry_ref[...] = jnp.zeros_like(carry_ref)

        code_all = code_all_ref[...]                        # (B, Np) resident
        code_tile = code_tile_ref[...]                      # (B, TI) this step's events

        # keep(i) <=> event i is the first event of its pixel (min-index test)
        jj = lax.broadcasted_iota(jnp.int32, (B, TI, Np), 2)
        same = code_tile[:, :, None] == code_all[:, None, :]
        first = jnp.min(jnp.where(same, jj, Np), axis=2)    # (B, TI)
        gidx = step * TI + lax.broadcasted_iota(jnp.int32, (B, TI), 1)
        keep = (first == gidx) & (gidx < N)                 # mask padded events
        keep_i = keep.astype(jnp.int32)

        # slot(i) = #kept events strictly before i: per-tile prefix sum + carry
        si = lax.broadcasted_iota(jnp.int32, (B, TI, TI), 1)
        sj = lax.broadcasted_iota(jnp.int32, (B, TI, TI), 2)
        prev_local = jnp.sum(jnp.where(sj < si, keep_i[:, None, :], 0), axis=2)
        carry = carry_ref[...]                              # (B, 1)
        total = carry + jnp.sum(keep_i, axis=1, keepdims=True)

        slot_ref[...] = jnp.where(keep, carry + prev_local, -1)
        carry_ref[...] = total
        count_ref[...] = total        # resident block: last step's value persists

    slot_of_event, count = pl.pallas_call(
        dedup_kernel,
        out_shape=(
            jax.ShapeDtypeStruct((B, Np), jnp.int32),
            jax.ShapeDtypeStruct((B, 1), jnp.int32),
        ),
        grid=(n_tiles,),
        in_specs=[
            pl.BlockSpec((B, Np), lambda i: (0, 0)),        # full code, resident (no re-DMA churn)
            pl.BlockSpec((B, TI), lambda i: (0, i)),        # this step's event tile
        ],
        out_specs=(
            pl.BlockSpec((B, TI), lambda i: (0, i)),
            pl.BlockSpec((B, 1), lambda i: (0, 0)),
        ),
        scratch_shapes=[pltpu.VMEM((B, 1), jnp.int32)],     # prefix-sum carry
        compiler_params=pltpu.CompilerParams(
            dimension_semantics=("arbitrary",)),            # sequential: carried cumsum
    )(code, code)

    # ---- phase 2: compaction  elig[slot] = index of slot-th kept event -----
    def compact_kernel(slot_ref, elig_ref):
        step = pl.program_id(0)
        slot = slot_ref[...]                                # (B, Np) resident
        sidx = step * TI + lax.broadcasted_iota(jnp.int32, (B, TI, Np), 1)
        evj = lax.broadcasted_iota(jnp.int32, (B, TI, Np), 2)
        sel = slot[:, None, :] == sidx                      # fused one-hot
        elig_ref[...] = jnp.sum(jnp.where(sel, evj, 0), axis=2)

    elig = pl.pallas_call(
        compact_kernel,
        out_shape=jax.ShapeDtypeStruct((B, Np), jnp.int32),
        grid=(n_tiles,),
        in_specs=[pl.BlockSpec((B, Np), lambda i: (0, 0))],
        out_specs=pl.BlockSpec((B, TI), lambda i: (0, i)),
        compiler_params=pltpu.CompilerParams(
            dimension_semantics=("parallel",)),             # shards across TCs on v7x
    )(slot_of_event)

    return xy_norm, elig[:, :N], count


def surface_event_sample_forward(xy, nevent, key, dim=(128, 128)):
    """JAX/Pallas equivalent of Surface_Event_Sample.forward(xy, nevent)."""
    B = xy.shape[0]
    xy_norm, elig, count = _surface_sample_pallas(xy, dim)
    # torch.randint(0, len(idx_unique), (nevent,)): uniform with replacement
    # over the surface-event set of each batch element (count >= 1 for N >= 1).
    r = jax.random.randint(key, (B, nevent), 0, count)      # (B,1) maxval broadcasts
    sample_idx = jnp.take_along_axis(elig, r, axis=1)       # (B, nevent) int32
    return xy_norm, sample_idx


def _reference_numpy(xy_np, dim):
    """Pure numpy mirror of the PyTorch module (voxel scatter + np.unique).
    Returns the normalized xy and, per batch, the *set* of eligible indices
    (sorted) that torch.randint would sample from."""
    W, H = dim
    m = min(dim)
    B, N, _ = xy_np.shape
    xy_q = (xy_np * np.float32(m - 1)).astype(np.int32)     # trunc, like torch .int()
    xy_norm = xy_q.astype(np.float32) / np.float32(m)
    vox = np.zeros((B, H, W), dtype=np.int32)
    elig_sets = []
    for b in range(B):
        xb = xy_q[b, :, 0].astype(np.int64)
        yb = xy_q[b, :, 1].astype(np.int64)
        np.add.at(vox[b], (yb, xb), 1)
        cnt = vox[b, yb, xb]
        idx1 = np.where(cnt == 1)[0]
        idx2 = np.where(cnt > 1)[0]
        encode = xb[idx2] + yb[idx2] * 10000
        _, local = np.unique(encode, return_index=True)
        idx3 = idx2[local]
        elig_sets.append(np.sort(np.concatenate([idx1, idx3])).astype(np.int64))
    return xy_norm, elig_sets


if __name__ == "__main__":
    dim = (128, 128)
    key = jax.random.PRNGKey(0)
    ok = True

    # case 1: tiny, N a lane multiple (single tile per phase)
    # case 2: larger, N not a multiple of 128 -> exercises event padding, the
    #         carried prefix sum across several event tiles and the parallel
    #         slot-tile grid.
    for (Bc, Nc, nevent, lo) in [(2, 256, 64, 16), (2, 1000, 128, 48)]:
        key, kpix, ksample = jax.random.split(key, 3)
        # Events on a coarse sub-grid of the sensor so both single-event and
        # multi-event pixels occur (exercises count==1 and count>1 branches).
        pix = jax.random.randint(kpix, (Bc, Nc, 2), 0, lo)
        xy = (pix.astype(jnp.float32) + 0.5) / jnp.float32(dim[0] - 1)  # in (0, 1)

        xy_norm, elig, count = _surface_sample_pallas(xy, dim)
        r = jax.random.randint(ksample, (Bc, nevent), 0, count)
        sample_idx = jnp.take_along_axis(elig, r, axis=1)
        xy_norm, elig, count, sample_idx = jax.block_until_ready(
            (xy_norm, elig, count, sample_idx))

        # ---- verify against the numpy reference of the PyTorch module ----
        ref_xy, ref_elig = _reference_numpy(np.asarray(xy, dtype=np.float32), dim)
        if not np.allclose(np.asarray(xy_norm), ref_xy, atol=1e-6, rtol=1e-6):
            ok = False
        count_np = np.asarray(count)[:, 0]
        elig_np = np.asarray(elig)
        samp_np = np.asarray(sample_idx)
        if samp_np.shape != (Bc, nevent):
            ok = False
        for b in range(Bc):
            k = int(count_np[b])
            if k != len(ref_elig[b]):
                ok = False
                continue
            # the kernel's compacted list must be exactly the reference's
            # surface-event set (set equality is what matters for the uniform
            # sampling distribution)
            if not np.array_equal(np.sort(elig_np[b, :k]), ref_elig[b]):
                ok = False
            # sampled indices must all come from that set
            if not np.all(np.isin(samp_np[b], ref_elig[b])):
                ok = False

    print("KERNEL_OK" if ok else "KERNEL_MISMATCH")
</pallas_src>

<mosaic_0001>
module attributes {stable_mosaic.version = 11 : i64} {
  func.func @dedup_kernel(%arg0: i32, %arg1: memref<2x256xi32, #tpu.memory_space<vmem>>, %arg2: memref<2x256xi32, #tpu.memory_space<vmem>>, %arg3: memref<2x256xi32, #tpu.memory_space<vmem>>, %arg4: memref<2x1xi32, #tpu.memory_space<vmem>>, %arg5: memref<2x1xi32, #tpu.memory_space<vmem>>) attributes {dimension_semantics = [#tpu.dimension_semantics<arbitrary>], iteration_bounds = array<i64: 1>, scalar_prefetch = 0 : i64, scratch_operands = 1 : i64, tpu.core_type = #tpu.core_type<tc>, window_params = [{pipeline_mode = #tpu.pipeline_mode<synchronous>, transform_indices = @transform_0, window_bounds = array<i64: 2, 256>}, {transform_indices = @transform_1, window_bounds = array<i64: 2, 256>}, {transform_indices = @transform_2, window_bounds = array<i64: 2, 256>}, {pipeline_mode = #tpu.pipeline_mode<synchronous>, transform_indices = @transform_3, window_bounds = array<i64: 2, 1>}]} {
    %c0_i32 = arith.constant 0 : i32
    %0 = arith.cmpi eq, %arg0, %c0_i32 : i32
    %1 = arith.extui %0 : i1 to i32
    %c0_i32_0 = arith.constant 0 : i32
    %2 = arith.cmpi ne, %1, %c0_i32_0 : i32
    scf.if %2 {
      %c0_i32_17 = arith.constant 0 : i32
      %43 = vector.broadcast %c0_i32_17 : i32 to vector<2x1xi32>
      %c0_18 = arith.constant 0 : index
      %c0_19 = arith.constant 0 : index
      %44 = vector.load %arg5[%c0_18, %c0_19] : memref<2x1xi32, #tpu.memory_space<vmem>>, vector<2x1xi32>
      tpu.vector_store %arg5[%c0_18, %c0_19], %43 {strides = array<i32>} : memref<2x1xi32, #tpu.memory_space<vmem>>, vector<2x1xi32>,
    } else {
    }
    %c0 = arith.constant 0 : index
    %c0_1 = arith.constant 0 : index
    %3 = vector.load %arg1[%c0, %c0_1] : memref<2x256xi32, #tpu.memory_space<vmem>>, vector<2x256xi32>
    %c0_2 = arith.constant 0 : index
    %c0_3 = arith.constant 0 : index
    %4 = vector.load %arg2[%c0_2, %c0_3] : memref<2x256xi32, #tpu.memory_space<vmem>>, vector<2x256xi32>
    %5 = tpu.iota {dimensions = array<i32: 2>} : vector<2x256x256xi32>
    %6 = vector.shape_cast %4 : vector<2x256xi32> to vector<2x256x1xi32>
    %7 = vector.shape_cast %3 : vector<2x256xi32> to vector<2x1x256xi32>
    %8 = vector.broadcast %6 : vector<2x256x1xi32> to vector<2x256x256xi32>
    %9 = vector.broadcast %7 : vector<2x1x256xi32> to vector<2x256x256xi32>
    %10 = arith.cmpi eq, %8, %9 : vector<2x256x256xi32>
    %c256_i32 = arith.constant 256 : i32
    %11 = vector.broadcast %c256_i32 : i32 to vector<2x256x256xi32>
    %12 = arith.select %10, %5, %11 : vector<2x256x256xi1>, vector<2x256x256xi32>
    %cst = arith.constant dense<2147483647> : vector<2x256xi32>
    %13 = vector.multi_reduction <minsi>, %12, %cst [2] : vector<2x256x256xi32> to vector<2x256xi32>
    %c256_i32_4 = arith.constant 256 : i32
    %14 = arith.muli %arg0, %c256_i32_4 : i32
    %15 = tpu.iota {dimensions = array<i32: 1>} : vector<2x256xi32>
    %16 = vector.broadcast %14 : i32 to vector<2x256xi32>
    %17 = arith.addi %16, %15 : vector<2x256xi32>
    %18 = arith.cmpi eq, %13, %17 : vector<2x256xi32>
    %c256_i32_5 = arith.constant 256 : i32
    %19 = vector.broadcast %c256_i32_5 : i32 to vector<2x256xi32>
    %20 = arith.cmpi slt, %17, %19 : vector<2x256xi32>
    %21 = arith.andi %18, %20 : vector<2x256xi1>
    %22 = arith.extui %21 : vector<2x256xi1> to vector<2x256xi32>
    %23 = tpu.iota {dimensions = array<i32: 1>} : vector<2x256x256xi32>
    %24 = tpu.iota {dimensions = array<i32: 2>} : vector<2x256x256xi32>
    %25 = arith.cmpi slt, %24, %23 : vector<2x256x256xi32>
    %26 = vector.shape_cast %22 : vector<2x256xi32> to vector<2x1x256xi32>
    %c0_i32_6 = arith.constant 0 : i32
    %27 = vector.shape_cast %26 : vector<2x1x256xi32> to vector<2x1x256xi32>
    %28 = vector.broadcast %27 : vector<2x1x256xi32> to vector<2x256x256xi32>
    %29 = vector.broadcast %c0_i32_6 : i32 to vector<2x256x256xi32>
    %30 = arith.select %25, %28, %29 : vector<2x256x256xi1>, vector<2x256x256xi32>
    %cst_7 = arith.constant dense<0> : vector<2x256xi32>
    %31 = vector.multi_reduction <add>, %30, %cst_7 [2] : vector<2x256x256xi32> to vector<2x256xi32>
    %c0_8 = arith.constant 0 : index
    %c0_9 = arith.constant 0 : index
    %32 = vector.load %arg5[%c0_8, %c0_9] : memref<2x1xi32, #tpu.memory_space<vmem>>, vector<2x1xi32>
    %cst_10 = arith.constant dense<0> : vector<2xi32>
    %33 = vector.multi_reduction <add>, %22, %cst_10 [1] : vector<2x256xi32> to vector<2xi32>
    %34 = vector.shape_cast %33 : vector<2xi32> to vector<2x1xi32>
    %35 = arith.addi %32, %34 : vector<2x1xi32>
    %36 = vector.broadcast %32 : vector<2x1xi32> to vector<2x256xi32>
    %37 = arith.addi %36, %31 : vector<2x256xi32>
    %c-1_i32 = arith.constant -1 : i32
    %38 = vector.broadcast %c-1_i32 : i32 to vector<2x256xi32>
    %39 = arith.select %21, %37, %38 : vector<2x256xi1>, vector<2x256xi32>
    %c0_11 = arith.constant 0 : index
    %c0_12 = arith.constant 0 : index
    %40 = vector.load %arg3[%c0_11, %c0_12] : memref<2x256xi32, #tpu.memory_space<vmem>>, vector<2x256xi32>
    tpu.vector_store %arg3[%c0_11, %c0_12], %39 {strides = array<i32>} : memref<2x256xi32, #tpu.memory_space<vmem>>, vector<2x256xi32>,
    %c0_13 = arith.constant 0 : index
    %c0_14 = arith.constant 0 : index
    %41 = vector.load %arg5[%c0_13, %c0_14] : memref<2x1xi32, #tpu.memory_space<vmem>>, vector<2x1xi32>
    tpu.vector_store %arg5[%c0_13, %c0_14], %35 {strides = array<i32>} : memref<2x1xi32, #tpu.memory_space<vmem>>, vector<2x1xi32>,
    %c0_15 = arith.constant 0 : index
    %c0_16 = arith.constant 0 : index
    %42 = vector.load %arg4[%c0_15, %c0_16] : memref<2x1xi32, #tpu.memory_space<vmem>>, vector<2x1xi32>
    tpu.vector_store %arg4[%c0_15, %c0_16], %35 {strides = array<i32>} : memref<2x1xi32, #tpu.memory_space<vmem>>, vector<2x1xi32>,
    return
  }
  func.func @transform_0(%arg0: i32) -> (i32, i32) {
    %c0_i32 = arith.constant 0 : i32
    %c0_i32_0 = arith.constant 0 : i32
    %c0_i32_1 = arith.constant 0 : i32
    return %c0_i32, %c0_i32_0 : i32, i32
  }
  func.func @transform_1(%arg0: i32) -> (i32, i32) {
    %c0_i32 = arith.constant 0 : i32
    %c0_i32_0 = arith.constant 0 : i32
    return %c0_i32, %arg0 : i32, i32
  }
  func.func @transform_2(%arg0: i32) -> (i32, i32) {
    %c0_i32 = arith.constant 0 : i32
    %c0_i32_0 = arith.constant 0 : i32
    return %c0_i32, %arg0 : i32, i32
  }
  func.func @transform_3(%arg0: i32) -> (i32, i32) {
    %c0_i32 = arith.constant 0 : i32
    %c0_i32_0 = arith.constant 0 : i32
    %c0_i32_1 = arith.constant 0 : i32
    return %c0_i32, %c0_i32_0 : i32, i32
  }
}

</mosaic_0001>

<llo_original>
// kernel: tpu_custom_call.1
$region0: #{tpu_custom_call.1}
  #allocation0 [shape = 'u32[]', space=smem, size = 0x4, offset = 0x4, fixed_abs, tag = 'smem constant byte address 0x4 - core index']
  #allocation1 [shape = 'u32[72,128]{1,0:T(1,128)}', space=vmem, size = 0x9000, scoped, tag = 'internal scratch']
  #allocation2 [shape = 's32[2,1]{1,0:T(2,128)}', space=vmem, size = 0x400, scoped, tag = 'scratch operand']
  %s0 = inlined_call_operand.hbm [shape: s32[2,256], index: 0, kind: input, shape index: {}]
  %s1 = inlined_call_operand.hbm [shape: s32[2,256], index: 1, kind: input, shape index: {}]
  %s2 = inlined_call_operand.hbm [shape: s32[2,256], index: 2, kind: output, shape index: {0}]
  %s3 = inlined_call_operand.vmem [shape: s32[2,1], index: 3, kind: output, shape index: {1}]
  %4 = xla_tuple %s2, %s3
  %s5 = sld [smem:[#allocation0]]
  $region38: #{tpu_custom_call.1} parent=0
    _
  %s7 = ssub.s32 1, %s5
  %s8 = scalar_select 0, %s7, %s5
  $region1: #{tpu_custom_call.1} parent=0
    #allocation3 [shape = 'u8[2048]{0}', space=vmem, size = 0x800, scoped, tag = 'input window, operand 0, single buffered']
    #allocation4 [shape = 's32[1]{0}', space=sflag, size = 0x4, scoped, tag = 'scoped memory for tpu_custom_call.1']
    #allocation5 [shape = 's32[1]{0}', space=sflag, size = 0x4, scoped, tag = 'scoped memory for tpu_custom_call.1']
    #allocation6 [shape = 'u8[2048]{0}', space=vmem, size = 0x800, scoped, tag = 'input window, operand 1, single buffered']
    #allocation7 [shape = 's32[1]{0}', space=sflag, size = 0x4, scoped, tag = 'scoped memory for tpu_custom_call.1']
    #allocation8 [shape = 'u8[2048]{0}', space=vmem, size = 0x800, scoped, tag = 'output window, operand 0, single buffered']
    %9 = vsyncpa [#allocation4], 0
    %10 = vsyncpa [#allocation7], 0
    %11 = vsyncpa [#allocation5], 0
    // Predicated region
    $region2: #{tpu_custom_call.1} parent=1 // pred_check
      _
    $region3: #{tpu_custom_call.1} parent=1 // pred_check_branch
      %13 = sbr.rel (0) target = $region5
    $region4: #{tpu_custom_call.1} parent=1 // pred_region
      %15 = vsyncadd [#allocation4], 0
      %s17 = sshll.u32 %s0, 4
      %s18 = int_to_ptr.hbm [resolvable:$true] %s17
      %s19 = sshll.u32 [#allocation3], 4
      %s20 = int_to_ptr.vmem [resolvable:$true] %s19
      %22 = dma.hbm_to_vmem [thread:$0]  %s18, 64, %s20, [#allocation4]
    $region5: #{tpu_custom_call.1} parent=1 // pred_fallthru
      _
    // Predicated region
    $region6: #{tpu_custom_call.1} parent=1 // pred_check
      _
    $region7: #{tpu_custom_call.1} parent=1 // pred_check_branch
      %24 = sbr.rel (0) target = $region9
    $region8: #{tpu_custom_call.1} parent=1 // pred_region
      %26 = vsyncadd [#allocation7], 0
      %s28 = sshll.u32 %s1, 4
      %s29 = int_to_ptr.hbm [resolvable:$true] %s28
      %s30 = sshll.u32 [#allocation6], 4
      %s31 = int_to_ptr.vmem [resolvable:$true] %s30
      %33 = dma.hbm_to_vmem [thread:$0]  %s29, 64, %s31, [#allocation7]
    $region9: #{tpu_custom_call.1} parent=1 // pred_fallthru
      _
    // Predicated region
    $region10: #{tpu_custom_call.1} parent=1 // pred_check
      _
    $region11: #{tpu_custom_call.1} parent=1 // pred_check_branch
      %35 = sbr.rel (0) target = $region13
    $region12: #{tpu_custom_call.1} parent=1 // pred_region
      %37 = dma.done [#allocation4], 64
    $region13: #{tpu_custom_call.1} parent=1 // pred_fallthru
      _
    // Predicated region
    $region14: #{tpu_custom_call.1} parent=1 // pred_check
      _
    $region15: #{tpu_custom_call.1} parent=1 // pred_check_branch
      %39 = sbr.rel (0) target = $region17
    $region16: #{tpu_custom_call.1} parent=1 // pred_region
      %41 = dma.done [#allocation7], 64
    $region17: #{tpu_custom_call.1} parent=1 // pred_fallthru
      _
    %p42 = scmp.eq.s32.totalorder 0, 0
    // Predicated region
    $region18: #{tpu_custom_call.1} parent=1 // pred_check
      %p43 = pneg %p42
    $region19: #{tpu_custom_call.1} parent=1 // pred_check_branch
      %45 = sbr.rel (%p43) target = $region21
    $region20: #{tpu_custom_call.1} parent=1 // pred_region
      %vm46 = vcmask 1024
      %47 = vst.msk [vmem:[#allocation2] sm:$0x3] %vm46, 0
    $region21: #{tpu_custom_call.1} parent=1 // pred_fallthru
      _
    %v48 = vld [vmem:[#allocation3] sm:$0xf]
    %v49 = vld [vmem:[#allocation6] sm:$0xf]
    %v50 = vlaneseq
    %v51 = vand.u32 %v50, 127
    %v52 = vadd.s32 %v51, 128
    %53 = vst [vmem:[#allocation1] ss:$4 sm:$0xff] %v49
    %v54 = vld.sshfl [vmem:[#allocation1] sm:$0xff pattern:$0x73625140]
    %v55 = vld.sshfl [vmem:[#allocation1 + $0x8] sm:$0xff pattern:$0x73625140]
    %v56 = vperm.slane %v54, 0
    %v57 = vlaneseq
    %v58 = vshrl.u32 %v57, 7
    %60 = vset.pattern.permute.xlu0 %v58
    %61 = vperm.xlu0 %60, %v56
    %v62 = vpop.permute.xlu0 %61
    %v63 = vlaneseq
    %v64 = vshrl.u32 %v63, 7
    %v65 = vadd.s32 %v64, 8
    %66 = vset.pattern.permute.xlu0 %v65
    %67 = vperm.xlu0 %66, %v56
    %v68 = vpop.permute.xlu0 %67
    %v69 = vlaneseq
    %v70 = vshrl.u32 %v69, 7
    %v71 = vadd.s32 %v70, 16
    %72 = vset.pattern.permute.xlu0 %v71
    %73 = vperm.xlu0 %72, %v56
    %v74 = vpop.permute.xlu0 %73
    %v75 = vlaneseq
    %v76 = vshrl.u32 %v75, 7
    %v77 = vadd.s32 %v76, 24
    %78 = vset.pattern.permute.xlu0 %v77
    %79 = vperm.xlu0 %78, %v56
    %v80 = vpop.permute.xlu0 %79
    %v81 = vlaneseq
    %v82 = vshrl.u32 %v81, 7
    %v83 = vadd.s32 %v82, 32
    %84 = vset.pattern.permute.xlu0 %v83
    %85 = vperm.xlu0 %84, %v56
    %v86 = vpop.permute.xlu0 %85
    %v87 = vlaneseq
    %v88 = vshrl.u32 %v87, 7
    %v89 = vadd.s32 %v88, 40
    %90 = vset.pattern.permute.xlu0 %v89
    %91 = vperm.xlu0 %90, %v56
    %v92 = vpop.permute.xlu0 %91
    %v93 = vlaneseq
    %v94 = vshrl.u32 %v93, 7
    %v95 = vadd.s32 %v94, 48
    %96 = vset.pattern.permute.xlu0 %v95
    %97 = vperm.xlu0 %96, %v56
    %v98 = vpop.permute.xlu0 %97
    %v99 = vlaneseq
    %v100 = vshrl.u32 %v99, 7
    %v101 = vadd.s32 %v100, 56
    %102 = vset.pattern.permute.xlu0 %v101
    %103 = vperm.xlu0 %102, %v56
    %v104 = vpop.permute.xlu0 %103
    %v105 = vlaneseq
    %v106 = vshrl.u32 %v105, 7
    %v107 = vadd.s32 %v106, 64
    %108 = vset.pattern.permute.xlu0 %v107
    %109 = vperm.xlu0 %108, %v56
    %v110 = vpop.permute.xlu0 %109
    %v111 = vlaneseq
    %v112 = vshrl.u32 %v111, 7
    %v113 = vadd.s32 %v112, 72
    %114 = vset.pattern.permute.xlu0 %v113
    %115 = vperm.xlu0 %114, %v56
    %v116 = vpop.permute.xlu0 %115
    %v117 = vlaneseq
    %v118 = vshrl.u32 %v117, 7
    %v119 = vadd.s32 %v118, 80
    %120 = vset.pattern.permute.xlu0 %v119
    %121 = vperm.xlu0 %120, %v56
    %v122 = vpop.permute.xlu0 %121
    %v123 = vlaneseq
    %v124 = vshrl.u32 %v123, 7
    %v125 = vadd.s32 %v124, 88
    %126 = vset.pattern.permute.xlu0 %v125
    %127 = vperm.xlu0 %126, %v56
    %v128 = vpop.permute.xlu0 %127
    %v129 = vlaneseq
    %v130 = vshrl.u32 %v129, 7
    %v131 = vadd.s32 %v130, 96
    %132 = vset.pattern.permute.xlu0 %v131
    %133 = vperm.xlu0 %132, %v56
    %v134 = vpop.permute.xlu0 %133
    %v135 = vlaneseq
    %v136 = vshrl.u32 %v135, 7
    %v137 = vadd.s32 %v136, 104
    %138 = vset.pattern.permute.xlu0 %v137
    %139 = vperm.xlu0 %138, %v56
    %v140 = vpop.permute.xlu0 %139
    %v141 = vlaneseq
    %v142 = vshrl.u32 %v141, 7
    %v143 = vadd.s32 %v142, 112
    %144 = vset.pattern.permute.xlu0 %v143
    %145 = vperm.xlu0 %144, %v56
    %v146 = vpop.permute.xlu0 %145
    %v147 = vlaneseq
    %v148 = vshrl.u32 %v147, 7
    %v149 = vadd.s32 %v148, 120
    %150 = vset.pattern.permute.xlu0 %v149
    %151 = vperm.xlu0 %150, %v56
    %v152 = vpop.permute.xlu0 %151
    %v153 = vperm.slane %v55, 0
    %v154 = vlaneseq
    %v155 = vshrl.u32 %v154, 7
    %157 = vset.pattern.permute.xlu0 %v155
    %158 = vperm.xlu0 %157, %v153
    %v159 = vpop.permute.xlu0 %158
    %v160 = vlaneseq
    %v161 = vshrl.u32 %v160, 7
    %v162 = vadd.s32 %v161, 8
    %163 = vset.pattern.permute.xlu0 %v162
    %164 = vperm.xlu0 %163, %v153
    %v165 = vpop.permute.xlu0 %164
    %v166 = vlaneseq
    %v167 = vshrl.u32 %v166, 7
    %v168 = vadd.s32 %v167, 16
    %169 = vset.pattern.permute.xlu0 %v168
    %170 = vperm.xlu0 %169, %v153
    %v171 = vpop.permute.xlu0 %170
    %v172 = vlaneseq
    %v173 = vshrl.u32 %v172, 7
    %v174 = vadd.s32 %v173, 24
    %175 = vset.pattern.permute.xlu0 %v174
    %176 = vperm.xlu0 %175, %v153
    %v177 = vpop.permute.xlu0 %176
    %v178 = vlaneseq
    %v179 = vshrl.u32 %v178, 7
    %v180 = vadd.s32 %v179, 32
    %181 = vset.pattern.permute.xlu0 %v180
    %182 = vperm.xlu0 %181, %v153
    %v183 = vpop.permute.xlu0 %182
    %v184 = vlaneseq
    %v185 = vshrl.u32 %v184, 7
    %v186 = vadd.s32 %v185, 40
    %187 = vset.pattern.permute.xlu0 %v186
    %188 = vperm.xlu0 %187, %v153
    %v189 = vpop.permute.xlu0 %188
    %v190 = vlaneseq
    %v191 = vshrl.u32 %v190, 7
    %v192 = vadd.s32 %v191, 48
    %193 = vset.pattern.permute.xlu0 %v192
    %194 = vperm.xlu0 %193, %v153
    %v195 = vpop.permute.xlu0 %194
    %v196 = vlaneseq
    %v197 = vshrl.u32 %v196, 7
    %v198 = vadd.s32 %v197, 56
    %199 = vset.pattern.permute.xlu0 %v198
    %200 = vperm.xlu0 %199, %v153
    %v201 = vpop.permute.xlu0 %200
    %v202 = vlaneseq
    %v203 = vshrl.u32 %v202, 7
    %v204 = vadd.s32 %v203, 64
    %205 = vset.pattern.permute.xlu0 %v204
    %206 = vperm.xlu0 %205, %v153
    %v207 = vpop.permute.xlu0 %206
    %v208 = vlaneseq
    %v209 = vshrl.u32 %v208, 7
    %v210 = vadd.s32 %v209, 72
    %211 = vset.pattern.permute.xlu0 %v210
    %212 = vperm.xlu0 %211, %v153
    %v213 = vpop.permute.xlu0 %212
    %v214 = vlaneseq
    %v215 = vshrl.u32 %v214, 7
    %v216 = vadd.s32 %v215, 80
    %217 = vset.pattern.permute.xlu0 %v216
    %218 = vperm.xlu0 %217, %v153
    %v219 = vpop.permute.xlu0 %218
    %v220 = vlaneseq
    %v221 = vshrl.u32 %v220, 7
    %v222 = vadd.s32 %v221, 88
    %223 = vset.pattern.permute.xlu0 %v222
    %224 = vperm.xlu0 %223, %v153
    %v225 = vpop.permute.xlu0 %224
    %v226 = vlaneseq
    %v227 = vshrl.u32 %v226, 7
    %v228 = vadd.s32 %v227, 96
    %229 = vset.pattern.permute.xlu0 %v228
    %230 = vperm.xlu0 %229, %v153
    %v231 = vpop.permute.xlu0 %230
    %v232 = vlaneseq
    %v233 = vshrl.u32 %v232, 7
    %v234 = vadd.s32 %v233, 104
    %235 = vset.pattern.permute.xlu0 %v234
    %236 = vperm.xlu0 %235, %v153
    %v237 = vpop.permute.xlu0 %236
    %v238 = vlaneseq
    %v239 = vshrl.u32 %v238, 7
    %v240 = vadd.s32 %v239, 112
    %241 = vset.pattern.permute.xlu0 %v240
    %242 = vperm.xlu0 %241, %v153
    %v243 = vpop.permute.xlu0 %242
    %v244 = vlaneseq
    %v245 = vshrl.u32 %v244, 7
    %v246 = vadd.s32 %v245, 120
    %247 = vset.pattern.permute.xlu0 %v246
    %248 = vperm.xlu0 %247, %v153
    %v249 = vpop.permute.xlu0 %248
    %v250 = vperm.slane %v54, 1
    %v251 = vlaneseq
    %v252 = vshrl.u32 %v251, 7
    %254 = vset.pattern.permute.xlu0 %v252
    %255 = vperm.xlu0 %254, %v250
    %v256 = vpop.permute.xlu0 %255
    %v257 = vlaneseq
    %v258 = vshrl.u32 %v257, 7
    %v259 = vadd.s32 %v258, 8
    %260 = vset.pattern.permute.xlu0 %v259
    %261 = vperm.xlu0 %260, %v250
    %v262 = vpop.permute.xlu0 %261
    %v263 = vlaneseq
    %v264 = vshrl.u32 %v263, 7
    %v265 = vadd.s32 %v264, 16
    %266 = vset.pattern.permute.xlu0 %v265
    %267 = vperm.xlu0 %266, %v250
    %v268 = vpop.permute.xlu0 %267
    %v269 = vlaneseq
    %v270 = vshrl.u32 %v269, 7
    %v271 = vadd.s32 %v270, 24
    %272 = vset.pattern.permute.xlu0 %v271
    %273 = vperm.xlu0 %272, %v250
    %v274 = vpop.permute.xlu0 %273
    %v275 = vlaneseq
    %v276 = vshrl.u32 %v275, 7
    %v277 = vadd.s32 %v276, 32
    %278 = vset.pattern.permute.xlu0 %v277
    %279 = vperm.xlu0 %278, %v250
    %v280 = vpop.permute.xlu0 %279
    %v281 = vlaneseq
    %v282 = vshrl.u32 %v281, 7
    %v283 = vadd.s32 %v282, 40
    %284 = vset.pattern.permute.xlu0 %v283
    %285 = vperm.xlu0 %284, %v250
    %v286 = vpop.permute.xlu0 %285
    %v287 = vlaneseq
    %v288 = vshrl.u32 %v287, 7
    %v289 = vadd.s32 %v288, 48
    %290 = vset.pattern.permute.xlu0 %v289
    %291 = vperm.xlu0 %290, %v250
    %v292 = vpop.permute.xlu0 %291
    %v293 = vlaneseq
    %v294 = vshrl.u32 %v293, 7
    %v295 = vadd.s32 %v294, 56
    %296 = vset.pattern.permute.xlu0 %v295
    %297 = vperm.xlu0 %296, %v250
    %v298 = vpop.permute.xlu0 %297
    %v299 = vlaneseq
    %v300 = vshrl.u32 %v299, 7
    %v301 = vadd.s32 %v300, 64
    %302 = vset.pattern.permute.xlu0 %v301
    %303 = vperm.xlu0 %302, %v250
    %v304 = vpop.permute.xlu0 %303
    %v305 = vlaneseq
    %v306 = vshrl.u32 %v305, 7
    %v307 = vadd.s32 %v306, 72
    %308 = vset.pattern.permute.xlu0 %v307
    %309 = vperm.xlu0 %308, %v250
    %v310 = vpop.permute.xlu0 %309
    %v311 = vlaneseq
    %v312 = vshrl.u32 %v311, 7
    %v313 = vadd.s32 %v312, 80
    %314 = vset.pattern.permute.xlu0 %v313
    %315 = vperm.xlu0 %314, %v250
    %v316 = vpop.permute.xlu0 %315
    %v317 = vlaneseq
    %v318 = vshrl.u32 %v317, 7
    %v319 = vadd.s32 %v318, 88
    %320 = vset.pattern.permute.xlu0 %v319
    %321 = vperm.xlu0 %320, %v250
    %v322 = vpop.permute.xlu0 %321
    %v323 = vlaneseq
    %v324 = vshrl.u32 %v323, 7
    %v325 = vadd.s32 %v324, 96
    %326 = vset.pattern.permute.xlu0 %v325
    %327 = vperm.xlu0 %326, %v250
    %v328 = vpop.permute.xlu0 %327
    %v329 = vlaneseq
    %v330 = vshrl.u32 %v329, 7
    %v331 = vadd.s32 %v330, 104
    %332 = vset.pattern.permute.xlu0 %v331
    %333 = vperm.xlu0 %332, %v250
    %v334 = vpop.permute.xlu0 %333
    %v335 = vlaneseq
    %v336 = vshrl.u32 %v335, 7
    %v337 = vadd.s32 %v336, 112
    %338 = vset.pattern.permute.xlu0 %v337
    %339 = vperm.xlu0 %338, %v250
    %v340 = vpop.permute.xlu0 %339
    %v341 = vlaneseq
    %v342 = vshrl.u32 %v341, 7
    %v343 = vadd.s32 %v342, 120
    %344 = vset.pattern.permute.xlu0 %v343
    %345 = vperm.xlu0 %344, %v250
    %v346 = vpop.permute.xlu0 %345
    %v347 = vperm.slane %v55, 1
    %v348 = vlaneseq
    %v349 = vshrl.u32 %v348, 7
    %351 = vset.pattern.permute.xlu0 %v349
    %352 = vperm.xlu0 %351, %v347
    %v353 = vpop.permute.xlu0 %352
    %v354 = vlaneseq
    %v355 = vshrl.u32 %v354, 7
    %v356 = vadd.s32 %v355, 8
    %357 = vset.pattern.permute.xlu0 %v356
    %358 = vperm.xlu0 %357, %v347
    %v359 = vpop.permute.xlu0 %358
    %v360 = vlaneseq
    %v361 = vshrl.u32 %v360, 7
    %v362 = vadd.s32 %v361, 16
    %363 = vset.pattern.permute.xlu0 %v362
    %364 = vperm.xlu0 %363, %v347
    %v365 = vpop.permute.xlu0 %364
    %v366 = vlaneseq
    %v367 = vshrl.u32 %v366, 7
    %v368 = vadd.s32 %v367, 24
    %369 = vset.pattern.permute.xlu0 %v368
    %370 = vperm.xlu0 %369, %v347
    %v371 = vpop.permute.xlu0 %370
    %v372 = vlaneseq
    %v373 = vshrl.u32 %v372, 7
    %v374 = vadd.s32 %v373, 32
    %375 = vset.pattern.permute.xlu0 %v374
    %376 = vperm.xlu0 %375, %v347
    %v377 = vpop.permute.xlu0 %376
    %v378 = vlaneseq
    %v379 = vshrl.u32 %v378, 7
    %v380 = vadd.s32 %v379, 40
    %381 = vset.pattern.permute.xlu0 %v380
    %382 = vperm.xlu0 %381, %v347
    %v383 = vpop.permute.xlu0 %382
    %v384 = vlaneseq
    %v385 = vshrl.u32 %v384, 7
    %v386 = vadd.s32 %v385, 48
    %387 = vset.pattern.permute.xlu0 %v386
    %388 = vperm.xlu0 %387, %v347
    %v389 = vpop.permute.xlu0 %388
    %v390 = vlaneseq
    %v391 = vshrl.u32 %v390, 7
    %v392 = vadd.s32 %v391, 56
    %393 = vset.pattern.permute.xlu0 %v392
    %394 = vperm.xlu0 %393, %v347
    %v395 = vpop.permute.xlu0 %394
    %v396 = vlaneseq
    %v397 = vshrl.u32 %v396, 7
    %v398 = vadd.s32 %v397, 64
    %399 = vset.pattern.permute.xlu0 %v398
    %400 = vperm.xlu0 %399, %v347
    %v401 = vpop.permute.xlu0 %400
    %v402 = vlaneseq
    %v403 = vshrl.u32 %v402, 7
    %v404 = vadd.s32 %v403, 72
    %405 = vset.pattern.permute.xlu0 %v404
    %406 = vperm.xlu0 %405, %v347
    %v407 = vpop.permute.xlu0 %406
    %v408 = vlaneseq
    %v409 = vshrl.u32 %v408, 7
    %v410 = vadd.s32 %v409, 80
    %411 = vset.pattern.permute.xlu0 %v410
    %412 = vperm.xlu0 %411, %v347
    %v413 = vpop.permute.xlu0 %412
    %v414 = vlaneseq
    %v415 = vshrl.u32 %v414, 7
    %v416 = vadd.s32 %v415, 88
    %417 = vset.pattern.permute.xlu0 %v416
    %418 = vperm.xlu0 %417, %v347
    %v419 = vpop.permute.xlu0 %418
    %v420 = vlaneseq
    %v421 = vshrl.u32 %v420, 7
    %v422 = vadd.s32 %v421, 96
    %423 = vset.pattern.permute.xlu0 %v422
    %424 = vperm.xlu0 %423, %v347
    %v425 = vpop.permute.xlu0 %424
    %v426 = vlaneseq
    %v427 = vshrl.u32 %v426, 7
    %v428 = vadd.s32 %v427, 104
    %429 = vset.pattern.permute.xlu0 %v428
    %430 = vperm.xlu0 %429, %v347
    %v431 = vpop.permute.xlu0 %430
    %v432 = vlaneseq
    %v433 = vshrl.u32 %v432, 7
    %v434 = vadd.s32 %v433, 112
    %435 = vset.pattern.permute.xlu0 %v434
    %436 = vperm.xlu0 %435, %v347
    %v437 = vpop.permute.xlu0 %436
    %v438 = vlaneseq
    %v439 = vshrl.u32 %v438, 7
    %v440 = vadd.s32 %v439, 120
    %441 = vset.pattern.permute.xlu0 %v440
    %442 = vperm.xlu0 %441, %v347
    %v443 = vpop.permute.xlu0 %442
    %v444 = vrot.slane %v48, 1
    %v445 = vrot.slane %v48, 2
    %v446 = vrot.slane %v48, 3
    %vm447 = vcmask 1040384
    %v448 = vsel %vm447, %v48, %v444
    %vm449 = vcmask 1042434
    %v450 = vsel %vm449, %v445, %v446
    %vm451 = vcmask 1041408
    %v452 = vsel %vm451, %v448, %v450
    %vm453 = vcmask 1041409
    %v454 = vsel %vm453, %v48, %v444
    %vm455 = vcmask 1043459
    %v456 = vsel %vm455, %v445, %v446
    %vm457 = vcmask 1042433
    %v458 = vsel %vm457, %v454, %v456
    %v459 = vrot.slane %v458, 1
    %v460 = vperm.slane %v452, 0
    %v461 = vperm.slane %v452, 1
    %v462 = vperm.slane %v459, 0
    %v463 = vperm.slane %v459, 1
    %vm464 = vcmp.eq.s32.totalorder %v62, %v460
    %vm465 = vcmp.eq.s32.totalorder %v62, %v461
    %vm466 = vcmp.eq.s32.totalorder %v68, %v460
    %vm467 = vcmp.eq.s32.totalorder %v68, %v461
    %vm468 = vcmp.eq.s32.totalorder %v74, %v460
    %vm469 = vcmp.eq.s32.totalorder %v74, %v461
    %vm470 = vcmp.eq.s32.totalorder %v80, %v460
    %vm471 = vcmp.eq.s32.totalorder %v80, %v461
    %vm472 = vcmp.eq.s32.totalorder %v86, %v460
    %vm473 = vcmp.eq.s32.totalorder %v86, %v461
    %vm474 = vcmp.eq.s32.totalorder %v92, %v460
    %vm475 = vcmp.eq.s32.totalorder %v92, %v461
    %vm476 = vcmp.eq.s32.totalorder %v98, %v460
    %vm477 = vcmp.eq.s32.totalorder %v98, %v461
    %vm478 = vcmp.eq.s32.totalorder %v104, %v460
    %vm479 = vcmp.eq.s32.totalorder %v104, %v461
    %vm480 = vcmp.eq.s32.totalorder %v110, %v460
    %vm481 = vcmp.eq.s32.totalorder %v110, %v461
    %vm482 = vcmp.eq.s32.totalorder %v116, %v460
    %vm483 = vcmp.eq.s32.totalorder %v116, %v461
    %vm484 = vcmp.eq.s32.totalorder %v122, %v460
    %vm485 = vcmp.eq.s32.totalorder %v122, %v461
    %vm486 = vcmp.eq.s32.totalorder %v128, %v460
    %vm487 = vcmp.eq.s32.totalorder %v128, %v461
    %vm488 = vcmp.eq.s32.totalorder %v134, %v460
    %vm489 = vcmp.eq.s32.totalorder %v134, %v461
    %vm490 = vcmp.eq.s32.totalorder %v140, %v460
    %vm491 = vcmp.eq.s32.totalorder %v140, %v461
    %vm492 = vcmp.eq.s32.totalorder %v146, %v460
    %vm493 = vcmp.eq.s32.totalorder %v146, %v461
    %vm494 = vcmp.eq.s32.totalorder %v152, %v460
    %vm495 = vcmp.eq.s32.totalorder %v152, %v461
    %vm496 = vcmp.eq.s32.totalorder %v159, %v460
    %vm497 = vcmp.eq.s32.totalorder %v159, %v461
    %vm498 = vcmp.eq.s32.totalorder %v165, %v460
    %vm499 = vcmp.eq.s32.totalorder %v165, %v461
    %vm500 = vcmp.eq.s32.totalorder %v171, %v460
    %vm501 = vcmp.eq.s32.totalorder %v171, %v461
    %vm502 = vcmp.eq.s32.totalorder %v177, %v460
    %vm503 = vcmp.eq.s32.totalorder %v177, %v461
    %vm504 = vcmp.eq.s32.totalorder %v183, %v460
    %vm505 = vcmp.eq.s32.totalorder %v183, %v461
    %vm506 = vcmp.eq.s32.totalorder %v189, %v460
    %vm507 = vcmp.eq.s32.totalorder %v189, %v461
    %vm508 = vcmp.eq.s32.totalorder %v195, %v460
    %vm509 = vcmp.eq.s32.totalorder %v195, %v461
    %vm510 = vcmp.eq.s32.totalorder %v201, %v460
    %vm511 = vcmp.eq.s32.totalorder %v201, %v461
    %vm512 = vcmp.eq.s32.totalorder %v207, %v460
    %vm513 = vcmp.eq.s32.totalorder %v207, %v461
    %vm514 = vcmp.eq.s32.totalorder %v213, %v460
    %vm515 = vcmp.eq.s32.totalorder %v213, %v461
    %vm516 = vcmp.eq.s32.totalorder %v219, %v460
    %vm517 = vcmp.eq.s32.totalorder %v219, %v461
    %vm518 = vcmp.eq.s32.totalorder %v225, %v460
    %vm519 = vcmp.eq.s32.totalorder %v225, %v461
    %vm520 = vcmp.eq.s32.totalorder %v231, %v460
    %vm521 = vcmp.eq.s32.totalorder %v231, %v461
    %vm522 = vcmp.eq.s32.totalorder %v237, %v460
    %vm523 = vcmp.eq.s32.totalorder %v237, %v461
    %vm524 = vcmp.eq.s32.totalorder %v243, %v460
    %vm525 = vcmp.eq.s32.totalorder %v243, %v461
    %vm526 = vcmp.eq.s32.totalorder %v249, %v460
    %vm527 = vcmp.eq.s32.totalorder %v249, %v461
    %vm528 = vcmp.eq.s32.totalorder %v256, %v462
    %vm529 = vcmp.eq.s32.totalorder %v256, %v463
    %vm530 = vcmp.eq.s32.totalorder %v262, %v462
    %vm531 = vcmp.eq.s32.totalorder %v262, %v463
    %vm532 = vcmp.eq.s32.totalorder %v268, %v462
    %vm533 = vcmp.eq.s32.totalorder %v268, %v463
    %vm534 = vcmp.eq.s32.totalorder %v274, %v462
    %vm535 = vcmp.eq.s32.totalorder %v274, %v463
    %vm536 = vcmp.eq.s32.totalorder %v280, %v462
    %vm537 = vcmp.eq.s32.totalorder %v280, %v463
    %vm538 = vcmp.eq.s32.totalorder %v286, %v462
    %vm539 = vcmp.eq.s32.totalorder %v286, %v463
    %vm540 = vcmp.eq.s32.totalorder %v292, %v462
    %vm541 = vcmp.eq.s32.totalorder %v292, %v463
    %vm542 = vcmp.eq.s32.totalorder %v298, %v462
    %vm543 = vcmp.eq.s32.totalorder %v298, %v463
    %vm544 = vcmp.eq.s32.totalorder %v304, %v462
    %vm545 = vcmp.eq.s32.totalorder %v304, %v463
    %vm546 = vcmp.eq.s32.totalorder %v310, %v462
    %vm547 = vcmp.eq.s32.totalorder %v310, %v463
    %vm548 = vcmp.eq.s32.totalorder %v316, %v462
    %vm549 = vcmp.eq.s32.totalorder %v316, %v463
    %vm550 = vcmp.eq.s32.totalorder %v322, %v462
    %vm551 = vcmp.eq.s32.totalorder %v322, %v463
    %vm552 = vcmp.eq.s32.totalorder %v328, %v462
    %vm553 = vcmp.eq.s32.totalorder %v328, %v463
    %vm554 = vcmp.eq.s32.totalorder %v334, %v462
    %vm555 = vcmp.eq.s32.totalorder %v334, %v463
    %vm556 = vcmp.eq.s32.totalorder %v340, %v462
    %vm557 = vcmp.eq.s32.totalorder %v340, %v463
    %vm558 = vcmp.eq.s32.totalorder %v346, %v462
    %vm559 = vcmp.eq.s32.totalorder %v346, %v463
    %vm560 = vcmp.eq.s32.totalorder %v353, %v462
    %vm561 = vcmp.eq.s32.totalorder %v353, %v463
    %vm562 = vcmp.eq.s32.totalorder %v359, %v462
    %vm563 = vcmp.eq.s32.totalorder %v359, %v463
    %vm564 = vcmp.eq.s32.totalorder %v365, %v462
    %vm565 = vcmp.eq.s32.totalorder %v365, %v463
    %vm566 = vcmp.eq.s32.totalorder %v371, %v462
    %vm567 = vcmp.eq.s32.totalorder %v371, %v463
    %vm568 = vcmp.eq.s32.totalorder %v377, %v462
    %vm569 = vcmp.eq.s32.totalorder %v377, %v463
    %vm570 = vcmp.eq.s32.totalorder %v383, %v462
    %vm571 = vcmp.eq.s32.totalorder %v383, %v463
    %vm572 = vcmp.eq.s32.totalorder %v389, %v462
    %vm573 = vcmp.eq.s32.totalorder %v389, %v463
    %vm574 = vcmp.eq.s32.totalorder %v395, %v462
    %vm575 = vcmp.eq.s32.totalorder %v395, %v463
    %vm576 = vcmp.eq.s32.totalorder %v401, %v462
    %vm577 = vcmp.eq.s32.totalorder %v401, %v463
    %vm578 = vcmp.eq.s32.totalorder %v407, %v462
    %vm579 = vcmp.eq.s32.totalorder %v407, %v463
    %vm580 = vcmp.eq.s32.totalorder %v413, %v462
    %vm581 = vcmp.eq.s32.totalorder %v413, %v463
    %vm582 = vcmp.eq.s32.totalorder %v419, %v462
    %vm583 = vcmp.eq.s32.totalorder %v419, %v463
    %vm584 = vcmp.eq.s32.totalorder %v425, %v462
    %vm585 = vcmp.eq.s32.totalorder %v425, %v463
    %vm586 = vcmp.eq.s32.totalorder %v431, %v462
    %vm587 = vcmp.eq.s32.totalorder %v431, %v463
    %vm588 = vcmp.eq.s32.totalorder %v437, %v462
    %vm589 = vcmp.eq.s32.totalorder %v437, %v463
    %vm590 = vcmp.eq.s32.totalorder %v443, %v462
    %vm591 = vcmp.eq.s32.totalorder %v443, %v463
    %v592 = vsel %vm464, %v51, 256
    %v593 = vsel %vm465, %v52, 256
    %v594 = vsel %vm466, %v51, 256
    %v595 = vsel %vm467, %v52, 256
    %v596 = vsel %vm468, %v51, 256
    %v597 = vsel %vm469, %v52, 256
    %v598 = vsel %vm470, %v51, 256
    %v599 = vsel %vm471, %v52, 256
    %v600 = vsel %vm472, %v51, 256
    %v601 = vsel %vm473, %v52, 256
    %v602 = vsel %vm474, %v51, 256
    %v603 = vsel %vm475, %v52, 256
    %v604 = vsel %vm476, %v51, 256
    %v605 = vsel %vm477, %v52, 256
    %v606 = vsel %vm478, %v51, 256
    %v607 = vsel %vm479, %v52, 256
    %v608 = vsel %vm480, %v51, 256
    %v609 = vsel %vm481, %v52, 256
    %v610 = vsel %vm482, %v51, 256
    %v611 = vsel %vm483, %v52, 256
    %v612 = vsel %vm484, %v51, 256
    %v613 = vsel %vm485, %v52, 256
    %v614 = vsel %vm486, %v51, 256
    %v615 = vsel %vm487, %v52, 256
    %v616 = vsel %vm488, %v51, 256
    %v617 = vsel %vm489, %v52, 256
    %v618 = vsel %vm490, %v51, 256
    %v619 = vsel %vm491, %v52, 256
    %v620 = vsel %vm492, %v51, 256
    %v621 = vsel %vm493, %v52, 256
    %v622 = vsel %vm494, %v51, 256
    %v623 = vsel %vm495, %v52, 256
    %v624 = vsel %vm496, %v51, 256
    %v625 = vsel %vm497, %v52, 256
    %v626 = vsel %vm498, %v51, 256
    %v627 = vsel %vm499, %v52, 256
    %v628 = vsel %vm500, %v51, 256
    %v629 = vsel %vm501, %v52, 256
    %v630 = vsel %vm502, %v51, 256
    %v631 = vsel %vm503, %v52, 256
    %v632 = vsel %vm504, %v51, 256
    %v633 = vsel %vm505, %v52, 256
    %v634 = vsel %vm506, %v51, 256
    %v635 = vsel %vm507, %v52, 256
    %v636 = vsel %vm508, %v51, 256
    %v637 = vsel %vm509, %v52, 256
    %v638 = vsel %vm510, %v51, 256
    %v639 = vsel %vm511, %v52, 256
    %v640 = vsel %vm512, %v51, 256
    %v641 = vsel %vm513, %v52, 256
    %v642 = vsel %vm514, %v51, 256
    %v643 = vsel %vm515, %v52, 256
    %v644 = vsel %vm516, %v51, 256
    %v645 = vsel %vm517, %v52, 256
    %v646 = vsel %vm518, %v51, 256
    %v647 = vsel %vm519, %v52, 256
    %v648 = vsel %vm520, %v51, 256
    %v649 = vsel %vm521, %v52, 256
    %v650 = vsel %vm522, %v51, 256
    %v651 = vsel %vm523, %v52, 256
    %v652 = vsel %vm524, %v51, 256
    %v653 = vsel %vm525, %v52, 256
    %v654 = vsel %vm526, %v51, 256
    %v655 = vsel %vm527, %v52, 256
    %v656 = vsel %vm528, %v51, 256
    %v657 = vsel %vm529, %v52, 256
    %v658 = vsel %vm530, %v51, 256
    %v659 = vsel %vm531, %v52, 256
    %v660 = vsel %vm532, %v51, 256
    %v661 = vsel %vm533, %v52, 256
    %v662 = vsel %vm534, %v51, 256
    %v663 = vsel %vm535, %v52, 256
    %v664 = vsel %vm536, %v51, 256
    %v665 = vsel %vm537, %v52, 256
    %v666 = vsel %vm538, %v51, 256
    %v667 = vsel %vm539, %v52, 256
    %v668 = vsel %vm540, %v51, 256
    %v669 = vsel %vm541, %v52, 256
    %v670 = vsel %vm542, %v51, 256
    %v671 = vsel %vm543, %v52, 256
    %v672 = vsel %vm544, %v51, 256
    %v673 = vsel %vm545, %v52, 256
    %v674 = vsel %vm546, %v51, 256
    %v675 = vsel %vm547, %v52, 256
    %v676 = vsel %vm548, %v51, 256
    %v677 = vsel %vm549, %v52, 256
    %v678 = vsel %vm550, %v51, 256
    %v679 = vsel %vm551, %v52, 256
    %v680 = vsel %vm552, %v51, 256
    %v681 = vsel %vm553, %v52, 256
    %v682 = vsel %vm554, %v51, 256
    %v683 = vsel %vm555, %v52, 256
    %v684 = vsel %vm556, %v51, 256
    %v685 = vsel %vm557, %v52, 256
    %v686 = vsel %vm558, %v51, 256
    %v687 = vsel %vm559, %v52, 256
    %v688 = vsel %vm560, %v51, 256
    %v689 = vsel %vm561, %v52, 256
    %v690 = vsel %vm562, %v51, 256
    %v691 = vsel %vm563, %v52, 256
    %v692 = vsel %vm564, %v51, 256
    %v693 = vsel %vm565, %v52, 256
    %v694 = vsel %vm566, %v51, 256
    %v695 = vsel %vm567, %v52, 256
    %v696 = vsel %vm568, %v51, 256
    %v697 = vsel %vm569, %v52, 256
    %v698 = vsel %vm570, %v51, 256
    %v699 = vsel %vm571, %v52, 256
    %v700 = vsel %vm572, %v51, 256
    %v701 = vsel %vm573, %v52, 256
    %v702 = vsel %vm574, %v51, 256
    %v703 = vsel %vm575, %v52, 256
    %v704 = vsel %vm576, %v51, 256
    %v705 = vsel %vm577, %v52, 256
    %v706 = vsel %vm578, %v51, 256
    %v707 = vsel %vm579, %v52, 256
    %v708 = vsel %vm580, %v51, 256
    %v709 = vsel %vm581, %v52, 256
    %v710 = vsel %vm582, %v51, 256
    %v711 = vsel %vm583, %v52, 256
    %v712 = vsel %vm584, %v51, 256
    %v713 = vsel %vm585, %v52, 256
    %v714 = vsel %vm586, %v51, 256
    %v715 = vsel %vm587, %v52, 256
    %v716 = vsel %vm588, %v51, 256
    %v717 = vsel %vm589, %v52, 256
    %v718 = vsel %vm590, %v51, 256
    %v719 = vsel %vm591, %v52, 256
    %vm720 = vcmp.lt.s32.totalorder %v592, %v593
    %v721 = vsel %vm720, %v592, %v593
    %v722 = vand.u32 %v721, 65535
    %v723 = vshra.s32 %v721, 16
    %v724 = vcvt.s32.f32 %v722
    %v725 = vcvt.s32.f32 %v723
    %726 = vmin.xlane.f32.xlu0 %v725
    %v727 = vpop.xlane.xlu0 %726
    %vm728 = vcmp.eq.f32.partialorder %v725, %v727
    %v729 = vsel %vm728, %v724, inf
    %730 = vmin.xlane.f32.xlu0 %v729
    %v731 = vpop.xlane.xlu0 %730
    %v732 = vcvt.f32.s32 %v731
    %v733 = vcvt.f32.s32 %v727
    %v734 = vshll.u32 %v733, 16
    %v735 = vadd.s32 %v734, %v732
    %vm736 = vcmp.lt.s32.totalorder %v594, %v595
    %v737 = vsel %vm736, %v594, %v595
    %v738 = vand.u32 %v737, 65535
    %v739 = vshra.s32 %v737, 16
    %v740 = vcvt.s32.f32 %v738
    %v741 = vcvt.s32.f32 %v739
    %742 = vmin.xlane.f32.xlu0 %v741
    %v743 = vpop.xlane.xlu0 %742
    %vm744 = vcmp.eq.f32.partialorder %v741, %v743
    %v745 = vsel %vm744, %v740, inf
    %746 = vmin.xlane.f32.xlu0 %v745
    %v747 = vpop.xlane.xlu0 %746
    %v748 = vcvt.f32.s32 %v747
    %v749 = vcvt.f32.s32 %v743
    %v750 = vshll.u32 %v749, 16
    %v751 = vadd.s32 %v750, %v748
    %vm752 = vcmp.lt.s32.totalorder %v596, %v597
    %v753 = vsel %vm752, %v596, %v597
    %v754 = vand.u32 %v753, 65535
    %v755 = vshra.s32 %v753, 16
    %v756 = vcvt.s32.f32 %v754
    %v757 = vcvt.s32.f32 %v755
    %758 = vmin.xlane.f32.xlu0 %v757
    %v759 = vpop.xlane.xlu0 %758
    %vm760 = vcmp.eq.f32.partialorder %v757, %v759
    %v761 = vsel %vm760, %v756, inf
    %762 = vmin.xlane.f32.xlu0 %v761
    %v763 = vpop.xlane.xlu0 %762
    %v764 = vcvt.f32.s32 %v763
    %v765 = vcvt.f32.s32 %v759
    %v766 = vshll.u32 %v765, 16
    %v767 = vadd.s32 %v766, %v764
    %vm768 = vcmp.lt.s32.totalorder %v598, %v599
    %v769 = vsel %vm768, %v598, %v599
    %v770 = vand.u32 %v769, 65535
    %v771 = vshra.s32 %v769, 16
    %v772 = vcvt.s32.f32 %v770
    %v773 = vcvt.s32.f32 %v771
    %774 = vmin.xlane.f32.xlu0 %v773
    %v775 = vpop.xlane.xlu0 %774
    %vm776 = vcmp.eq.f32.partialorder %v773, %v775
    %v777 = vsel %vm776, %v772, inf
    %778 = vmin.xlane.f32.xlu0 %v777
    %v779 = vpop.xlane.xlu0 %778
    %v780 = vcvt.f32.s32 %v779
    %v781 = vcvt.f32.s32 %v775
    %v782 = vshll.u32 %v781, 16
    %v783 = vadd.s32 %v782, %v780
    %vm784 = vcmp.lt.s32.totalorder %v600, %v601
    %v785 = vsel %vm784, %v600, %v601
    %v786 = vand.u32 %v785, 65535
    %v787 = vshra.s32 %v785, 16
    %v788 = vcvt.s32.f32 %v786
    %v789 = vcvt.s32.f32 %v787
    %790 = vmin.xlane.f32.xlu0 %v789
    %v791 = vpop.xlane.xlu0 %790
    %vm792 = vcmp.eq.f32.partialorder %v789, %v791
    %v793 = vsel %vm792, %v788, inf
    %794 = vmin.xlane.f32.xlu0 %v793
    %v795 = vpop.xlane.xlu0 %794
    %v796 = vcvt.f32.s32 %v795
    %v797 = vcvt.f32.s32 %v791
    %v798 = vshll.u32 %v797, 16
    %v799 = vadd.s32 %v798, %v796
    %vm800 = vcmp.lt.s32.totalorder %v602, %v603
    %v801 = vsel %vm800, %v602, %v603
    %v802 = vand.u32 %v801, 65535
    %v803 = vshra.s32 %v801, 16
    %v804 = vcvt.s32.f32 %v802
    %v805 = vcvt.s32.f32 %v803
    %806 = vmin.xlane.f32.xlu0 %v805
    %v807 = vpop.xlane.xlu0 %806
    %vm808 = vcmp.eq.f32.partialorder %v805, %v807
    %v809 = vsel %vm808, %v804, inf
    %810 = vmin.xlane.f32.xlu0 %v809
    %v811 = vpop.xlane.xlu0 %810
    %v812 = vcvt.f32.s32 %v811
    %v813 = vcvt.f32.s32 %v807
    %v814 = vshll.u32 %v813, 16
    %v815 = vadd.s32 %v814, %v812
    %vm816 = vcmp.lt.s32.totalorder %v604, %v605
    %v817 = vsel %vm816, %v604, %v605
    %v818 = vand.u32 %v817, 65535
    %v819 = vshra.s32 %v817, 16
    %v820 = vcvt.s32.f32 %v818
    %v821 = vcvt.s32.f32 %v819
    %822 = vmin.xlane.f32.xlu0 %v821
    %v823 = vpop.xlane.xlu0 %822
    %vm824 = vcmp.eq.f32.partialorder %v821, %v823
    %v825 = vsel %vm824, %v820, inf
    %826 = vmin.xlane.f32.xlu0 %v825
    %v827 = vpop.xlane.xlu0 %826
    %v828 = vcvt.f32.s32 %v827
    %v829 = vcvt.f32.s32 %v823
    %v830 = vshll.u32 %v829, 16
    %v831 = vadd.s32 %v830, %v828
    %vm832 = vcmp.lt.s32.totalorder %v606, %v607
    %v833 = vsel %vm832, %v606, %v607
    %v834 = vand.u32 %v833, 65535
    %v835 = vshra.s32 %v833, 16
    %v836 = vcvt.s32.f32 %v834
    %v837 = vcvt.s32.f32 %v835
    %838 = vmin.xlane.f32.xlu0 %v837
    %v839 = vpop.xlane.xlu0 %838
    %vm840 = vcmp.eq.f32.partialorder %v837, %v839
    %v841 = vsel %vm840, %v836, inf
    %842 = vmin.xlane.f32.xlu0 %v841
    %v843 = vpop.xlane.xlu0 %842
    %v844 = vcvt.f32.s32 %v843
    %v845 = vcvt.f32.s32 %v839
    %v846 = vshll.u32 %v845, 16
    %v847 = vadd.s32 %v846, %v844
    %vm848 = vcmp.lt.s32.totalorder %v608, %v609
    %v849 = vsel %vm848, %v608, %v609
    %v850 = vand.u32 %v849, 65535
    %v851 = vshra.s32 %v849, 16
    %v852 = vcvt.s32.f32 %v850
    %v853 = vcvt.s32.f32 %v851
    %854 = vmin.xlane.f32.xlu0 %v853
    %v855 = vpop.xlane.xlu0 %854
    %vm856 = vcmp.eq.f32.partialorder %v853, %v855
    %v857 = vsel %vm856, %v852, inf
    %858 = vmin.xlane.f32.xlu0 %v857
    %v859 = vpop.xlane.xlu0 %858
    %v860 = vcvt.f32.s32 %v859
    %v861 = vcvt.f32.s32 %v855
    %v862 = vshll.u32 %v861, 16
    %v863 = vadd.s32 %v862, %v860
    %vm864 = vcmp.lt.s32.totalorder %v610, %v611
    %v865 = vsel %vm864, %v610, %v611
    %v866 = vand.u32 %v865, 65535
    %v867 = vshra.s32 %v865, 16
    %v868 = vcvt.s32.f32 %v866
    %v869 = vcvt.s32.f32 %v867
    %870 = vmin.xlane.f32.xlu0 %v869
    %v871 = vpop.xlane.xlu0 %870
    %vm872 = vcmp.eq.f32.partialorder %v869, %v871
    %v873 = vsel %vm872, %v868, inf
    %874 = vmin.xlane.f32.xlu0 %v873
    %v875 = vpop.xlane.xlu0 %874
    %v876 = vcvt.f32.s32 %v875
    %v877 = vcvt.f32.s32 %v871
    %v878 = vshll.u32 %v877, 16
    %v879 = vadd.s32 %v878, %v876
    %vm880 = vcmp.lt.s32.totalorder %v612, %v613
    %v881 = vsel %vm880, %v612, %v613
    %v882 = vand.u32 %v881, 65535
    %v883 = vshra.s32 %v881, 16
    %v884 = vcvt.s32.f32 %v882
    %v885 = vcvt.s32.f32 %v883
    %886 = vmin.xlane.f32.xlu0 %v885
    %v887 = vpop.xlane.xlu0 %886
    %vm888 = vcmp.eq.f32.partialorder %v885, %v887
    %v889 = vsel %vm888, %v884, inf
    %890 = vmin.xlane.f32.xlu0 %v889
    %v891 = vpop.xlane.xlu0 %890
    %v892 = vcvt.f32.s32 %v891
    %v893 = vcvt.f32.s32 %v887
    %v894 = vshll.u32 %v893, 16
    %v895 = vadd.s32 %v894, %v892
    %vm896 = vcmp.lt.s32.totalorder %v614, %v615
    %v897 = vsel %vm896, %v614, %v615
    %v898 = vand.u32 %v897, 65535
    %v899 = vshra.s32 %v897, 16
    %v900 = vcvt.s32.f32 %v898
    %v901 = vcvt.s32.f32 %v899
    %902 = vmin.xlane.f32.xlu0 %v901
    %v903 = vpop.xlane.xlu0 %902
    %vm904 = vcmp.eq.f32.partialorder %v901, %v903
    %v905 = vsel %vm904, %v900, inf
    %906 = vmin.xlane.f32.xlu0 %v905
    %v907 = vpop.xlane.xlu0 %906
    %v908 = vcvt.f32.s32 %v907
    %v909 = vcvt.f32.s32 %v903
    %v910 = vshll.u32 %v909, 16
    %v911 = vadd.s32 %v910, %v908
    %vm912 = vcmp.lt.s32.totalorder %v616, %v617
    %v913 = vsel %vm912, %v616, %v617
    %v914 = vand.u32 %v913, 65535
    %v915 = vshra.s32 %v913, 16
    %v916 = vcvt.s32.f32 %v914
    %v917 = vcvt.s32.f32 %v915
    %918 = vmin.xlane.f32.xlu0 %v917
    %v919 = vpop.xlane.xlu0 %918
    %vm920 = vcmp.eq.f32.partialorder %v917, %v919
    %v921 = vsel %vm920, %v916, inf
    %922 = vmin.xlane.f32.xlu0 %v921
    %v923 = vpop.xlane.xlu0 %922
    %v924 = vcvt.f32.s32 %v923
    %v925 = vcvt.f32.s32 %v919
    %v926 = vshll.u32 %v925, 16
    %v927 = vadd.s32 %v926, %v924
    %vm928 = vcmp.lt.s32.totalorder %v618, %v619
    %v929 = vsel %vm928, %v618, %v619
    %v930 = vand.u32 %v929, 65535
    %v931 = vshra.s32 %v929, 16
    %v932 = vcvt.s32.f32 %v930
    %v933 = vcvt.s32.f32 %v931
    %934 = vmin.xlane.f32.xlu0 %v933
    %v935 = vpop.xlane.xlu0 %934
    %vm936 = vcmp.eq.f32.partialorder %v933, %v935
    %v937 = vsel %vm936, %v932, inf
    %938 = vmin.xlane.f32.xlu0 %v937
    %v939 = vpop.xlane.xlu0 %938
    %v940 = vcvt.f32.s32 %v939
    %v941 = vcvt.f32.s32 %v935
    %v942 = vshll.u32 %v941, 16
    %v943 = vadd.s32 %v942, %v940
    %vm944 = vcmp.lt.s32.totalorder %v620, %v621
    %v945 = vsel %vm944, %v620, %v621
    %v946 = vand.u32 %v945, 65535
    %v947 = vshra.s32 %v945, 16
    %v948 = vcvt.s32.f32 %v946
    %v949 = vcvt.s32.f32 %v947
    %950 = vmin.xlane.f32.xlu0 %v949
    %v951 = vpop.xlane.xlu0 %950
    %vm952 = vcmp.eq.f32.partialorder %v949, %v951
    %v953 = vsel %vm952, %v948, inf
    %954 = vmin.xlane.f32.xlu0 %v953
    %v955 = vpop.xlane.xlu0 %954
    %v956 = vcvt.f32.s32 %v955
    %v957 = vcvt.f32.s32 %v951
    %v958 = vshll.u32 %v957, 16
    %v959 = vadd.s32 %v958, %v956
    %vm960 = vcmp.lt.s32.totalorder %v622, %v623
    %v961 = vsel %vm960, %v622, %v623
    %v962 = vand.u32 %v961, 65535
    %v963 = vshra.s32 %v961, 16
    %v964 = vcvt.s32.f32 %v962
    %v965 = vcvt.s32.f32 %v963
    %966 = vmin.xlane.f32.xlu0 %v965
    %v967 = vpop.xlane.xlu0 %966
    %vm968 = vcmp.eq.f32.partialorder %v965, %v967
    %v969 = vsel %vm968, %v964, inf
    %970 = vmin.xlane.f32.xlu0 %v969
    %v971 = vpop.xlane.xlu0 %970
    %v972 = vcvt.f32.s32 %v971
    %v973 = vcvt.f32.s32 %v967
    %v974 = vshll.u32 %v973, 16
    %v975 = vadd.s32 %v974, %v972
    %vm976 = vcmp.lt.s32.totalorder %v624, %v625
    %v977 = vsel %vm976, %v624, %v625
    %v978 = vand.u32 %v977, 65535
    %v979 = vshra.s32 %v977, 16
    %v980 = vcvt.s32.f32 %v978
    %v981 = vcvt.s32.f32 %v979
    %982 = vmin.xlane.f32.xlu0 %v981
    %v983 = vpop.xlane.xlu0 %982
    %vm984 = vcmp.eq.f32.partialorder %v981, %v983
    %v985 = vsel %vm984, %v980, inf
    %986 = vmin.xlane.f32.xlu0 %v985
    %v987 = vpop.xlane.xlu0 %986
    %v988 = vcvt.f32.s32 %v987
    %v989 = vcvt.f32.s32 %v983
    %v990 = vshll.u32 %v989, 16
    %v991 = vadd.s32 %v990, %v988
    %vm992 = vcmp.lt.s32.totalorder %v626, %v627
    %v993 = vsel %vm992, %v626, %v627
    %v994 = vand.u32 %v993, 65535
    %v995 = vshra.s32 %v993, 16
    %v996 = vcvt.s32.f32 %v994
    %v997 = vcvt.s32.f32 %v995
    %998 = vmin.xlane.f32.xlu0 %v997
    %v999 = vpop.xlane.xlu0 %998
    %vm1000 = vcmp.eq.f32.partialorder %v997, %v999
    %v1001 = vsel %vm1000, %v996, inf
    %1002 = vmin.xlane.f32.xlu0 %v1001
    %v1003 = vpop.xlane.xlu0 %1002
    %v1004 = vcvt.f32.s32 %v1003
    %v1005 = vcvt.f32.s32 %v999
    %v1006 = vshll.u32 %v1005, 16
    %v1007 = vadd.s32 %v1006, %v1004
    %vm1008 = vcmp.lt.s32.totalorder %v628, %v629
    %v1009 = vsel %vm1008, %v628, %v629
    %v1010 = vand.u32 %v1009, 65535
    %v1011 = vshra.s32 %v1009, 16
    %v1012 = vcvt.s32.f32 %v1010
    %v1013 = vcvt.s32.f32 %v1011
    %1014 = vmin.xlane.f32.xlu0 %v1013
    %v1015 = vpop.xlane.xlu0 %1014
    %vm1016 = vcmp.eq.f32.partialorder %v1013, %v1015
    %v1017 = vsel %vm1016, %v1012, inf
    %1018 = vmin.xlane.f32.xlu0 %v1017
    %v1019 = vpop.xlane.xlu0 %1018
    %v1020 = vcvt.f32.s32 %v1019
    %v1021 = vcvt.f32.s32 %v1015
    %v1022 = vshll.u32 %v1021, 16
    %v1023 = vadd.s32 %v1022, %v1020
    %vm1024 = vcmp.lt.s32.totalorder %v630, %v631
    %v1025 = vsel %vm1024, %v630, %v631
    %v1026 = vand.u32 %v1025, 65535
    %v1027 = vshra.s32 %v1025, 16
    %v1028 = vcvt.s32.f32 %v1026
    %v1029 = vcvt.s32.f32 %v1027
    %1030 = vmin.xlane.f32.xlu0 %v1029
    %v1031 = vpop.xlane.xlu0 %1030
    %vm1032 = vcmp.eq.f32.partialorder %v1029, %v1031
    %v1033 = vsel %vm1032, %v1028, inf
    %1034 = vmin.xlane.f32.xlu0 %v1033
    %v1035 = vpop.xlane.xlu0 %1034
    %v1036 = vcvt.f32.s32 %v1035
    %v1037 = vcvt.f32.s32 %v1031
    %v1038 = vshll.u32 %v1037, 16
    %v1039 = vadd.s32 %v1038, %v1036
    %vm1040 = vcmp.lt.s32.totalorder %v632, %v633
    %v1041 = vsel %vm1040, %v632, %v633
    %v1042 = vand.u32 %v1041, 65535
    %v1043 = vshra.s32 %v1041, 16
    %v1044 = vcvt.s32.f32 %v1042
    %v1045 = vcvt.s32.f32 %v1043
    %1046 = vmin.xlane.f32.xlu0 %v1045
    %v1047 = vpop.xlane.xlu0 %1046
    %vm1048 = vcmp.eq.f32.partialorder %v1045, %v1047
    %v1049 = vsel %vm1048, %v1044, inf
    %1050 = vmin.xlane.f32.xlu0 %v1049
    %v1051 = vpop.xlane.xlu0 %1050
    %v1052 = vcvt.f32.s32 %v1051
    %v1053 = vcvt.f32.s32 %v1047
    %v1054 = vshll.u32 %v1053, 16
    %v1055 = vadd.s32 %v1054, %v1052
    %vm1056 = vcmp.lt.s32.totalorder %v634, %v635
    %v1057 = vsel %vm1056, %v634, %v635
    %v1058 = vand.u32 %v1057, 65535
    %v1059 = vshra.s32 %v1057, 16
    %v1060 = vcvt.s32.f32 %v1058
    %v1061 = vcvt.s32.f32 %v1059
    %1062 = vmin.xlane.f32.xlu0 %v1061
    %v1063 = vpop.xlane.xlu0 %1062
    %vm1064 = vcmp.eq.f32.partialorder %v1061, %v1063
    %v1065 = vsel %vm1064, %v1060, inf
    %1066 = vmin.xlane.f32.xlu0 %v1065
    %v1067 = vpop.xlane.xlu0 %1066
    %v1068 = vcvt.f32.s32 %v1067
    %v1069 = vcvt.f32.s32 %v1063
    %v1070 = vshll.u32 %v1069, 16
    %v1071 = vadd.s32 %v1070, %v1068
    %vm1072 = vcmp.lt.s32.totalorder %v636, %v637
    %v1073 = vsel %vm1072, %v636, %v637
    %v1074 = vand.u32 %v1073, 65535
    %v1075 = vshra.s32 %v1073, 16
    %v1076 = vcvt.s32.f32 %v1074
    %v1077 = vcvt.s32.f32 %v1075
    %1078 = vmin.xlane.f32.xlu0 %v1077
    %v1079 = vpop.xlane.xlu0 %1078
    %vm1080 = vcmp.eq.f32.partialorder %v1077, %v1079
    %v1081 = vsel %vm1080, %v1076, inf
    %1082 = vmin.xlane.f32.xlu0 %v1081
    %v1083 = vpop.xlane.xlu0 %1082
    %v1084 = vcvt.f32.s32 %v1083
    %v1085 = vcvt.f32.s32 %v1079
    %v1086 = vshll.u32 %v1085, 16
    %v1087 = vadd.s32 %v1086, %v1084
    %vm1088 = vcmp.lt.s32.totalorder %v638, %v639
    %v1089 = vsel %vm1088, %v638, %v639
    %v1090 = vand.u32 %v1089, 65535
    %v1091 = vshra.s32 %v1089, 16
    %v1092 = vcvt.s32.f32 %v1090
    %v1093 = vcvt.s32.f32 %v1091
    %1094 = vmin.xlane.f32.xlu0 %v1093
    %v1095 = vpop.xlane.xlu0 %1094
    %vm1096 = vcmp.eq.f32.partialorder %v1093, %v1095
    %v1097 = vsel %vm1096, %v1092, inf
    %1098 = vmin.xlane.f32.xlu0 %v1097
    %v1099 = vpop.xlane.xlu0 %1098
    %v1100 = vcvt.f32.s32 %v1099
    %v1101 = vcvt.f32.s32 %v1095
    %v1102 = vshll.u32 %v1101, 16
    %v1103 = vadd.s32 %v1102, %v1100
    %vm1104 = vcmp.lt.s32.totalorder %v640, %v641
    %v1105 = vsel %vm1104, %v640, %v641
    %v1106 = vand.u32 %v1105, 65535
    %v1107 = vshra.s32 %v1105, 16
    %v1108 = vcvt.s32.f32 %v1106
    %v1109 = vcvt.s32.f32 %v1107
    %1110 = vmin.xlane.f32.xlu0 %v1109
    %v1111 = vpop.xlane.xlu0 %1110
    %vm1112 = vcmp.eq.f32.partialorder %v1109, %v1111
    %v1113 = vsel %vm1112, %v1108, inf
    %1114 = vmin.xlane.f32.xlu0 %v1113
    %v1115 = vpop.xlane.xlu0 %1114
    %v1116 = vcvt.f32.s32 %v1115
    %v1117 = vcvt.f32.s32 %v1111
    %v1118 = vshll.u32 %v1117, 16
    %v1119 = vadd.s32 %v1118, %v1116
    %vm1120 = vcmp.lt.s32.totalorder %v642, %v643
    %v1121 = vsel %vm1120, %v642, %v643
    %v1122 = vand.u32 %v1121, 65535
    %v1123 = vshra.s32 %v1121, 16
    %v1124 = vcvt.s32.f32 %v1122
    %v1125 = vcvt.s32.f32 %v1123
    %1126 = vmin.xlane.f32.xlu0 %v1125
    %v1127 = vpop.xlane.xlu0 %1126
    %vm1128 = vcmp.eq.f32.partialorder %v1125, %v1127
    %v1129 = vsel %vm1128, %v1124, inf
    %1130 = vmin.xlane.f32.xlu0 %v1129
    %v1131 = vpop.xlane.xlu0 %1130
    %v1132 = vcvt.f32.s32 %v1131
    %v1133 = vcvt.f32.s32 %v1127
    %v1134 = vshll.u32 %v1133, 16
    %v1135 = vadd.s32 %v1134, %v1132
    %vm1136 = vcmp.lt.s32.totalorder %v644, %v645
    %v1137 = vsel %vm1136, %v644, %v645
    %v1138 = vand.u32 %v1137, 65535
    %v1139 = vshra.s32 %v1137, 16
    %v1140 = vcvt.s32.f32 %v1138
    %v1141 = vcvt.s32.f32 %v1139
    %1142 = vmin.xlane.f32.xlu0 %v1141
    %v1143 = vpop.xlane.xlu0 %1142
    %vm1144 = vcmp.eq.f32.partialorder %v1141, %v1143
    %v1145 = vsel %vm1144, %v1140, inf
    %1146 = vmin.xlane.f32.xlu0 %v1145
    %v1147 = vpop.xlane.xlu0 %1146
    %v1148 = vcvt.f32.s32 %v1147
    %v1149 = vcvt.f32.s32 %v1143
    %v1150 = vshll.u32 %v1149, 16
    %v1151 = vadd.s32 %v1150, %v1148
    %vm1152 = vcmp.lt.s32.totalorder %v646, %v647
    %v1153 = vsel %vm1152, %v646, %v647
    %v1154 = vand.u32 %v1153, 65535
    %v1155 = vshra.s32 %v1153, 16
    %v1156 = vcvt.s32.f32 %v1154
    %v1157 = vcvt.s32.f32 %v1155
    %1158 = vmin.xlane.f32.xlu0 %v1157
    %v1159 = vpop.xlane.xlu0 %1158
    %vm1160 = vcmp.eq.f32.partialorder %v1157, %v1159
    %v1161 = vsel %vm1160, %v1156, inf
    %1162 = vmin.xlane.f32.xlu0 %v1161
    %v1163 = vpop.xlane.xlu0 %1162
    %v1164 = vcvt.f32.s32 %v1163
    %v1165 = vcvt.f32.s32 %v1159
    %v1166 = vshll.u32 %v1165, 16
    %v1167 = vadd.s32 %v1166, %v1164
    %vm1168 = vcmp.lt.s32.totalorder %v648, %v649
    %v1169 = vsel %vm1168, %v648, %v649
    %v1170 = vand.u32 %v1169, 65535
    %v1171 = vshra.s32 %v1169, 16
    %v1172 = vcvt.s32.f32 %v1170
    %v1173 = vcvt.s32.f32 %v1171
    %1174 = vmin.xlane.f32.xlu0 %v1173
    %v1175 = vpop.xlane.xlu0 %1174
    %vm1176 = vcmp.eq.f32.partialorder %v1173, %v1175
    %v1177 = vsel %vm1176, %v1172, inf
    %1178 = vmin.xlane.f32.xlu0 %v1177
    %v1179 = vpop.xlane.xlu0 %1178
    %v1180 = vcvt.f32.s32 %v1179
    %v1181 = vcvt.f32.s32 %v1175
    %v1182 = vshll.u32 %v1181, 16
    %v1183 = vadd.s32 %v1182, %v1180
    %vm1184 = vcmp.lt.s32.totalorder %v650, %v651
    %v1185 = vsel %vm1184, %v650, %v651
    %v1186 = vand.u32 %v1185, 65535
    %v1187 = vshra.s32 %v1185, 16
    %v1188 = vcvt.s32.f32 %v1186
    %v1189 = vcvt.s32.f32 %v1187
    %1190 = vmin.xlane.f32.xlu0 %v1189
    %v1191 = vpop.xlane.xlu0 %1190
    %vm1192 = vcmp.eq.f32.partialorder %v1189, %v1191
    %v1193 = vsel %vm1192, %v1188, inf
    %1194 = vmin.xlane.f32.xlu0 %v1193
    %v1195 = vpop.xlane.xlu0 %1194
    %v1196 = vcvt.f32.s32 %v1195
    %v1197 = vcvt.f32.s32 %v1191
    %v1198 = vshll.u32 %v1197, 16
    %v1199 = vadd.s32 %v1198, %v1196
    %vm1200 = vcmp.lt.s32.totalorder %v652, %v653
    %v1201 = vsel %vm1200, %v652, %v653
    %v1202 = vand.u32 %v1201, 65535
    %v1203 = vshra.s32 %v1201, 16
    %v1204 = vcvt.s32.f32 %v1202
    %v1205 = vcvt.s32.f32 %v1203
    %1206 = vmin.xlane.f32.xlu0 %v1205
    %v1207 = vpop.xlane.xlu0 %1206
    %vm1208 = vcmp.eq.f32.partialorder %v1205, %v1207
    %v1209 = vsel %vm1208, %v1204, inf
    %1210 = vmin.xlane.f32.xlu0 %v1209
    %v1211 = vpop.xlane.xlu0 %1210
    %v1212 = vcvt.f32.s32 %v1211
    %v1213 = vcvt.f32.s32 %v1207
    %v1214 = vshll.u32 %v1213, 16
    %v1215 = vadd.s32 %v1214, %v1212
    %vm1216 = vcmp.lt.s32.totalorder %v654, %v655
    %v1217 = vsel %vm1216, %v654, %v655
    %v1218 = vand.u32 %v1217, 65535
    %v1219 = vshra.s32 %v1217, 16
    %v1220 = vcvt.s32.f32 %v1218
    %v1221 = vcvt.s32.f32 %v1219
    %1222 = vmin.xlane.f32.xlu0 %v1221
    %v1223 = vpop.xlane.xlu0 %1222
    %vm1224 = vcmp.eq.f32.partialorder %v1221, %v1223
    %v1225 = vsel %vm1224, %v1220, inf
    %1226 = vmin.xlane.f32.xlu0 %v1225
    %v1227 = vpop.xlane.xlu0 %1226
    %v1228 = vcvt.f32.s32 %v1227
    %v1229 = vcvt.f32.s32 %v1223
    %v1230 = vshll.u32 %v1229, 16
    %v1231 = vadd.s32 %v1230, %v1228
    %vm1232 = vcmp.lt.s32.totalorder %v656, %v657
    %v1233 = vsel %vm1232, %v656, %v657
    %v1234 = vand.u32 %v1233, 65535
    %v1235 = vshra.s32 %v1233, 16
    %v1236 = vcvt.s32.f32 %v1234
    %v1237 = vcvt.s32.f32 %v1235
    %1238 = vmin.xlane.f32.xlu0 %v1237
    %v1239 = vpop.xlane.xlu0 %1238
    %vm1240 = vcmp.eq.f32.partialorder %v1237, %v1239
    %v1241 = vsel %vm1240, %v1236, inf
    %1242 = vmin.xlane.f32.xlu0 %v1241
    %v1243 = vpop.xlane.xlu0 %1242
    %v1244 = vcvt.f32.s32 %v1243
    %v1245 = vcvt.f32.s32 %v1239
    %v1246 = vshll.u32 %v1245, 16
    %v1247 = vadd.s32 %v1246, %v1244
    %vm1248 = vcmp.lt.s32.totalorder %v658, %v659
    %v1249 = vsel %vm1248, %v658, %v659
    %v1250 = vand.u32 %v1249, 65535
    %v1251 = vshra.s32 %v1249, 16
    %v1252 = vcvt.s32.f32 %v1250
    %v1253 = vcvt.s32.f32 %v1251
    %1254 = vmin.xlane.f32.xlu0 %v1253
    %v1255 = vpop.xlane.xlu0 %1254
    %vm1256 = vcmp.eq.f32.partialorder %v1253, %v1255
    %v1257 = vsel %vm1256, %v1252, inf
    %1258 = vmin.xlane.f32.xlu0 %v1257
    %v1259 = vpop.xlane.xlu0 %1258
    %v1260 = vcvt.f32.s32 %v1259
    %v1261 = vcvt.f32.s32 %v1255
    %v1262 = vshll.u32 %v1261, 16
    %v1263 = vadd.s32 %v1262, %v1260
    %vm1264 = vcmp.lt.s32.totalorder %v660, %v661
    %v1265 = vsel %vm1264, %v660, %v661
    %v1266 = vand.u32 %v1265, 65535
    %v1267 = vshra.s32 %v1265, 16
    %v1268 = vcvt.s32.f32 %v1266
    %v1269 = vcvt.s32.f32 %v1267
    %1270 = vmin.xlane.f32.xlu0 %v1269
    %v1271 = vpop.xlane.xlu0 %1270
    %vm1272 = vcmp.eq.f32.partialorder %v1269, %v1271
    %v1273 = vsel %vm1272, %v1268, inf
    %1274 = vmin.xlane.f32.xlu0 %v1273
    %v1275 = vpop.xlane.xlu0 %1274
    %v1276 = vcvt.f32.s32 %v1275
    %v1277 = vcvt.f32.s32 %v1271
    %v1278 = vshll.u32 %v1277, 16
    %v1279 = vadd.s32 %v1278, %v1276
    %vm1280 = vcmp.lt.s32.totalorder %v662, %v663
    %v1281 = vsel %vm1280, %v662, %v663
    %v1282 = vand.u32 %v1281, 65535
    %v1283 = vshra.s32 %v1281, 16
    %v1284 = vcvt.s32.f32 %v1282
    %v1285 = vcvt.s32.f32 %v1283
    %1286 = vmin.xlane.f32.xlu0 %v1285
    %v1287 = vpop.xlane.xlu0 %1286
    %vm1288 = vcmp.eq.f32.partialorder %v1285, %v1287
    %v1289 = vsel %vm1288, %v1284, inf
    %1290 = vmin.xlane.f32.xlu0 %v1289
    %v1291 = vpop.xlane.xlu0 %1290
    %v1292 = vcvt.f32.s32 %v1291
    %v1293 = vcvt.f32.s32 %v1287
    %v1294 = vshll.u32 %v1293, 16
    %v1295 = vadd.s32 %v1294, %v1292
    %vm1296 = vcmp.lt.s32.totalorder %v664, %v665
    %v1297 = vsel %vm1296, %v664, %v665
    %v1298 = vand.u32 %v1297, 65535
    %v1299 = vshra.s32 %v1297, 16
    %v1300 = vcvt.s32.f32 %v1298
    %v1301 = vcvt.s32.f32 %v1299
    %1302 = vmin.xlane.f32.xlu0 %v1301
    %v1303 = vpop.xlane.xlu0 %1302
    %vm1304 = vcmp.eq.f32.partialorder %v1301, %v1303
    %v1305 = vsel %vm1304, %v1300, inf
    %1306 = vmin.xlane.f32.xlu0 %v1305
    %v1307 = vpop.xlane.xlu0 %1306
    %v1308 = vcvt.f32.s32 %v1307
    %v1309 = vcvt.f32.s32 %v1303
    %v1310 = vshll.u32 %v1309, 16
    %v1311 = vadd.s32 %v1310, %v1308
    %vm1312 = vcmp.lt.s32.totalorder %v666, %v667
    %v1313 = vsel %vm1312, %v666, %v667
    %v1314 = vand.u32 %v1313, 65535
    %v1315 = vshra.s32 %v1313, 16
    %v1316 = vcvt.s32.f32 %v1314
    %v1317 = vcvt.s32.f32 %v1315
    %1318 = vmin.xlane.f32.xlu0 %v1317
    %v1319 = vpop.xlane.xlu0 %1318
    %vm1320 = vcmp.eq.f32.partialorder %v1317, %v1319
    %v1321 = vsel %vm1320, %v1316, inf
    %1322 = vmin.xlane.f32.xlu0 %v1321
    %v1323 = vpop.xlane.xlu0 %1322
    %v1324 = vcvt.f32.s32 %v1323
    %v1325 = vcvt.f32.s32 %v1319
    %v1326 = vshll.u32 %v1325, 16
    %v1327 = vadd.s32 %v1326, %v1324
    %vm1328 = vcmp.lt.s32.totalorder %v668, %v669
    %v1329 = vsel %vm1328, %v668, %v669
    %v1330 = vand.u32 %v1329, 65535
    %v1331 = vshra.s32 %v1329, 16
    %v1332 = vcvt.s32.f32 %v1330
    %v1333 = vcvt.s32.f32 %v1331
    %1334 = vmin.xlane.f32.xlu0 %v1333
    %v1335 = vpop.xlane.xlu0 %1334
    %vm1336 = vcmp.eq.f32.partialorder %v1333, %v1335
    %v1337 = vsel %vm1336, %v1332, inf
    %1338 = vmin.xlane.f32.xlu0 %v1337
    %v1339 = vpop.xlane.xlu0 %1338
    %v1340 = vcvt.f32.s32 %v1339
    %v1341 = vcvt.f32.s32 %v1335
    %v1342 = vshll.u32 %v1341, 16
    %v1343 = vadd.s32 %v1342, %v1340
    %vm1344 = vcmp.lt.s32.totalorder %v670, %v671
    %v1345 = vsel %vm1344, %v670, %v671
    %v1346 = vand.u32 %v1345, 65535
    %v1347 = vshra.s32 %v1345, 16
    %v1348 = vcvt.s32.f32 %v1346
    %v1349 = vcvt.s32.f32 %v1347
    %1350 = vmin.xlane.f32.xlu0 %v1349
    %v1351 = vpop.xlane.xlu0 %1350
    %vm1352 = vcmp.eq.f32.partialorder %v1349, %v1351
    %v1353 = vsel %vm1352, %v1348, inf
    %1354 = vmin.xlane.f32.xlu0 %v1353
    %v1355 = vpop.xlane.xlu0 %1354
    %v1356 = vcvt.f32.s32 %v1355
    %v1357 = vcvt.f32.s32 %v1351
    %v1358 = vshll.u32 %v1357, 16
    %v1359 = vadd.s32 %v1358, %v1356
    %vm1360 = vcmp.lt.s32.totalorder %v672, %v673
    %v1361 = vsel %vm1360, %v672, %v673
    %v1362 = vand.u32 %v1361, 65535
    %v1363 = vshra.s32 %v1361, 16
    %v1364 = vcvt.s32.f32 %v1362
    %v1365 = vcvt.s32.f32 %v1363
    %1366 = vmin.xlane.f32.xlu0 %v1365
    %v1367 = vpop.xlane.xlu0 %1366
    %vm1368 = vcmp.eq.f32.partialorder %v1365, %v1367
    %v1369 = vsel %vm1368, %v1364, inf
    %1370 = vmin.xlane.f32.xlu0 %v1369
    %v1371 = vpop.xlane.xlu0 %1370
    %v1372 = vcvt.f32.s32 %v1371
    %v1373 = vcvt.f32.s32 %v1367
    %v1374 = vshll.u32 %v1373, 16
    %v1375 = vadd.s32 %v1374, %v1372
    %vm1376 = vcmp.lt.s32.totalorder %v674, %v675
    %v1377 = vsel %vm1376, %v674, %v675
    %v1378 = vand.u32 %v1377, 65535
    %v1379 = vshra.s32 %v1377, 16
    %v1380 = vcvt.s32.f32 %v1378
    %v1381 = vcvt.s32.f32 %v1379
    %1382 = vmin.xlane.f32.xlu0 %v1381
    %v1383 = vpop.xlane.xlu0 %1382
    %vm1384 = vcmp.eq.f32.partialorder %v1381, %v1383
    %v1385 = vsel %vm1384, %v1380, inf
    %1386 = vmin.xlane.f32.xlu0 %v1385
    %v1387 = vpop.xlane.xlu0 %1386
    %v1388 = vcvt.f32.s32 %v1387
    %v1389 = vcvt.f32.s32 %v1383
    %v1390 = vshll.u32 %v1389, 16
    %v1391 = vadd.s32 %v1390, %v1388
    %vm1392 = vcmp.lt.s32.totalorder %v676, %v677
    %v1393 = vsel %vm1392, %v676, %v677
    %v1394 = vand.u32 %v1393, 65535
    %v1395 = vshra.s32 %v1393, 16
    %v1396 = vcvt.s32.f32 %v1394
    %v1397 = vcvt.s32.f32 %v1395
    %1398 = vmin.xlane.f32.xlu0 %v1397
    %v1399 = vpop.xlane.xlu0 %1398
    %vm1400 = vcmp.eq.f32.partialorder %v1397, %v1399
    %v1401 = vsel %vm1400, %v1396, inf
    %1402 = vmin.xlane.f32.xlu0 %v1401
    %v1403 = vpop.xlane.xlu0 %1402
    %v1404 = vcvt.f32.s32 %v1403
    %v1405 = vcvt.f32.s32 %v1399
    %v1406 = vshll.u32 %v1405, 16
    %v1407 = vadd.s32 %v1406, %v1404
    %vm1408 = vcmp.lt.s32.totalorder %v678, %v679
    %v1409 = vsel %vm1408, %v678, %v679
    %v1410 = vand.u32 %v1409, 65535
    %v1411 = vshra.s32 %v1409, 16
    %v1412 = vcvt.s32.f32 %v1410
    %v1413 = vcvt.s32.f32 %v1411
    %1414 = vmin.xlane.f32.xlu0 %v1413
    %v1415 = vpop.xlane.xlu0 %1414
    %vm1416 = vcmp.eq.f32.partialorder %v1413, %v1415
    %v1417 = vsel %vm1416, %v1412, inf
    %1418 = vmin.xlane.f32.xlu0 %v1417
    %v1419 = vpop.xlane.xlu0 %1418
    %v1420 = vcvt.f32.s32 %v1419
    %v1421 = vcvt.f32.s32 %v1415
    %v1422 = vshll.u32 %v1421, 16
    %v1423 = vadd.s32 %v1422, %v1420
    %vm1424 = vcmp.lt.s32.totalorder %v680, %v681
    %v1425 = vsel %vm1424, %v680, %v681
    %v1426 = vand.u32 %v1425, 65535
    %v1427 = vshra.s32 %v1425, 16
    %v1428 = vcvt.s32.f32 %v1426
    %v1429 = vcvt.s32.f32 %v1427
    %1430 = vmin.xlane.f32.xlu0 %v1429
    %v1431 = vpop.xlane.xlu0 %1430
    %vm1432 = vcmp.eq.f32.partialorder %v1429, %v1431
    %v1433 = vsel %vm1432, %v1428, inf
    %1434 = vmin.xlane.f32.xlu0 %v1433
    %v1435 = vpop.xlane.xlu0 %1434
    %v1436 = vcvt.f32.s32 %v1435
    %v1437 = vcvt.f32.s32 %v1431
    %v1438 = vshll.u32 %v1437, 16
    %v1439 = vadd.s32 %v1438, %v1436
    %vm1440 = vcmp.lt.s32.totalorder %v682, %v683
    %v1441 = vsel %vm1440, %v682, %v683
    %v1442 = vand.u32 %v1441, 65535
    %v1443 = vshra.s32 %v1441, 16
    %v1444 = vcvt.s32.f32 %v1442
    %v1445 = vcvt.s32.f32 %v1443
    %1446 = vmin.xlane.f32.xlu0 %v1445
    %v1447 = vpop.xlane.xlu0 %1446
    %vm1448 = vcmp.eq.f32.partialorder %v1445, %v1447
    %v1449 = vsel %vm1448, %v1444, inf
    %1450 = vmin.xlane.f32.xlu0 %v1449
    %v1451 = vpop.xlane.xlu0 %1450
    %v1452 = vcvt.f32.s32 %v1451
    %v1453 = vcvt.f32.s32 %v1447
    %v1454 = vshll.u32 %v1453, 16
    %v1455 = vadd.s32 %v1454, %v1452
    %vm1456 = vcmp.lt.s32.totalorder %v684, %v685
    %v1457 = vsel %vm1456, %v684, %v685
    %v1458 = vand.u32 %v1457, 65535
    %v1459 = vshra.s32 %v1457, 16
    %v1460 = vcvt.s32.f32 %v1458
    %v1461 = vcvt.s32.f32 %v1459
    %1462 = vmin.xlane.f32.xlu0 %v1461
    %v1463 = vpop.xlane.xlu0 %1462
    %vm1464 = vcmp.eq.f32.partialorder %v1461, %v1463
    %v1465 = vsel %vm1464, %v1460, inf
    %1466 = vmin.xlane.f32.xlu0 %v1465
    %v1467 = vpop.xlane.xlu0 %1466
    %v1468 = vcvt.f32.s32 %v1467
    %v1469 = vcvt.f32.s32 %v1463
    %v1470 = vshll.u32 %v1469, 16
    %v1471 = vadd.s32 %v1470, %v1468
    %vm1472 = vcmp.lt.s32.totalorder %v686, %v687
    %v1473 = vsel %vm1472, %v686, %v687
    %v1474 = vand.u32 %v1473, 65535
    %v1475 = vshra.s32 %v1473, 16
    %v1476 = vcvt.s32.f32 %v1474
    %v1477 = vcvt.s32.f32 %v1475
    %1478 = vmin.xlane.f32.xlu0 %v1477
    %v1479 = vpop.xlane.xlu0 %1478
    %vm1480 = vcmp.eq.f32.partialorder %v1477, %v1479
    %v1481 = vsel %vm1480, %v1476, inf
    %1482 = vmin.xlane.f32.xlu0 %v1481
    %v1483 = vpop.xlane.xlu0 %1482
    %v1484 = vcvt.f32.s32 %v1483
    %v1485 = vcvt.f32.s32 %v1479
    %v1486 = vshll.u32 %v1485, 16
    %v1487 = vadd.s32 %v1486, %v1484
    %vm1488 = vcmp.lt.s32.totalorder %v688, %v689
    %v1489 = vsel %vm1488, %v688, %v689
    %v1490 = vand.u32 %v1489, 65535
    %v1491 = vshra.s32 %v1489, 16
    %v1492 = vcvt.s32.f32 %v1490
    %v1493 = vcvt.s32.f32 %v1491
    %1494 = vmin.xlane.f32.xlu0 %v1493
    %v1495 = vpop.xlane.xlu0 %1494
    %vm1496 = vcmp.eq.f32.partialorder %v1493, %v1495
    %v1497 = vsel %vm1496, %v1492, inf
    %1498 = vmin.xlane.f32.xlu0 %v1497
    %v1499 = vpop.xlane.xlu0 %1498
    %v1500 = vcvt.f32.s32 %v1499
    %v1501 = vcvt.f32.s32 %v1495
    %v1502 = vshll.u32 %v1501, 16
    %v1503 = vadd.s32 %v1502, %v1500
    %vm1504 = vcmp.lt.s32.totalorder %v690, %v691
    %v1505 = vsel %vm1504, %v690, %v691
    %v1506 = vand.u32 %v1505, 65535
    %v1507 = vshra.s32 %v1505, 16
    %v1508 = vcvt.s32.f32 %v1506
    %v1509 = vcvt.s32.f32 %v1507
    %1510 = vmin.xlane.f32.xlu0 %v1509
    %v1511 = vpop.xlane.xlu0 %1510
    %vm1512 = vcmp.eq.f32.partialorder %v1509, %v1511
    %v1513 = vsel %vm1512, %v1508, inf
    %1514 = vmin.xlane.f32.xlu0 %v1513
    %v1515 = vpop.xlane.xlu0 %1514
    %v1516 = vcvt.f32.s32 %v1515
    %v1517 = vcvt.f32.s32 %v1511
    %v1518 = vshll.u32 %v1517, 16
    %v1519 = vadd.s32 %v1518, %v1516
    %vm1520 = vcmp.lt.s32.totalorder %v692, %v693
    %v1521 = vsel %vm1520, %v692, %v693
    %v1522 = vand.u32 %v1521, 65535
    %v1523 = vshra.s32 %v1521, 16
    %v1524 = vcvt.s32.f32 %v1522
    %v1525 = vcvt.s32.f32 %v1523
    %1526 = vmin.xlane.f32.xlu0 %v1525
    %v1527 = vpop.xlane.xlu0 %1526
    %vm1528 = vcmp.eq.f32.partialorder %v1525, %v1527
    %v1529 = vsel %vm1528, %v1524, inf
    %1530 = vmin.xlane.f32.xlu0 %v1529
    %v1531 = vpop.xlane.xlu0 %1530
    %v1532 = vcvt.f32.s32 %v1531
    %v1533 = vcvt.f32.s32 %v1527
    %v1534 = vshll.u32 %v1533, 16
    %v1535 = vadd.s32 %v1534, %v1532
    %vm1536 = vcmp.lt.s32.totalorder %v694, %v695
    %v1537 = vsel %vm1536, %v694, %v695
    %v1538 = vand.u32 %v1537, 65535
    %v1539 = vshra.s32 %v1537, 16
    %v1540 = vcvt.s32.f32 %v1538
    %v1541 = vcvt.s32.f32 %v1539
    %1542 = vmin.xlane.f32.xlu0 %v1541
    %v1543 = vpop.xlane.xlu0 %1542
    %vm1544 = vcmp.eq.f32.partialorder %v1541, %v1543
    %v1545 = vsel %vm1544, %v1540, inf
    %1546 = vmin.xlane.f32.xlu0 %v1545
    %v1547 = vpop.xlane.xlu0 %1546
    %v1548 = vcvt.f32.s32 %v1547
    %v1549 = vcvt.f32.s32 %v1543
    %v1550 = vshll.u32 %v1549, 16
    %v1551 = vadd.s32 %v1550, %v1548
    %vm1552 = vcmp.lt.s32.totalorder %v696, %v697
    %v1553 = vsel %vm1552, %v696, %v697
    %v1554 = vand.u32 %v1553, 65535
    %v1555 = vshra.s32 %v1553, 16
    %v1556 = vcvt.s32.f32 %v1554
    %v1557 = vcvt.s32.f32 %v1555
    %1558 = vmin.xlane.f32.xlu0 %v1557
    %v1559 = vpop.xlane.xlu0 %1558
    %vm1560 = vcmp.eq.f32.partialorder %v1557, %v1559
    %v1561 = vsel %vm1560, %v1556, inf
    %1562 = vmin.xlane.f32.xlu0 %v1561
    %v1563 = vpop.xlane.xlu0 %1562
    %v1564 = vcvt.f32.s32 %v1563
    %v1565 = vcvt.f32.s32 %v1559
    %v1566 = vshll.u32 %v1565, 16
    %v1567 = vadd.s32 %v1566, %v1564
    %vm1568 = vcmp.lt.s32.totalorder %v698, %v699
    %v1569 = vsel %vm1568, %v698, %v699
    %v1570 = vand.u32 %v1569, 65535
    %v1571 = vshra.s32 %v1569, 16
    %v1572 = vcvt.s32.f32 %v1570
    %v1573 = vcvt.s32.f32 %v1571
    %1574 = vmin.xlane.f32.xlu0 %v1573
    %v1575 = vpop.xlane.xlu0 %1574
    %vm1576 = vcmp.eq.f32.partialorder %v1573, %v1575
    %v1577 = vsel %vm1576, %v1572, inf
    %1578 = vmin.xlane.f32.xlu0 %v1577
    %v1579 = vpop.xlane.xlu0 %1578
    %v1580 = vcvt.f32.s32 %v1579
    %v1581 = vcvt.f32.s32 %v1575
    %v1582 = vshll.u32 %v1581, 16
    %v1583 = vadd.s32 %v1582, %v1580
    %vm1584 = vcmp.lt.s32.totalorder %v700, %v701
    %v1585 = vsel %vm1584, %v700, %v701
    %v1586 = vand.u32 %v1585, 65535
    %v1587 = vshra.s32 %v1585, 16
    %v1588 = vcvt.s32.f32 %v1586
    %v1589 = vcvt.s32.f32 %v1587
    %1590 = vmin.xlane.f32.xlu0 %v1589
    %v1591 = vpop.xlane.xlu0 %1590
    %vm1592 = vcmp.eq.f32.partialorder %v1589, %v1591
    %v1593 = vsel %vm1592, %v1588, inf
    %1594 = vmin.xlane.f32.xlu0 %v1593
    %v1595 = vpop.xlane.xlu0 %1594
    %v1596 = vcvt.f32.s32 %v1595
    %v1597 = vcvt.f32.s32 %v1591
    %v1598 = vshll.u32 %v1597, 16
    %v1599 = vadd.s32 %v1598, %v1596
    %vm1600 = vcmp.lt.s32.totalorder %v702, %v703
    %v1601 = vsel %vm1600, %v702, %v703
    %v1602 = vand.u32 %v1601, 65535
    %v1603 = vshra.s32 %v1601, 16
    %v1604 = vcvt.s32.f32 %v1602
    %v1605 = vcvt.s32.f32 %v1603
    %1606 = vmin.xlane.f32.xlu0 %v1605
    %v1607 = vpop.xlane.xlu0 %1606
    %vm1608 = vcmp.eq.f32.partialorder %v1605, %v1607
    %v1609 = vsel %vm1608, %v1604, inf
    %1610 = vmin.xlane.f32.xlu0 %v1609
    %v1611 = vpop.xlane.xlu0 %1610
    %v1612 = vcvt.f32.s32 %v1611
    %v1613 = vcvt.f32.s32 %v1607
    %v1614 = vshll.u32 %v1613, 16
    %v1615 = vadd.s32 %v1614, %v1612
    %vm1616 = vcmp.lt.s32.totalorder %v704, %v705
    %v1617 = vsel %vm1616, %v704, %v705
    %v1618 = vand.u32 %v1617, 65535
    %v1619 = vshra.s32 %v1617, 16
    %v1620 = vcvt.s32.f32 %v1618
    %v1621 = vcvt.s32.f32 %v1619
    %1622 = vmin.xlane.f32.xlu0 %v1621
    %v1623 = vpop.xlane.xlu0 %1622
    %vm1624 = vcmp.eq.f32.partialorder %v1621, %v1623
    %v1625 = vsel %vm1624, %v1620, inf
    %1626 = vmin.xlane.f32.xlu0 %v1625
    %v1627 = vpop.xlane.xlu0 %1626
    %v1628 = vcvt.f32.s32 %v1627
    %v1629 = vcvt.f32.s32 %v1623
    %v1630 = vshll.u32 %v1629, 16
    %v1631 = vadd.s32 %v1630, %v1628
    %vm1632 = vcmp.lt.s32.totalorder %v706, %v707
    %v1633 = vsel %vm1632, %v706, %v707
    %v1634 = vand.u32 %v1633, 65535
    %v1635 = vshra.s32 %v1633, 16
    %v1636 = vcvt.s32.f32 %v1634
    %v1637 = vcvt.s32.f32 %v1635
    %1638 = vmin.xlane.f32.xlu0 %v1637
    %v1639 = vpop.xlane.xlu0 %1638
    %vm1640 = vcmp.eq.f32.partialorder %v1637, %v1639
    %v1641 = vsel %vm1640, %v1636, inf
    %1642 = vmin.xlane.f32.xlu0 %v1641
    %v1643 = vpop.xlane.xlu0 %1642
    %v1644 = vcvt.f32.s32 %v1643
    %v1645 = vcvt.f32.s32 %v1639
    %v1646 = vshll.u32 %v1645, 16
    %v1647 = vadd.s32 %v1646, %v1644
    %vm1648 = vcmp.lt.s32.totalorder %v708, %v709
    %v1649 = vsel %vm1648, %v708, %v709
    %v1650 = vand.u32 %v1649, 65535
    %v1651 = vshra.s32 %v1649, 16
    %v1652 = vcvt.s32.f32 %v1650
    %v1653 = vcvt.s32.f32 %v1651
    %1654 = vmin.xlane.f32.xlu0 %v1653
    %v1655 = vpop.xlane.xlu0 %1654
    %vm1656 = vcmp.eq.f32.partialorder %v1653, %v1655
    %v1657 = vsel %vm1656, %v1652, inf
    %1658 = vmin.xlane.f32.xlu0 %v1657
    %v1659 = vpop.xlane.xlu0 %1658
    %v1660 = vcvt.f32.s32 %v1659
    %v1661 = vcvt.f32.s32 %v1655
    %v1662 = vshll.u32 %v1661, 16
    %v1663 = vadd.s32 %v1662, %v1660
    %vm1664 = vcmp.lt.s32.totalorder %v710, %v711
    %v1665 = vsel %vm1664, %v710, %v711
    %v1666 = vand.u32 %v1665, 65535
    %v1667 = vshra.s32 %v1665, 16
    %v1668 = vcvt.s32.f32 %v1666
    %v1669 = vcvt.s32.f32 %v1667
    %1670 = vmin.xlane.f32.xlu0 %v1669
    %v1671 = vpop.xlane.xlu0 %1670
    %vm1672 = vcmp.eq.f32.partialorder %v1669, %v1671
    %v1673 = vsel %vm1672, %v1668, inf
    %1674 = vmin.xlane.f32.xlu0 %v1673
    %v1675 = vpop.xlane.xlu0 %1674
    %v1676 = vcvt.f32.s32 %v1675
    %v1677 = vcvt.f32.s32 %v1671
    %v1678 = vshll.u32 %v1677, 16
    %v1679 = vadd.s32 %v1678, %v1676
    %vm1680 = vcmp.lt.s32.totalorder %v712, %v713
    %v1681 = vsel %vm1680, %v712, %v713
    %v1682 = vand.u32 %v1681, 65535
    %v1683 = vshra.s32 %v1681, 16
    %v1684 = vcvt.s32.f32 %v1682
    %v1685 = vcvt.s32.f32 %v1683
    %1686 = vmin.xlane.f32.xlu0 %v1685
    %v1687 = vpop.xlane.xlu0 %1686
    %vm1688 = vcmp.eq.f32.partialorder %v1685, %v1687
    %v1689 = vsel %vm1688, %v1684, inf
    %1690 = vmin.xlane.f32.xlu0 %v1689
    %v1691 = vpop.xlane.xlu0 %1690
    %v1692 = vcvt.f32.s32 %v1691
    %v1693 = vcvt.f32.s32 %v1687
    %v1694 = vshll.u32 %v1693, 16
    %v1695 = vadd.s32 %v1694, %v1692
    %vm1696 = vcmp.lt.s32.totalorder %v714, %v715
    %v1697 = vsel %vm1696, %v714, %v715
    %v1698 = vand.u32 %v1697, 65535
    %v1699 = vshra.s32 %v1697, 16
    %v1700 = vcvt.s32.f32 %v1698
    %v1701 = vcvt.s32.f32 %v1699
    %1702 = vmin.xlane.f32.xlu0 %v1701
    %v1703 = vpop.xlane.xlu0 %1702
    %vm1704 = vcmp.eq.f32.partialorder %v1701, %v1703
    %v1705 = vsel %vm1704, %v1700, inf
    %1706 = vmin.xlane.f32.xlu0 %v1705
    %v1707 = vpop.xlane.xlu0 %1706
    %v1708 = vcvt.f32.s32 %v1707
    %v1709 = vcvt.f32.s32 %v1703
    %v1710 = vshll.u32 %v1709, 16
    %v1711 = vadd.s32 %v1710, %v1708
    %vm1712 = vcmp.lt.s32.totalorder %v716, %v717
    %v1713 = vsel %vm1712, %v716, %v717
    %v1714 = vand.u32 %v1713, 65535
    %v1715 = vshra.s32 %v1713, 16
    %v1716 = vcvt.s32.f32 %v1714
    %v1717 = vcvt.s32.f32 %v1715
    %1718 = vmin.xlane.f32.xlu0 %v1717
    %v1719 = vpop.xlane.xlu0 %1718
    %vm1720 = vcmp.eq.f32.partialorder %v1717, %v1719
    %v1721 = vsel %vm1720, %v1716, inf
    %1722 = vmin.xlane.f32.xlu0 %v1721
    %v1723 = vpop.xlane.xlu0 %1722
    %v1724 = vcvt.f32.s32 %v1723
    %v1725 = vcvt.f32.s32 %v1719
    %v1726 = vshll.u32 %v1725, 16
    %v1727 = vadd.s32 %v1726, %v1724
    %vm1728 = vcmp.lt.s32.totalorder %v718, %v719
    %v1729 = vsel %vm1728, %v718, %v719
    %v1730 = vand.u32 %v1729, 65535
    %v1731 = vshra.s32 %v1729, 16
    %v1732 = vcvt.s32.f32 %v1730
    %v1733 = vcvt.s32.f32 %v1731
    %1734 = vmin.xlane.f32.xlu0 %v1733
    %v1735 = vpop.xlane.xlu0 %1734
    %vm1736 = vcmp.eq.f32.partialorder %v1733, %v1735
    %v1737 = vsel %vm1736, %v1732, inf
    %1738 = vmin.xlane.f32.xlu0 %v1737
    %v1739 = vpop.xlane.xlu0 %1738
    %v1740 = vcvt.f32.s32 %v1739
    %v1741 = vcvt.f32.s32 %v1735
    %v1742 = vshll.u32 %v1741, 16
    %v1743 = vadd.s32 %v1742, %v1740
    %s1744 = smul.u32 0, 256
    %v1745 = vstv %s1744
    %v1746 = vadd.s32 %v1745, %v51
    %v1747 = vadd.s32 %v1745, %v52
    %v1748 = vlaneseq
    %v1749 = vshrl.u32 %v1748, 7
    %1751 = vset.pattern.permute.xlu0 %v1749
    %1752 = vperm.xlu0 %1751, %v1746
    %v1753 = vpop.permute.xlu0 %1752
    %v1754 = vlaneseq
    %v1755 = vshrl.u32 %v1754, 7
    %v1756 = vadd.s32 %v1755, 8
    %1757 = vset.pattern.permute.xlu0 %v1756
    %1758 = vperm.xlu0 %1757, %v1746
    %v1759 = vpop.permute.xlu0 %1758
    %v1760 = vlaneseq
    %v1761 = vshrl.u32 %v1760, 7
    %v1762 = vadd.s32 %v1761, 16
    %1763 = vset.pattern.permute.xlu0 %v1762
    %1764 = vperm.xlu0 %1763, %v1746
    %v1765 = vpop.permute.xlu0 %1764
    %v1766 = vlaneseq
    %v1767 = vshrl.u32 %v1766, 7
    %v1768 = vadd.s32 %v1767, 24
    %1769 = vset.pattern.permute.xlu0 %v1768
    %1770 = vperm.xlu0 %1769, %v1746
    %v1771 = vpop.permute.xlu0 %1770
    %v1772 = vlaneseq
    %v1773 = vshrl.u32 %v1772, 7
    %v1774 = vadd.s32 %v1773, 32
    %1775 = vset.pattern.permute.xlu0 %v1774
    %1776 = vperm.xlu0 %1775, %v1746
    %v1777 = vpop.permute.xlu0 %1776
    %v1778 = vlaneseq
    %v1779 = vshrl.u32 %v1778, 7
    %v1780 = vadd.s32 %v1779, 40
    %1781 = vset.pattern.permute.xlu0 %v1780
    %1782 = vperm.xlu0 %1781, %v1746
    %v1783 = vpop.permute.xlu0 %1782
    %v1784 = vlaneseq
    %v1785 = vshrl.u32 %v1784, 7
    %v1786 = vadd.s32 %v1785, 48
    %1787 = vset.pattern.permute.xlu0 %v1786
    %1788 = vperm.xlu0 %1787, %v1746
    %v1789 = vpop.permute.xlu0 %1788
    %v1790 = vlaneseq
    %v1791 = vshrl.u32 %v1790, 7
    %v1792 = vadd.s32 %v1791, 56
    %1793 = vset.pattern.permute.xlu0 %v1792
    %1794 = vperm.xlu0 %1793, %v1746
    %v1795 = vpop.permute.xlu0 %1794
    %v1796 = vlaneseq
    %v1797 = vshrl.u32 %v1796, 7
    %v1798 = vadd.s32 %v1797, 64
    %1799 = vset.pattern.permute.xlu0 %v1798
    %1800 = vperm.xlu0 %1799, %v1746
    %v1801 = vpop.permute.xlu0 %1800
    %v1802 = vlaneseq
    %v1803 = vshrl.u32 %v1802, 7
    %v1804 = vadd.s32 %v1803, 72
    %1805 = vset.pattern.permute.xlu0 %v1804
    %1806 = vperm.xlu0 %1805, %v1746
    %v1807 = vpop.permute.xlu0 %1806
    %v1808 = vlaneseq
    %v1809 = vshrl.u32 %v1808, 7
    %v1810 = vadd.s32 %v1809, 80
    %1811 = vset.pattern.permute.xlu0 %v1810
    %1812 = vperm.xlu0 %1811, %v1746
    %v1813 = vpop.permute.xlu0 %1812
    %v1814 = vlaneseq
    %v1815 = vshrl.u32 %v1814, 7
    %v1816 = vadd.s32 %v1815, 88
    %1817 = vset.pattern.permute.xlu0 %v1816
    %1818 = vperm.xlu0 %1817, %v1746
    %v1819 = vpop.permute.xlu0 %1818
    %v1820 = vlaneseq
    %v1821 = vshrl.u32 %v1820, 7
    %v1822 = vadd.s32 %v1821, 96
    %1823 = vset.pattern.permute.xlu0 %v1822
    %1824 = vperm.xlu0 %1823, %v1746
    %v1825 = vpop.permute.xlu0 %1824
    %v1826 = vlaneseq
    %v1827 = vshrl.u32 %v1826, 7
    %v1828 = vadd.s32 %v1827, 104
    %1829 = vset.pattern.permute.xlu0 %v1828
    %1830 = vperm.xlu0 %1829, %v1746
    %v1831 = vpop.permute.xlu0 %1830
    %v1832 = vlaneseq
    %v1833 = vshrl.u32 %v1832, 7
    %v1834 = vadd.s32 %v1833, 112
    %1835 = vset.pattern.permute.xlu0 %v1834
    %1836 = vperm.xlu0 %1835, %v1746
    %v1837 = vpop.permute.xlu0 %1836
    %v1838 = vlaneseq
    %v1839 = vshrl.u32 %v1838, 7
    %v1840 = vadd.s32 %v1839, 120
    %1841 = vset.pattern.permute.xlu0 %v1840
    %1842 = vperm.xlu0 %1841, %v1746
    %v1843 = vpop.permute.xlu0 %1842
    %v1844 = vlaneseq
    %v1845 = vshrl.u32 %v1844, 7
    %1847 = vset.pattern.permute.xlu0 %v1845
    %1848 = vperm.xlu0 %1847, %v1747
    %v1849 = vpop.permute.xlu0 %1848
    %v1850 = vlaneseq
    %v1851 = vshrl.u32 %v1850, 7
    %v1852 = vadd.s32 %v1851, 8
    %1853 = vset.pattern.permute.xlu0 %v1852
    %1854 = vperm.xlu0 %1853, %v1747
    %v1855 = vpop.permute.xlu0 %1854
    %v1856 = vlaneseq
    %v1857 = vshrl.u32 %v1856, 7
    %v1858 = vadd.s32 %v1857, 16
    %1859 = vset.pattern.permute.xlu0 %v1858
    %1860 = vperm.xlu0 %1859, %v1747
    %v1861 = vpop.permute.xlu0 %1860
    %v1862 = vlaneseq
    %v1863 = vshrl.u32 %v1862, 7
    %v1864 = vadd.s32 %v1863, 24
    %1865 = vset.pattern.permute.xlu0 %v1864
    %1866 = vperm.xlu0 %1865, %v1747
    %v1867 = vpop.permute.xlu0 %1866
    %v1868 = vlaneseq
    %v1869 = vshrl.u32 %v1868, 7
    %v1870 = vadd.s32 %v1869, 32
    %1871 = vset.pattern.permute.xlu0 %v1870
    %1872 = vperm.xlu0 %1871, %v1747
    %v1873 = vpop.permute.xlu0 %1872
    %v1874 = vlaneseq
    %v1875 = vshrl.u32 %v1874, 7
    %v1876 = vadd.s32 %v1875, 40
    %1877 = vset.pattern.permute.xlu0 %v1876
    %1878 = vperm.xlu0 %1877, %v1747
    %v1879 = vpop.permute.xlu0 %1878
    %v1880 = vlaneseq
    %v1881 = vshrl.u32 %v1880, 7
    %v1882 = vadd.s32 %v1881, 48
    %1883 = vset.pattern.permute.xlu0 %v1882
    %1884 = vperm.xlu0 %1883, %v1747
    %v1885 = vpop.permute.xlu0 %1884
    %v1886 = vlaneseq
    %v1887 = vshrl.u32 %v1886, 7
    %v1888 = vadd.s32 %v1887, 56
    %1889 = vset.pattern.permute.xlu0 %v1888
    %1890 = vperm.xlu0 %1889, %v1747
    %v1891 = vpop.permute.xlu0 %1890
    %v1892 = vlaneseq
    %v1893 = vshrl.u32 %v1892, 7
    %v1894 = vadd.s32 %v1893, 64
    %1895 = vset.pattern.permute.xlu0 %v1894
    %1896 = vperm.xlu0 %1895, %v1747
    %v1897 = vpop.permute.xlu0 %1896
    %v1898 = vlaneseq
    %v1899 = vshrl.u32 %v1898, 7
    %v1900 = vadd.s32 %v1899, 72
    %1901 = vset.pattern.permute.xlu0 %v1900
    %1902 = vperm.xlu0 %1901, %v1747
    %v1903 = vpop.permute.xlu0 %1902
    %v1904 = vlaneseq
    %v1905 = vshrl.u32 %v1904, 7
    %v1906 = vadd.s32 %v1905, 80
    %1907 = vset.pattern.permute.xlu0 %v1906
    %1908 = vperm.xlu0 %1907, %v1747
    %v1909 = vpop.permute.xlu0 %1908
    %v1910 = vlaneseq
    %v1911 = vshrl.u32 %v1910, 7
    %v1912 = vadd.s32 %v1911, 88
    %1913 = vset.pattern.permute.xlu0 %v1912
    %1914 = vperm.xlu0 %1913, %v1747
    %v1915 = vpop.permute.xlu0 %1914
    %v1916 = vlaneseq
    %v1917 = vshrl.u32 %v1916, 7
    %v1918 = vadd.s32 %v1917, 96
    %1919 = vset.pattern.permute.xlu0 %v1918
    %1920 = vperm.xlu0 %1919, %v1747
    %v1921 = vpop.permute.xlu0 %1920
    %v1922 = vlaneseq
    %v1923 = vshrl.u32 %v1922, 7
    %v1924 = vadd.s32 %v1923, 104
    %1925 = vset.pattern.permute.xlu0 %v1924
    %1926 = vperm.xlu0 %1925, %v1747
    %v1927 = vpop.permute.xlu0 %1926
    %v1928 = vlaneseq
    %v1929 = vshrl.u32 %v1928, 7
    %v1930 = vadd.s32 %v1929, 112
    %1931 = vset.pattern.permute.xlu0 %v1930
    %1932 = vperm.xlu0 %1931, %v1747
    %v1933 = vpop.permute.xlu0 %1932
    %v1934 = vlaneseq
    %v1935 = vshrl.u32 %v1934, 7
    %v1936 = vadd.s32 %v1935, 120
    %1937 = vset.pattern.permute.xlu0 %v1936
    %1938 = vperm.xlu0 %1937, %v1747
    %v1939 = vpop.permute.xlu0 %1938
    %vm1940 = vcmp.eq.s32.totalorder %v735, %v1753
    %vm1941 = vcmp.eq.s32.totalorder %v751, %v1759
    %vm1942 = vcmp.eq.s32.totalorder %v767, %v1765
    %vm1943 = vcmp.eq.s32.totalorder %v783, %v1771
    %vm1944 = vcmp.eq.s32.totalorder %v799, %v1777
    %vm1945 = vcmp.eq.s32.totalorder %v815, %v1783
    %vm1946 = vcmp.eq.s32.totalorder %v831, %v1789
    %vm1947 = vcmp.eq.s32.totalorder %v847, %v1795
    %vm1948 = vcmp.eq.s32.totalorder %v863, %v1801
    %vm1949 = vcmp.eq.s32.totalorder %v879, %v1807
    %vm1950 = vcmp.eq.s32.totalorder %v895, %v1813
    %vm1951 = vcmp.eq.s32.totalorder %v911, %v1819
    %vm1952 = vcmp.eq.s32.totalorder %v927, %v1825
    %vm1953 = vcmp.eq.s32.totalorder %v943, %v1831
    %vm1954 = vcmp.eq.s32.totalorder %v959, %v1837
    %vm1955 = vcmp.eq.s32.totalorder %v975, %v1843
    %vm1956 = vcmp.eq.s32.totalorder %v991, %v1849
    %vm1957 = vcmp.eq.s32.totalorder %v1007, %v1855
    %vm1958 = vcmp.eq.s32.totalorder %v1023, %v1861
    %vm1959 = vcmp.eq.s32.totalorder %v1039, %v1867
    %vm1960 = vcmp.eq.s32.totalorder %v1055, %v1873
    %vm1961 = vcmp.eq.s32.totalorder %v1071, %v1879
    %vm1962 = vcmp.eq.s32.totalorder %v1087, %v1885
    %vm1963 = vcmp.eq.s32.totalorder %v1103, %v1891
    %vm1964 = vcmp.eq.s32.totalorder %v1119, %v1897
    %vm1965 = vcmp.eq.s32.totalorder %v1135, %v1903
    %vm1966 = vcmp.eq.s32.totalorder %v1151, %v1909
    %vm1967 = vcmp.eq.s32.totalorder %v1167, %v1915
    %vm1968 = vcmp.eq.s32.totalorder %v1183, %v1921
    %vm1969 = vcmp.eq.s32.totalorder %v1199, %v1927
    %vm1970 = vcmp.eq.s32.totalorder %v1215, %v1933
    %vm1971 = vcmp.eq.s32.totalorder %v1231, %v1939
    %vm1972 = vcmp.eq.s32.totalorder %v1247, %v1753
    %vm1973 = vcmp.eq.s32.totalorder %v1263, %v1759
    %vm1974 = vcmp.eq.s32.totalorder %v1279, %v1765
    %vm1975 = vcmp.eq.s32.totalorder %v1295, %v1771
    %vm1976 = vcmp.eq.s32.totalorder %v1311, %v1777
    %vm1977 = vcmp.eq.s32.totalorder %v1327, %v1783
    %vm1978 = vcmp.eq.s32.totalorder %v1343, %v1789
    %vm1979 = vcmp.eq.s32.totalorder %v1359, %v1795
    %vm1980 = vcmp.eq.s32.totalorder %v1375, %v1801
    %vm1981 = vcmp.eq.s32.totalorder %v1391, %v1807
    %vm1982 = vcmp.eq.s32.totalorder %v1407, %v1813
    %vm1983 = vcmp.eq.s32.totalorder %v1423, %v1819
    %vm1984 = vcmp.eq.s32.totalorder %v1439, %v1825
    %vm1985 = vcmp.eq.s32.totalorder %v1455, %v1831
    %vm1986 = vcmp.eq.s32.totalorder %v1471, %v1837
    %vm1987 = vcmp.eq.s32.totalorder %v1487, %v1843
    %vm1988 = vcmp.eq.s32.totalorder %v1503, %v1849
    %vm1989 = vcmp.eq.s32.totalorder %v1519, %v1855
    %vm1990 = vcmp.eq.s32.totalorder %v1535, %v1861
    %vm1991 = vcmp.eq.s32.totalorder %v1551, %v1867
    %vm1992 = vcmp.eq.s32.totalorder %v1567, %v1873
    %vm1993 = vcmp.eq.s32.totalorder %v1583, %v1879
    %vm1994 = vcmp.eq.s32.totalorder %v1599, %v1885
    %vm1995 = vcmp.eq.s32.totalorder %v1615, %v1891
    %vm1996 = vcmp.eq.s32.totalorder %v1631, %v1897
    %vm1997 = vcmp.eq.s32.totalorder %v1647, %v1903
    %vm1998 = vcmp.eq.s32.totalorder %v1663, %v1909
    %vm1999 = vcmp.eq.s32.totalorder %v1679, %v1915
    %vm2000 = vcmp.eq.s32.totalorder %v1695, %v1921
    %vm2001 = vcmp.eq.s32.totalorder %v1711, %v1927
    %vm2002 = vcmp.eq.s32.totalorder %v1727, %v1933
    %vm2003 = vcmp.eq.s32.totalorder %v1743, %v1939
    %vm2004 = vcmp.lt.s32.totalorder %v1746, 256
    %vm2005 = vcmp.lt.s32.totalorder %v1747, 256
    %v2006 = vsel %vm2004, 1, 0
    %v2007 = vsel %vm2005, 1, 0
    %v2008 = vlaneseq
    %v2009 = vshrl.u32 %v2008, 7
    %2011 = vset.pattern.permute.xlu0 %v2009
    %2012 = vperm.xlu0 %2011, %v2006
    %v2013 = vpop.permute.xlu0 %2012
    %v2014 = vlaneseq
    %v2015 = vshrl.u32 %v2014, 7
    %v2016 = vadd.s32 %v2015, 8
    %2017 = vset.pattern.permute.xlu0 %v2016
    %2018 = vperm.xlu0 %2017, %v2006
    %v2019 = vpop.permute.xlu0 %2018
    %v2020 = vlaneseq
    %v2021 = vshrl.u32 %v2020, 7
    %v2022 = vadd.s32 %v2021, 16
    %2023 = vset.pattern.permute.xlu0 %v2022
    %2024 = vperm.xlu0 %2023, %v2006
    %v2025 = vpop.permute.xlu0 %2024
    %v2026 = vlaneseq
    %v2027 = vshrl.u32 %v2026, 7
    %v2028 = vadd.s32 %v2027, 24
    %2029 = vset.pattern.permute.xlu0 %v2028
    %2030 = vperm.xlu0 %2029, %v2006
    %v2031 = vpop.permute.xlu0 %2030
    %v2032 = vlaneseq
    %v2033 = vshrl.u32 %v2032, 7
    %v2034 = vadd.s32 %v2033, 32
    %2035 = vset.pattern.permute.xlu0 %v2034
    %2036 = vperm.xlu0 %2035, %v2006
    %v2037 = vpop.permute.xlu0 %2036
    %v2038 = vlaneseq
    %v2039 = vshrl.u32 %v2038, 7
    %v2040 = vadd.s32 %v2039, 40
    %2041 = vset.pattern.permute.xlu0 %v2040
    %2042 = vperm.xlu0 %2041, %v2006
    %v2043 = vpop.permute.xlu0 %2042
    %v2044 = vlaneseq
    %v2045 = vshrl.u32 %v2044, 7
    %v2046 = vadd.s32 %v2045, 48
    %2047 = vset.pattern.permute.xlu0 %v2046
    %2048 = vperm.xlu0 %2047, %v2006
    %v2049 = vpop.permute.xlu0 %2048
    %v2050 = vlaneseq
    %v2051 = vshrl.u32 %v2050, 7
    %v2052 = vadd.s32 %v2051, 56
    %2053 = vset.pattern.permute.xlu0 %v2052
    %2054 = vperm.xlu0 %2053, %v2006
    %v2055 = vpop.permute.xlu0 %2054
    %v2056 = vlaneseq
    %v2057 = vshrl.u32 %v2056, 7
    %v2058 = vadd.s32 %v2057, 64
    %2059 = vset.pattern.permute.xlu0 %v2058
    %2060 = vperm.xlu0 %2059, %v2006
    %v2061 = vpop.permute.xlu0 %2060
    %v2062 = vlaneseq
    %v2063 = vshrl.u32 %v2062, 7
    %v2064 = vadd.s32 %v2063, 72
    %2065 = vset.pattern.permute.xlu0 %v2064
    %2066 = vperm.xlu0 %2065, %v2006
    %v2067 = vpop.permute.xlu0 %2066
    %v2068 = vlaneseq
    %v2069 = vshrl.u32 %v2068, 7
    %v2070 = vadd.s32 %v2069, 80
    %2071 = vset.pattern.permute.xlu0 %v2070
    %2072 = vperm.xlu0 %2071, %v2006
    %v2073 = vpop.permute.xlu0 %2072
    %v2074 = vlaneseq
    %v2075 = vshrl.u32 %v2074, 7
    %v2076 = vadd.s32 %v2075, 88
    %2077 = vset.pattern.permute.xlu0 %v2076
    %2078 = vperm.xlu0 %2077, %v2006
    %v2079 = vpop.permute.xlu0 %2078
    %v2080 = vlaneseq
    %v2081 = vshrl.u32 %v2080, 7
    %v2082 = vadd.s32 %v2081, 96
    %2083 = vset.pattern.permute.xlu0 %v2082
    %2084 = vperm.xlu0 %2083, %v2006
    %v2085 = vpop.permute.xlu0 %2084
    %v2086 = vlaneseq
    %v2087 = vshrl.u32 %v2086, 7
    %v2088 = vadd.s32 %v2087, 104
    %2089 = vset.pattern.permute.xlu0 %v2088
    %2090 = vperm.xlu0 %2089, %v2006
    %v2091 = vpop.permute.xlu0 %2090
    %v2092 = vlaneseq
    %v2093 = vshrl.u32 %v2092, 7
    %v2094 = vadd.s32 %v2093, 112
    %2095 = vset.pattern.permute.xlu0 %v2094
    %2096 = vperm.xlu0 %2095, %v2006
    %v2097 = vpop.permute.xlu0 %2096
    %v2098 = vlaneseq
    %v2099 = vshrl.u32 %v2098, 7
    %v2100 = vadd.s32 %v2099, 120
    %2101 = vset.pattern.permute.xlu0 %v2100
    %2102 = vperm.xlu0 %2101, %v2006
    %v2103 = vpop.permute.xlu0 %2102
    %v2104 = vlaneseq
    %v2105 = vshrl.u32 %v2104, 7
    %2107 = vset.pattern.permute.xlu0 %v2105
    %2108 = vperm.xlu0 %2107, %v2007
    %v2109 = vpop.permute.xlu0 %2108
    %v2110 = vlaneseq
    %v2111 = vshrl.u32 %v2110, 7
    %v2112 = vadd.s32 %v2111, 8
    %2113 = vset.pattern.permute.xlu0 %v2112
    %2114 = vperm.xlu0 %2113, %v2007
    %v2115 = vpop.permute.xlu0 %2114
    %v2116 = vlaneseq
    %v2117 = vshrl.u32 %v2116, 7
    %v2118 = vadd.s32 %v2117, 16
    %2119 = vset.pattern.permute.xlu0 %v2118
    %2120 = vperm.xlu0 %2119, %v2007
    %v2121 = vpop.permute.xlu0 %2120
    %v2122 = vlaneseq
    %v2123 = vshrl.u32 %v2122, 7
    %v2124 = vadd.s32 %v2123, 24
    %2125 = vset.pattern.permute.xlu0 %v2124
    %2126 = vperm.xlu0 %2125, %v2007
    %v2127 = vpop.permute.xlu0 %2126
    %v2128 = vlaneseq
    %v2129 = vshrl.u32 %v2128, 7
    %v2130 = vadd.s32 %v2129, 32
    %2131 = vset.pattern.permute.xlu0 %v2130
    %2132 = vperm.xlu0 %2131, %v2007
    %v2133 = vpop.permute.xlu0 %2132
    %v2134 = vlaneseq
    %v2135 = vshrl.u32 %v2134, 7
    %v2136 = vadd.s32 %v2135, 40
    %2137 = vset.pattern.permute.xlu0 %v2136
    %2138 = vperm.xlu0 %2137, %v2007
    %v2139 = vpop.permute.xlu0 %2138
    %v2140 = vlaneseq
    %v2141 = vshrl.u32 %v2140, 7
    %v2142 = vadd.s32 %v2141, 48
    %2143 = vset.pattern.permute.xlu0 %v2142
    %2144 = vperm.xlu0 %2143, %v2007
    %v2145 = vpop.permute.xlu0 %2144
    %v2146 = vlaneseq
    %v2147 = vshrl.u32 %v2146, 7
    %v2148 = vadd.s32 %v2147, 56
    %2149 = vset.pattern.permute.xlu0 %v2148
    %2150 = vperm.xlu0 %2149, %v2007
    %v2151 = vpop.permute.xlu0 %2150
    %v2152 = vlaneseq
    %v2153 = vshrl.u32 %v2152, 7
    %v2154 = vadd.s32 %v2153, 64
    %2155 = vset.pattern.permute.xlu0 %v2154
    %2156 = vperm.xlu0 %2155, %v2007
    %v2157 = vpop.permute.xlu0 %2156
    %v2158 = vlaneseq
    %v2159 = vshrl.u32 %v2158, 7
    %v2160 = vadd.s32 %v2159, 72
    %2161 = vset.pattern.permute.xlu0 %v2160
    %2162 = vperm.xlu0 %2161, %v2007
    %v2163 = vpop.permute.xlu0 %2162
    %v2164 = vlaneseq
    %v2165 = vshrl.u32 %v2164, 7
    %v2166 = vadd.s32 %v2165, 80
    %2167 = vset.pattern.permute.xlu0 %v2166
    %2168 = vperm.xlu0 %2167, %v2007
    %v2169 = vpop.permute.xlu0 %2168
    %v2170 = vlaneseq
    %v2171 = vshrl.u32 %v2170, 7
    %v2172 = vadd.s32 %v2171, 88
    %2173 = vset.pattern.permute.xlu0 %v2172
    %2174 = vperm.xlu0 %2173, %v2007
    %v2175 = vpop.permute.xlu0 %2174
    %v2176 = vlaneseq
    %v2177 = vshrl.u32 %v2176, 7
    %v2178 = vadd.s32 %v2177, 96
    %2179 = vset.pattern.permute.xlu0 %v2178
    %2180 = vperm.xlu0 %2179, %v2007
    %v2181 = vpop.permute.xlu0 %2180
    %v2182 = vlaneseq
    %v2183 = vshrl.u32 %v2182, 7
    %v2184 = vadd.s32 %v2183, 104
    %2185 = vset.pattern.permute.xlu0 %v2184
    %2186 = vperm.xlu0 %2185, %v2007
    %v2187 = vpop.permute.xlu0 %2186
    %v2188 = vlaneseq
    %v2189 = vshrl.u32 %v2188, 7
    %v2190 = vadd.s32 %v2189, 112
    %2191 = vset.pattern.permute.xlu0 %v2190
    %2192 = vperm.xlu0 %2191, %v2007
    %v2193 = vpop.permute.xlu0 %2192
    %v2194 = vlaneseq
    %v2195 = vshrl.u32 %v2194, 7
    %v2196 = vadd.s32 %v2195, 120
    %2197 = vset.pattern.permute.xlu0 %v2196
    %2198 = vperm.xlu0 %2197, %v2007
    %v2199 = vpop.permute.xlu0 %2198
    %vm2200 = vcmp.ne.s32.totalorder %v2013, 0
    %vm2201 = vcmp.ne.s32.totalorder %v2019, 0
    %vm2202 = vcmp.ne.s32.totalorder %v2025, 0
    %vm2203 = vcmp.ne.s32.totalorder %v2031, 0
    %vm2204 = vcmp.ne.s32.totalorder %v2037, 0
    %vm2205 = vcmp.ne.s32.totalorder %v2043, 0
    %vm2206 = vcmp.ne.s32.totalorder %v2049, 0
    %vm2207 = vcmp.ne.s32.totalorder %v2055, 0
    %vm2208 = vcmp.ne.s32.totalorder %v2061, 0
    %vm2209 = vcmp.ne.s32.totalorder %v2067, 0
    %vm2210 = vcmp.ne.s32.totalorder %v2073, 0
    %vm2211 = vcmp.ne.s32.totalorder %v2079, 0
    %vm2212 = vcmp.ne.s32.totalorder %v2085, 0
    %vm2213 = vcmp.ne.s32.totalorder %v2091, 0
    %vm2214 = vcmp.ne.s32.totalorder %v2097, 0
    %vm2215 = vcmp.ne.s32.totalorder %v2103, 0
    %vm2216 = vcmp.ne.s32.totalorder %v2109, 0
    %vm2217 = vcmp.ne.s32.totalorder %v2115, 0
    %vm2218 = vcmp.ne.s32.totalorder %v2121, 0
    %vm2219 = vcmp.ne.s32.totalorder %v2127, 0
    %vm2220 = vcmp.ne.s32.totalorder %v2133, 0
    %vm2221 = vcmp.ne.s32.totalorder %v2139, 0
    %vm2222 = vcmp.ne.s32.totalorder %v2145, 0
    %vm2223 = vcmp.ne.s32.totalorder %v2151, 0
    %vm2224 = vcmp.ne.s32.totalorder %v2157, 0
    %vm2225 = vcmp.ne.s32.totalorder %v2163, 0
    %vm2226 = vcmp.ne.s32.totalorder %v2169, 0
    %vm2227 = vcmp.ne.s32.totalorder %v2175, 0
    %vm2228 = vcmp.ne.s32.totalorder %v2181, 0
    %vm2229 = vcmp.ne.s32.totalorder %v2187, 0
    %vm2230 = vcmp.ne.s32.totalorder %v2193, 0
    %vm2231 = vcmp.ne.s32.totalorder %v2199, 0
    %vm2232 = vmand %vm1940, %vm2200
    %vm2233 = vmand %vm1941, %vm2201
    %vm2234 = vmand %vm1942, %vm2202
    %vm2235 = vmand %vm1943, %vm2203
    %vm2236 = vmand %vm1944, %vm2204
    %vm2237 = vmand %vm1945, %vm2205
    %vm2238 = vmand %vm1946, %vm2206
    %vm2239 = vmand %vm1947, %vm2207
    %vm2240 = vmand %vm1948, %vm2208
    %vm2241 = vmand %vm1949, %vm2209
    %vm2242 = vmand %vm1950, %vm2210
    %vm2243 = vmand %vm1951, %vm2211
    %vm2244 = vmand %vm1952, %vm2212
    %vm2245 = vmand %vm1953, %vm2213
    %vm2246 = vmand %vm1954, %vm2214
    %vm2247 = vmand %vm1955, %vm2215
    %vm2248 = vmand %vm1956, %vm2216
    %vm2249 = vmand %vm1957, %vm2217
    %vm2250 = vmand %vm1958, %vm2218
    %vm2251 = vmand %vm1959, %vm2219
    %vm2252 = vmand %vm1960, %vm2220
    %vm2253 = vmand %vm1961, %vm2221
    %vm2254 = vmand %vm1962, %vm2222
    %vm2255 = vmand %vm1963, %vm2223
    %vm2256 = vmand %vm1964, %vm2224
    %vm2257 = vmand %vm1965, %vm2225
    %vm2258 = vmand %vm1966, %vm2226
    %vm2259 = vmand %vm1967, %vm2227
    %vm2260 = vmand %vm1968, %vm2228
    %vm2261 = vmand %vm1969, %vm2229
    %vm2262 = vmand %vm1970, %vm2230
    %vm2263 = vmand %vm1971, %vm2231
    %vm2264 = vmand %vm1972, %vm2200
    %vm2265 = vmand %vm1973, %vm2201
    %vm2266 = vmand %vm1974, %vm2202
    %vm2267 = vmand %vm1975, %vm2203
    %vm2268 = vmand %vm1976, %vm2204
    %vm2269 = vmand %vm1977, %vm2205
    %vm2270 = vmand %vm1978, %vm2206
    %vm2271 = vmand %vm1979, %vm2207
    %vm2272 = vmand %vm1980, %vm2208
    %vm2273 = vmand %vm1981, %vm2209
    %vm2274 = vmand %vm1982, %vm2210
    %vm2275 = vmand %vm1983, %vm2211
    %vm2276 = vmand %vm1984, %vm2212
    %vm2277 = vmand %vm1985, %vm2213
    %vm2278 = vmand %vm1986, %vm2214
    %vm2279 = vmand %vm1987, %vm2215
    %vm2280 = vmand %vm1988, %vm2216
    %vm2281 = vmand %vm1989, %vm2217
    %vm2282 = vmand %vm1990, %vm2218
    %vm2283 = vmand %vm1991, %vm2219
    %vm2284 = vmand %vm1992, %vm2220
    %vm2285 = vmand %vm1993, %vm2221
    %vm2286 = vmand %vm1994, %vm2222
    %vm2287 = vmand %vm1995, %vm2223
    %vm2288 = vmand %vm1996, %vm2224
    %vm2289 = vmand %vm1997, %vm2225
    %vm2290 = vmand %vm1998, %vm2226
    %vm2291 = vmand %vm1999, %vm2227
    %vm2292 = vmand %vm2000, %vm2228
    %vm2293 = vmand %vm2001, %vm2229
    %vm2294 = vmand %vm2002, %vm2230
    %vm2295 = vmand %vm2003, %vm2231
    %v2296 = vsel %vm2232, 1, 0
    %v2297 = vsel %vm2233, 1, 0
    %v2298 = vsel %vm2234, 1, 0
    %v2299 = vsel %vm2235, 1, 0
    %v2300 = vsel %vm2236, 1, 0
    %v2301 = vsel %vm2237, 1, 0
    %v2302 = vsel %vm2238, 1, 0
    %v2303 = vsel %vm2239, 1, 0
    %v2304 = vsel %vm2240, 1, 0
    %v2305 = vsel %vm2241, 1, 0
    %v2306 = vsel %vm2242, 1, 0
    %v2307 = vsel %vm2243, 1, 0
    %v2308 = vsel %vm2244, 1, 0
    %v2309 = vsel %vm2245, 1, 0
    %v2310 = vsel %vm2246, 1, 0
    %v2311 = vsel %vm2247, 1, 0
    %v2312 = vsel %vm2248, 1, 0
    %v2313 = vsel %vm2249, 1, 0
    %v2314 = vsel %vm2250, 1, 0
    %v2315 = vsel %vm2251, 1, 0
    %v2316 = vsel %vm2252, 1, 0
    %v2317 = vsel %vm2253, 1, 0
    %v2318 = vsel %vm2254, 1, 0
    %v2319 = vsel %vm2255, 1, 0
    %v2320 = vsel %vm2256, 1, 0
    %v2321 = vsel %vm2257, 1, 0
    %v2322 = vsel %vm2258, 1, 0
    %v2323 = vsel %vm2259, 1, 0
    %v2324 = vsel %vm2260, 1, 0
    %v2325 = vsel %vm2261, 1, 0
    %v2326 = vsel %vm2262, 1, 0
    %v2327 = vsel %vm2263, 1, 0
    %v2328 = vsel %vm2264, 1, 0
    %v2329 = vsel %vm2265, 1, 0
    %v2330 = vsel %vm2266, 1, 0
    %v2331 = vsel %vm2267, 1, 0
    %v2332 = vsel %vm2268, 1, 0
    %v2333 = vsel %vm2269, 1, 0
    %v2334 = vsel %vm2270, 1, 0
    %v2335 = vsel %vm2271, 1, 0
    %v2336 = vsel %vm2272, 1, 0
    %v2337 = vsel %vm2273, 1, 0
    %v2338 = vsel %vm2274, 1, 0
    %v2339 = vsel %vm2275, 1, 0
    %v2340 = vsel %vm2276, 1, 0
    %v2341 = vsel %vm2277, 1, 0
    %v2342 = vsel %vm2278, 1, 0
    %v2343 = vsel %vm2279, 1, 0
    %v2344 = vsel %vm2280, 1, 0
    %v2345 = vsel %vm2281, 1, 0
    %v2346 = vsel %vm2282, 1, 0
    %v2347 = vsel %vm2283, 1, 0
    %v2348 = vsel %vm2284, 1, 0
    %v2349 = vsel %vm2285, 1, 0
    %v2350 = vsel %vm2286, 1, 0
    %v2351 = vsel %vm2287, 1, 0
    %v2352 = vsel %vm2288, 1, 0
    %v2353 = vsel %vm2289, 1, 0
    %v2354 = vsel %vm2290, 1, 0
    %v2355 = vsel %vm2291, 1, 0
    %v2356 = vsel %vm2292, 1, 0
    %v2357 = vsel %vm2293, 1, 0
    %v2358 = vsel %vm2294, 1, 0
    %v2359 = vsel %vm2295, 1, 0
    %v2360 = vlaneseq
    %v2361 = vshrl.u32 %v2360, 7
    %v2362 = vadd.s32 %v2361, 8
    %v2363 = vadd.s32 %v2361, 16
    %v2364 = vadd.s32 %v2361, 24
    %v2365 = vadd.s32 %v2361, 32
    %v2366 = vadd.s32 %v2361, 40
    %v2367 = vadd.s32 %v2361, 48
    %v2368 = vadd.s32 %v2361, 56
    %v2369 = vadd.s32 %v2361, 64
    %v2370 = vadd.s32 %v2361, 72
    %v2371 = vadd.s32 %v2361, 80
    %v2372 = vadd.s32 %v2361, 88
    %v2373 = vadd.s32 %v2361, 96
    %v2374 = vadd.s32 %v2361, 104
    %v2375 = vadd.s32 %v2361, 112
    %v2376 = vadd.s32 %v2361, 120
    %v2377 = vadd.s32 %v2361, 128
    %v2378 = vadd.s32 %v2361, 136
    %v2379 = vadd.s32 %v2361, 144
    %v2380 = vadd.s32 %v2361, 152
    %v2381 = vadd.s32 %v2361, 160
    %v2382 = vadd.s32 %v2361, 168
    %v2383 = vadd.s32 %v2361, 176
    %v2384 = vadd.s32 %v2361, 184
    %v2385 = vadd.s32 %v2361, 192
    %v2386 = vadd.s32 %v2361, 200
    %v2387 = vadd.s32 %v2361, 208
    %v2388 = vadd.s32 %v2361, 216
    %v2389 = vadd.s32 %v2361, 224
    %v2390 = vadd.s32 %v2361, 232
    %v2391 = vadd.s32 %v2361, 240
    %v2392 = vadd.s32 %v2361, 248
    %vm2393 = vcmp.lt.s32.totalorder %v51, %v2361
    %vm2394 = vcmp.lt.s32.totalorder %v52, %v2361
    %vm2395 = vcmp.lt.s32.totalorder %v51, %v2362
    %vm2396 = vcmp.lt.s32.totalorder %v52, %v2362
    %vm2397 = vcmp.lt.s32.totalorder %v51, %v2363
    %vm2398 = vcmp.lt.s32.totalorder %v52, %v2363
    %vm2399 = vcmp.lt.s32.totalorder %v51, %v2364
    %vm2400 = vcmp.lt.s32.totalorder %v52, %v2364
    %vm2401 = vcmp.lt.s32.totalorder %v51, %v2365
    %vm2402 = vcmp.lt.s32.totalorder %v52, %v2365
    %vm2403 = vcmp.lt.s32.totalorder %v51, %v2366
    %vm2404 = vcmp.lt.s32.totalorder %v52, %v2366
    %vm2405 = vcmp.lt.s32.totalorder %v51, %v2367
    %vm2406 = vcmp.lt.s32.totalorder %v52, %v2367
    %vm2407 = vcmp.lt.s32.totalorder %v51, %v2368
    %vm2408 = vcmp.lt.s32.totalorder %v52, %v2368
    %vm2409 = vcmp.lt.s32.totalorder %v51, %v2369
    %vm2410 = vcmp.lt.s32.totalorder %v52, %v2369
    %vm2411 = vcmp.lt.s32.totalorder %v51, %v2370
    %vm2412 = vcmp.lt.s32.totalorder %v52, %v2370
    %vm2413 = vcmp.lt.s32.totalorder %v51, %v2371
    %vm2414 = vcmp.lt.s32.totalorder %v52, %v2371
    %vm2415 = vcmp.lt.s32.totalorder %v51, %v2372
    %vm2416 = vcmp.lt.s32.totalorder %v52, %v2372
    %vm2417 = vcmp.lt.s32.totalorder %v51, %v2373
    %vm2418 = vcmp.lt.s32.totalorder %v52, %v2373
    %vm2419 = vcmp.lt.s32.totalorder %v51, %v2374
    %vm2420 = vcmp.lt.s32.totalorder %v52, %v2374
    %vm2421 = vcmp.lt.s32.totalorder %v51, %v2375
    %vm2422 = vcmp.lt.s32.totalorder %v52, %v2375
    %vm2423 = vcmp.lt.s32.totalorder %v51, %v2376
    %vm2424 = vcmp.lt.s32.totalorder %v52, %v2376
    %vm2425 = vcmp.lt.s32.totalorder %v51, %v2377
    %vm2426 = vcmp.lt.s32.totalorder %v52, %v2377
    %vm2427 = vcmp.lt.s32.totalorder %v51, %v2378
    %vm2428 = vcmp.lt.s32.totalorder %v52, %v2378
    %vm2429 = vcmp.lt.s32.totalorder %v51, %v2379
    %vm2430 = vcmp.lt.s32.totalorder %v52, %v2379
    %vm2431 = vcmp.lt.s32.totalorder %v51, %v2380
    %vm2432 = vcmp.lt.s32.totalorder %v52, %v2380
    %vm2433 = vcmp.lt.s32.totalorder %v51, %v2381
    %vm2434 = vcmp.lt.s32.totalorder %v52, %v2381
    %vm2435 = vcmp.lt.s32.totalorder %v51, %v2382
    %vm2436 = vcmp.lt.s32.totalorder %v52, %v2382
    %vm2437 = vcmp.lt.s32.totalorder %v51, %v2383
    %vm2438 = vcmp.lt.s32.totalorder %v52, %v2383
    %vm2439 = vcmp.lt.s32.totalorder %v51, %v2384
    %vm2440 = vcmp.lt.s32.totalorder %v52, %v2384
    %vm2441 = vcmp.lt.s32.totalorder %v51, %v2385
    %vm2442 = vcmp.lt.s32.totalorder %v52, %v2385
    %vm2443 = vcmp.lt.s32.totalorder %v51, %v2386
    %vm2444 = vcmp.lt.s32.totalorder %v52, %v2386
    %vm2445 = vcmp.lt.s32.totalorder %v51, %v2387
    %vm2446 = vcmp.lt.s32.totalorder %v52, %v2387
    %vm2447 = vcmp.lt.s32.totalorder %v51, %v2388
    %vm2448 = vcmp.lt.s32.totalorder %v52, %v2388
    %vm2449 = vcmp.lt.s32.totalorder %v51, %v2389
    %vm2450 = vcmp.lt.s32.totalorder %v52, %v2389
    %vm2451 = vcmp.lt.s32.totalorder %v51, %v2390
    %vm2452 = vcmp.lt.s32.totalorder %v52, %v2390
    %vm2453 = vcmp.lt.s32.totalorder %v51, %v2391
    %vm2454 = vcmp.lt.s32.totalorder %v52, %v2391
    %vm2455 = vcmp.lt.s32.totalorder %v51, %v2392
    %vm2456 = vcmp.lt.s32.totalorder %v52, %v2392
    %2457 = vset.pattern.permute.xlu0 0
    %2458 = vperm.xlu0 %2457, %v2296
    %v2459 = vpop.permute.xlu0 %2458
    %2460 = vset.pattern.permute.xlu0 0
    %2461 = vperm.xlu0 %2460, %v2297
    %v2462 = vpop.permute.xlu0 %2461
    %2463 = vset.pattern.permute.xlu0 0
    %2464 = vperm.xlu0 %2463, %v2298
    %v2465 = vpop.permute.xlu0 %2464
    %2466 = vset.pattern.permute.xlu0 0
    %2467 = vperm.xlu0 %2466, %v2299
    %v2468 = vpop.permute.xlu0 %2467
    %2469 = vset.pattern.permute.xlu0 0
    %2470 = vperm.xlu0 %2469, %v2300
    %v2471 = vpop.permute.xlu0 %2470
    %2472 = vset.pattern.permute.xlu0 0
    %2473 = vperm.xlu0 %2472, %v2301
    %v2474 = vpop.permute.xlu0 %2473
    %2475 = vset.pattern.permute.xlu0 0
    %2476 = vperm.xlu0 %2475, %v2302
    %v2477 = vpop.permute.xlu0 %2476
    %2478 = vset.pattern.permute.xlu0 0
    %2479 = vperm.xlu0 %2478, %v2303
    %v2480 = vpop.permute.xlu0 %2479
    %2481 = vset.pattern.permute.xlu0 0
    %2482 = vperm.xlu0 %2481, %v2304
    %v2483 = vpop.permute.xlu0 %2482
    %2484 = vset.pattern.permute.xlu0 0
    %2485 = vperm.xlu0 %2484, %v2305
    %v2486 = vpop.permute.xlu0 %2485
    %2487 = vset.pattern.permute.xlu0 0
    %2488 = vperm.xlu0 %2487, %v2306
    %v2489 = vpop.permute.xlu0 %2488
    %2490 = vset.pattern.permute.xlu0 0
    %2491 = vperm.xlu0 %2490, %v2307
    %v2492 = vpop.permute.xlu0 %2491
    %2493 = vset.pattern.permute.xlu0 0
    %2494 = vperm.xlu0 %2493, %v2308
    %v2495 = vpop.permute.xlu0 %2494
    %2496 = vset.pattern.permute.xlu0 0
    %2497 = vperm.xlu0 %2496, %v2309
    %v2498 = vpop.permute.xlu0 %2497
    %2499 = vset.pattern.permute.xlu0 0
    %2500 = vperm.xlu0 %2499, %v2310
    %v2501 = vpop.permute.xlu0 %2500
    %2502 = vset.pattern.permute.xlu0 0
    %2503 = vperm.xlu0 %2502, %v2311
    %v2504 = vpop.permute.xlu0 %2503
    %2505 = vset.pattern.permute.xlu0 0
    %2506 = vperm.xlu0 %2505, %v2312
    %v2507 = vpop.permute.xlu0 %2506
    %2508 = vset.pattern.permute.xlu0 0
    %2509 = vperm.xlu0 %2508, %v2313
    %v2510 = vpop.permute.xlu0 %2509
    %2511 = vset.pattern.permute.xlu0 0
    %2512 = vperm.xlu0 %2511, %v2314
    %v2513 = vpop.permute.xlu0 %2512
    %2514 = vset.pattern.permute.xlu0 0
    %2515 = vperm.xlu0 %2514, %v2315
    %v2516 = vpop.permute.xlu0 %2515
    %2517 = vset.pattern.permute.xlu0 0
    %2518 = vperm.xlu0 %2517, %v2316
    %v2519 = vpop.permute.xlu0 %2518
    %2520 = vset.pattern.permute.xlu0 0
    %2521 = vperm.xlu0 %2520, %v2317
    %v2522 = vpop.permute.xlu0 %2521
    %2523 = vset.pattern.permute.xlu0 0
    %2524 = vperm.xlu0 %2523, %v2318
    %v2525 = vpop.permute.xlu0 %2524
    %2526 = vset.pattern.permute.xlu0 0
    %2527 = vperm.xlu0 %2526, %v2319
    %v2528 = vpop.permute.xlu0 %2527
    %2529 = vset.pattern.permute.xlu0 0
    %2530 = vperm.xlu0 %2529, %v2320
    %v2531 = vpop.permute.xlu0 %2530
    %2532 = vset.pattern.permute.xlu0 0
    %2533 = vperm.xlu0 %2532, %v2321
    %v2534 = vpop.permute.xlu0 %2533
    %2535 = vset.pattern.permute.xlu0 0
    %2536 = vperm.xlu0 %2535, %v2322
    %v2537 = vpop.permute.xlu0 %2536
    %2538 = vset.pattern.permute.xlu0 0
    %2539 = vperm.xlu0 %2538, %v2323
    %v2540 = vpop.permute.xlu0 %2539
    %2541 = vset.pattern.permute.xlu0 0
    %2542 = vperm.xlu0 %2541, %v2324
    %v2543 = vpop.permute.xlu0 %2542
    %2544 = vset.pattern.permute.xlu0 0
    %2545 = vperm.xlu0 %2544, %v2325
    %v2546 = vpop.permute.xlu0 %2545
    %2547 = vset.pattern.permute.xlu0 0
    %2548 = vperm.xlu0 %2547, %v2326
    %v2549 = vpop.permute.xlu0 %2548
    %2550 = vset.pattern.permute.xlu0 0
    %2551 = vperm.xlu0 %2550, %v2327
    %v2552 = vpop.permute.xlu0 %2551
    %2553 = vset.pattern.permute.xlu0 0
    %2554 = vperm.xlu0 %2553, %v2328
    %v2555 = vpop.permute.xlu0 %2554
    %2556 = vset.pattern.permute.xlu0 0
    %2557 = vperm.xlu0 %2556, %v2329
    %v2558 = vpop.permute.xlu0 %2557
    %2559 = vset.pattern.permute.xlu0 0
    %2560 = vperm.xlu0 %2559, %v2330
    %v2561 = vpop.permute.xlu0 %2560
    %2562 = vset.pattern.permute.xlu0 0
    %2563 = vperm.xlu0 %2562, %v2331
    %v2564 = vpop.permute.xlu0 %2563
    %2565 = vset.pattern.permute.xlu0 0
    %2566 = vperm.xlu0 %2565, %v2332
    %v2567 = vpop.permute.xlu0 %2566
    %2568 = vset.pattern.permute.xlu0 0
    %2569 = vperm.xlu0 %2568, %v2333
    %v2570 = vpop.permute.xlu0 %2569
    %2571 = vset.pattern.permute.xlu0 0
    %2572 = vperm.xlu0 %2571, %v2334
    %v2573 = vpop.permute.xlu0 %2572
    %2574 = vset.pattern.permute.xlu0 0
    %2575 = vperm.xlu0 %2574, %v2335
    %v2576 = vpop.permute.xlu0 %2575
    %2577 = vset.pattern.permute.xlu0 0
    %2578 = vperm.xlu0 %2577, %v2336
    %v2579 = vpop.permute.xlu0 %2578
    %2580 = vset.pattern.permute.xlu0 0
    %2581 = vperm.xlu0 %2580, %v2337
    %v2582 = vpop.permute.xlu0 %2581
    %2583 = vset.pattern.permute.xlu0 0
    %2584 = vperm.xlu0 %2583, %v2338
    %v2585 = vpop.permute.xlu0 %2584
    %2586 = vset.pattern.permute.xlu0 0
    %2587 = vperm.xlu0 %2586, %v2339
    %v2588 = vpop.permute.xlu0 %2587
    %2589 = vset.pattern.permute.xlu0 0
    %2590 = vperm.xlu0 %2589, %v2340
    %v2591 = vpop.permute.xlu0 %2590
    %2592 = vset.pattern.permute.xlu0 0
    %2593 = vperm.xlu0 %2592, %v2341
    %v2594 = vpop.permute.xlu0 %2593
    %2595 = vset.pattern.permute.xlu0 0
    %2596 = vperm.xlu0 %2595, %v2342
    %v2597 = vpop.permute.xlu0 %2596
    %2598 = vset.pattern.permute.xlu0 0
    %2599 = vperm.xlu0 %2598, %v2343
    %v2600 = vpop.permute.xlu0 %2599
    %2601 = vset.pattern.permute.xlu0 0
    %2602 = vperm.xlu0 %2601, %v2344
    %v2603 = vpop.permute.xlu0 %2602
    %2604 = vset.pattern.permute.xlu0 0
    %2605 = vperm.xlu0 %2604, %v2345
    %v2606 = vpop.permute.xlu0 %2605
    %2607 = vset.pattern.permute.xlu0 0
    %2608 = vperm.xlu0 %2607, %v2346
    %v2609 = vpop.permute.xlu0 %2608
    %2610 = vset.pattern.permute.xlu0 0
    %2611 = vperm.xlu0 %2610, %v2347
    %v2612 = vpop.permute.xlu0 %2611
    %2613 = vset.pattern.permute.xlu0 0
    %2614 = vperm.xlu0 %2613, %v2348
    %v2615 = vpop.permute.xlu0 %2614
    %2616 = vset.pattern.permute.xlu0 0
    %2617 = vperm.xlu0 %2616, %v2349
    %v2618 = vpop.permute.xlu0 %2617
    %2619 = vset.pattern.permute.xlu0 0
    %2620 = vperm.xlu0 %2619, %v2350
    %v2621 = vpop.permute.xlu0 %2620
    %2622 = vset.pattern.permute.xlu0 0
    %2623 = vperm.xlu0 %2622, %v2351
    %v2624 = vpop.permute.xlu0 %2623
    %2625 = vset.pattern.permute.xlu0 0
    %2626 = vperm.xlu0 %2625, %v2352
    %v2627 = vpop.permute.xlu0 %2626
    %2628 = vset.pattern.permute.xlu0 0
    %2629 = vperm.xlu0 %2628, %v2353
    %v2630 = vpop.permute.xlu0 %2629
    %2631 = vset.pattern.permute.xlu0 0
    %2632 = vperm.xlu0 %2631, %v2354
    %v2633 = vpop.permute.xlu0 %2632
    %2634 = vset.pattern.permute.xlu0 0
    %2635 = vperm.xlu0 %2634, %v2355
    %v2636 = vpop.permute.xlu0 %2635
    %2637 = vset.pattern.permute.xlu0 0
    %2638 = vperm.xlu0 %2637, %v2356
    %v2639 = vpop.permute.xlu0 %2638
    %2640 = vset.pattern.permute.xlu0 0
    %2641 = vperm.xlu0 %2640, %v2357
    %v2642 = vpop.permute.xlu0 %2641
    %2643 = vset.pattern.permute.xlu0 0
    %2644 = vperm.xlu0 %2643, %v2358
    %v2645 = vpop.permute.xlu0 %2644
    %2646 = vset.pattern.permute.xlu0 0
    %2647 = vperm.xlu0 %2646, %v2359
    %v2648 = vpop.permute.xlu0 %2647
    %v2649 = vperm.slane %v2459, %v51
    %v2650 = vadd.s32 %v51, 4294967288
    %v2651 = vperm.slane %v2462, %v2650
    %vm2652 = vcmask 130112
    %v2653 = vsel %vm2652, %v2651, %v2649
    %v2654 = vadd.s32 %v51, 4294967280
    %v2655 = vperm.slane %v2465, %v2654
    %vm2656 = vcmask 195712
    %v2657 = vsel %vm2656, %v2655, %v2653
    %v2658 = vadd.s32 %v51, 4294967272
    %v2659 = vperm.slane %v2468, %v2658
    %vm2660 = vcmask 261312
    %v2661 = vsel %vm2660, %v2659, %v2657
    %v2662 = vadd.s32 %v51, 4294967264
    %v2663 = vperm.slane %v2471, %v2662
    %vm2664 = vcmask 326912
    %v2665 = vsel %vm2664, %v2663, %v2661
    %v2666 = vadd.s32 %v51, 4294967256
    %v2667 = vperm.slane %v2474, %v2666
    %vm2668 = vcmask 392512
    %v2669 = vsel %vm2668, %v2667, %v2665
    %v2670 = vadd.s32 %v51, 4294967248
    %v2671 = vperm.slane %v2477, %v2670
    %vm2672 = vcmask 458112
    %v2673 = vsel %vm2672, %v2671, %v2669
    %v2674 = vadd.s32 %v51, 4294967240
    %v2675 = vperm.slane %v2480, %v2674
    %vm2676 = vcmask 523712
    %v2677 = vsel %vm2676, %v2675, %v2673
    %v2678 = vadd.s32 %v51, 4294967232
    %v2679 = vperm.slane %v2483, %v2678
    %vm2680 = vcmask 589312
    %v2681 = vsel %vm2680, %v2679, %v2677
    %v2682 = vadd.s32 %v51, 4294967224
    %v2683 = vperm.slane %v2486, %v2682
    %vm2684 = vcmask 654912
    %v2685 = vsel %vm2684, %v2683, %v2681
    %v2686 = vadd.s32 %v51, 4294967216
    %v2687 = vperm.slane %v2489, %v2686
    %vm2688 = vcmask 720512
    %v2689 = vsel %vm2688, %v2687, %v2685
    %v2690 = vadd.s32 %v51, 4294967208
    %v2691 = vperm.slane %v2492, %v2690
    %vm2692 = vcmask 786112
    %v2693 = vsel %vm2692, %v2691, %v2689
    %v2694 = vadd.s32 %v51, 4294967200
    %v2695 = vperm.slane %v2495, %v2694
    %vm2696 = vcmask 851712
    %v2697 = vsel %vm2696, %v2695, %v2693
    %v2698 = vadd.s32 %v51, 4294967192
    %v2699 = vperm.slane %v2498, %v2698
    %vm2700 = vcmask 917312
    %v2701 = vsel %vm2700, %v2699, %v2697
    %v2702 = vadd.s32 %v51, 4294967184
    %v2703 = vperm.slane %v2501, %v2702
    %vm2704 = vcmask 982912
    %v2705 = vsel %vm2704, %v2703, %v2701
    %v2706 = vadd.s32 %v51, 4294967176
    %v2707 = vperm.slane %v2504, %v2706
    %vm2708 = vcmask 1048512
    %v2709 = vsel %vm2708, %v2707, %v2705
    %v2710 = vperm.slane %v2507, %v51
    %v2711 = vperm.slane %v2510, %v2650
    %v2712 = vsel %vm2652, %v2711, %v2710
    %v2713 = vperm.slane %v2513, %v2654
    %v2714 = vsel %vm2656, %v2713, %v2712
    %v2715 = vperm.slane %v2516, %v2658
    %v2716 = vsel %vm2660, %v2715, %v2714
    %v2717 = vperm.slane %v2519, %v2662
    %v2718 = vsel %vm2664, %v2717, %v2716
    %v2719 = vperm.slane %v2522, %v2666
    %v2720 = vsel %vm2668, %v2719, %v2718
    %v2721 = vperm.slane %v2525, %v2670
    %v2722 = vsel %vm2672, %v2721, %v2720
    %v2723 = vperm.slane %v2528, %v2674
    %v2724 = vsel %vm2676, %v2723, %v2722
    %v2725 = vperm.slane %v2531, %v2678
    %v2726 = vsel %vm2680, %v2725, %v2724
    %v2727 = vperm.slane %v2534, %v2682
    %v2728 = vsel %vm2684, %v2727, %v2726
    %v2729 = vperm.slane %v2537, %v2686
    %v2730 = vsel %vm2688, %v2729, %v2728
    %v2731 = vperm.slane %v2540, %v2690
    %v2732 = vsel %vm2692, %v2731, %v2730
    %v2733 = vperm.slane %v2543, %v2694
    %v2734 = vsel %vm2696, %v2733, %v2732
    %v2735 = vperm.slane %v2546, %v2698
    %v2736 = vsel %vm2700, %v2735, %v2734
    %v2737 = vperm.slane %v2549, %v2702
    %v2738 = vsel %vm2704, %v2737, %v2736
    %v2739 = vperm.slane %v2552, %v2706
    %v2740 = vsel %vm2708, %v2739, %v2738
    %v2741 = vperm.slane %v2555, %v51
    %v2742 = vperm.slane %v2558, %v2650
    %v2743 = vsel %vm2652, %v2742, %v2741
    %v2744 = vperm.slane %v2561, %v2654
    %v2745 = vsel %vm2656, %v2744, %v2743
    %v2746 = vperm.slane %v2564, %v2658
    %v2747 = vsel %vm2660, %v2746, %v2745
    %v2748 = vperm.slane %v2567, %v2662
    %v2749 = vsel %vm2664, %v2748, %v2747
    %v2750 = vperm.slane %v2570, %v2666
    %v2751 = vsel %vm2668, %v2750, %v2749
    %v2752 = vperm.slane %v2573, %v2670
    %v2753 = vsel %vm2672, %v2752, %v2751
    %v2754 = vperm.slane %v2576, %v2674
    %v2755 = vsel %vm2676, %v2754, %v2753
    %v2756 = vperm.slane %v2579, %v2678
    %v2757 = vsel %vm2680, %v2756, %v2755
    %v2758 = vperm.slane %v2582, %v2682
    %v2759 = vsel %vm2684, %v2758, %v2757
    %v2760 = vperm.slane %v2585, %v2686
    %v2761 = vsel %vm2688, %v2760, %v2759
    %v2762 = vperm.slane %v2588, %v2690
    %v2763 = vsel %vm2692, %v2762, %v2761
    %v2764 = vperm.slane %v2591, %v2694
    %v2765 = vsel %vm2696, %v2764, %v2763
    %v2766 = vperm.slane %v2594, %v2698
    %v2767 = vsel %vm2700, %v2766, %v2765
    %v2768 = vperm.slane %v2597, %v2702
    %v2769 = vsel %vm2704, %v2768, %v2767
    %v2770 = vperm.slane %v2600, %v2706
    %v2771 = vsel %vm2708, %v2770, %v2769
    %v2772 = vperm.slane %v2603, %v51
    %v2773 = vperm.slane %v2606, %v2650
    %v2774 = vsel %vm2652, %v2773, %v2772
    %v2775 = vperm.slane %v2609, %v2654
    %v2776 = vsel %vm2656, %v2775, %v2774
    %v2777 = vperm.slane %v2612, %v2658
    %v2778 = vsel %vm2660, %v2777, %v2776
    %v2779 = vperm.slane %v2615, %v2662
    %v2780 = vsel %vm2664, %v2779, %v2778
    %v2781 = vperm.slane %v2618, %v2666
    %v2782 = vsel %vm2668, %v2781, %v2780
    %v2783 = vperm.slane %v2621, %v2670
    %v2784 = vsel %vm2672, %v2783, %v2782
    %v2785 = vperm.slane %v2624, %v2674
    %v2786 = vsel %vm2676, %v2785, %v2784
    %v2787 = vperm.slane %v2627, %v2678
    %v2788 = vsel %vm2680, %v2787, %v2786
    %v2789 = vperm.slane %v2630, %v2682
    %v2790 = vsel %vm2684, %v2789, %v2788
    %v2791 = vperm.slane %v2633, %v2686
    %v2792 = vsel %vm2688, %v2791, %v2790
    %v2793 = vperm.slane %v2636, %v2690
    %v2794 = vsel %vm2692, %v2793, %v2792
    %v2795 = vperm.slane %v2639, %v2694
    %v2796 = vsel %vm2696, %v2795, %v2794
    %v2797 = vperm.slane %v2642, %v2698
    %v2798 = vsel %vm2700, %v2797, %v2796
    %v2799 = vperm.slane %v2645, %v2702
    %v2800 = vsel %vm2704, %v2799, %v2798
    %v2801 = vperm.slane %v2648, %v2706
    %v2802 = vsel %vm2708, %v2801, %v2800
    %v2803 = vsel %vm449, %v2709, %v2709
    %v2804 = vsel %vm455, %v2709, %v2803
    %vm2805 = vcmask 1044484
    %v2806 = vsel %vm2805, %v2709, %v2804
    %vm2807 = vcmask 1045509
    %v2808 = vsel %vm2807, %v2709, %v2806
    %vm2809 = vcmask 1046534
    %v2810 = vsel %vm2809, %v2709, %v2808
    %vm2811 = vcmask 1047559
    %v2812 = vsel %vm2811, %v2709, %v2810
    %v2813 = vsel %vm449, %v2740, %v2740
    %v2814 = vsel %vm455, %v2740, %v2813
    %v2815 = vsel %vm2805, %v2740, %v2814
    %v2816 = vsel %vm2807, %v2740, %v2815
    %v2817 = vsel %vm2809, %v2740, %v2816
    %v2818 = vsel %vm2811, %v2740, %v2817
    %v2819 = vsel %vm449, %v2771, %v2771
    %v2820 = vsel %vm455, %v2771, %v2819
    %v2821 = vsel %vm2805, %v2771, %v2820
    %v2822 = vsel %vm2807, %v2771, %v2821
    %v2823 = vsel %vm2809, %v2771, %v2822
    %v2824 = vsel %vm2811, %v2771, %v2823
    %v2825 = vsel %vm449, %v2802, %v2802
    %v2826 = vsel %vm455, %v2802, %v2825
    %v2827 = vsel %vm2805, %v2802, %v2826
    %v2828 = vsel %vm2807, %v2802, %v2827
    %v2829 = vsel %vm2809, %v2802, %v2828
    %v2830 = vsel %vm2811, %v2802, %v2829
    %v2831 = vsel %vm2393, %v2812, 0
    %v2832 = vsel %vm2394, %v2818, 0
    %v2833 = vsel %vm2395, %v2812, 0
    %v2834 = vsel %vm2396, %v2818, 0
    %v2835 = vsel %vm2397, %v2812, 0
    %v2836 = vsel %vm2398, %v2818, 0
    %v2837 = vsel %vm2399, %v2812, 0
    %v2838 = vsel %vm2400, %v2818, 0
    %v2839 = vsel %vm2401, %v2812, 0
    %v2840 = vsel %vm2402, %v2818, 0
    %v2841 = vsel %vm2403, %v2812, 0
    %v2842 = vsel %vm2404, %v2818, 0
    %v2843 = vsel %vm2405, %v2812, 0
    %v2844 = vsel %vm2406, %v2818, 0
    %v2845 = vsel %vm2407, %v2812, 0
    %v2846 = vsel %vm2408, %v2818, 0
    %v2847 = vsel %vm2409, %v2812, 0
    %v2848 = vsel %vm2410, %v2818, 0
    %v2849 = vsel %vm2411, %v2812, 0
    %v2850 = vsel %vm2412, %v2818, 0
    %v2851 = vsel %vm2413, %v2812, 0
    %v2852 = vsel %vm2414, %v2818, 0
    %v2853 = vsel %vm2415, %v2812, 0
    %v2854 = vsel %vm2416, %v2818, 0
    %v2855 = vsel %vm2417, %v2812, 0
    %v2856 = vsel %vm2418, %v2818, 0
    %v2857 = vsel %vm2419, %v2812, 0
    %v2858 = vsel %vm2420, %v2818, 0
    %v2859 = vsel %vm2421, %v2812, 0
    %v2860 = vsel %vm2422, %v2818, 0
    %v2861 = vsel %vm2423, %v2812, 0
    %v2862 = vsel %vm2424, %v2818, 0
    %v2863 = vsel %vm2425, %v2812, 0
    %v2864 = vsel %vm2426, %v2818, 0
    %v2865 = vsel %vm2427, %v2812, 0
    %v2866 = vsel %vm2428, %v2818, 0
    %v2867 = vsel %vm2429, %v2812, 0
    %v2868 = vsel %vm2430, %v2818, 0
    %v2869 = vsel %vm2431, %v2812, 0
    %v2870 = vsel %vm2432, %v2818, 0
    %v2871 = vsel %vm2433, %v2812, 0
    %v2872 = vsel %vm2434, %v2818, 0
    %v2873 = vsel %vm2435, %v2812, 0
    %v2874 = vsel %vm2436, %v2818, 0
    %v2875 = vsel %vm2437, %v2812, 0
    %v2876 = vsel %vm2438, %v2818, 0
    %v2877 = vsel %vm2439, %v2812, 0
    %v2878 = vsel %vm2440, %v2818, 0
    %v2879 = vsel %vm2441, %v2812, 0
    %v2880 = vsel %vm2442, %v2818, 0
    %v2881 = vsel %vm2443, %v2812, 0
    %v2882 = vsel %vm2444, %v2818, 0
    %v2883 = vsel %vm2445, %v2812, 0
    %v2884 = vsel %vm2446, %v2818, 0
    %v2885 = vsel %vm2447, %v2812, 0
    %v2886 = vsel %vm2448, %v2818, 0
    %v2887 = vsel %vm2449, %v2812, 0
    %v2888 = vsel %vm2450, %v2818, 0
    %v2889 = vsel %vm2451, %v2812, 0
    %v2890 = vsel %vm2452, %v2818, 0
    %v2891 = vsel %vm2453, %v2812, 0
    %v2892 = vsel %vm2454, %v2818, 0
    %v2893 = vsel %vm2455, %v2812, 0
    %v2894 = vsel %vm2456, %v2818, 0
    %v2895 = vsel %vm2393, %v2824, 0
    %v2896 = vsel %vm2394, %v2830, 0
    %v2897 = vsel %vm2395, %v2824, 0
    %v2898 = vsel %vm2396, %v2830, 0
    %v2899 = vsel %vm2397, %v2824, 0
    %v2900 = vsel %vm2398, %v2830, 0
    %v2901 = vsel %vm2399, %v2824, 0
    %v2902 = vsel %vm2400, %v2830, 0
    %v2903 = vsel %vm2401, %v2824, 0
    %v2904 = vsel %vm2402, %v2830, 0
    %v2905 = vsel %vm2403, %v2824, 0
    %v2906 = vsel %vm2404, %v2830, 0
    %v2907 = vsel %vm2405, %v2824, 0
    %v2908 = vsel %vm2406, %v2830, 0
    %v2909 = vsel %vm2407, %v2824, 0
    %v2910 = vsel %vm2408, %v2830, 0
    %v2911 = vsel %vm2409, %v2824, 0
    %v2912 = vsel %vm2410, %v2830, 0
    %v2913 = vsel %vm2411, %v2824, 0
    %v2914 = vsel %vm2412, %v2830, 0
    %v2915 = vsel %vm2413, %v2824, 0
    %v2916 = vsel %vm2414, %v2830, 0
    %v2917 = vsel %vm2415, %v2824, 0
    %v2918 = vsel %vm2416, %v2830, 0
    %v2919 = vsel %vm2417, %v2824, 0
    %v2920 = vsel %vm2418, %v2830, 0
    %v2921 = vsel %vm2419, %v2824, 0
    %v2922 = vsel %vm2420, %v2830, 0
    %v2923 = vsel %vm2421, %v2824, 0
    %v2924 = vsel %vm2422, %v2830, 0
    %v2925 = vsel %vm2423, %v2824, 0
    %v2926 = vsel %vm2424, %v2830, 0
    %v2927 = vsel %vm2425, %v2824, 0
    %v2928 = vsel %vm2426, %v2830, 0
    %v2929 = vsel %vm2427, %v2824, 0
    %v2930 = vsel %vm2428, %v2830, 0
    %v2931 = vsel %vm2429, %v2824, 0
    %v2932 = vsel %vm2430, %v2830, 0
    %v2933 = vsel %vm2431, %v2824, 0
    %v2934 = vsel %vm2432, %v2830, 0
    %v2935 = vsel %vm2433, %v2824, 0
    %v2936 = vsel %vm2434, %v2830, 0
    %v2937 = vsel %vm2435, %v2824, 0
    %v2938 = vsel %vm2436, %v2830, 0
    %v2939 = vsel %vm2437, %v2824, 0
    %v2940 = vsel %vm2438, %v2830, 0
    %v2941 = vsel %vm2439, %v2824, 0
    %v2942 = vsel %vm2440, %v2830, 0
    %v2943 = vsel %vm2441, %v2824, 0
    %v2944 = vsel %vm2442, %v2830, 0
    %v2945 = vsel %vm2443, %v2824, 0
    %v2946 = vsel %vm2444, %v2830, 0
    %v2947 = vsel %vm2445, %v2824, 0
    %v2948 = vsel %vm2446, %v2830, 0
    %v2949 = vsel %vm2447, %v2824, 0
    %v2950 = vsel %vm2448, %v2830, 0
    %v2951 = vsel %vm2449, %v2824, 0
    %v2952 = vsel %vm2450, %v2830, 0
    %v2953 = vsel %vm2451, %v2824, 0
    %v2954 = vsel %vm2452, %v2830, 0
    %v2955 = vsel %vm2453, %v2824, 0
    %v2956 = vsel %vm2454, %v2830, 0
    %v2957 = vsel %vm2455, %v2824, 0
    %v2958 = vsel %vm2456, %v2830, 0
    %v2959 = vadd.s32 %v2831, %v2832
    %v2960 = vand.u32 %v2959, 65535
    %v2961 = vshrl.u32 %v2959, 16
    %v2962 = vcvt.s32.f32 %v2960
    %v2963 = vcvt.s32.f32 %v2961
    %2964 = vadd.xlane.f32.xlu0 %v2962
    %v2965 = vpop.xlane.xlu0 %2964
    %2966 = vadd.xlane.f32.xlu0 %v2963
    %v2967 = vpop.xlane.xlu0 %2966
    %v2968 = vcvt.f32.s32 %v2965
    %v2969 = vcvt.f32.s32 %v2967
    %v2970 = vshll.u32 %v2969, 16
    %v2971 = vadd.s32 %v2970, %v2968
    %v2972 = vadd.s32 %v2833, %v2834
    %v2973 = vand.u32 %v2972, 65535
    %v2974 = vshrl.u32 %v2972, 16
    %v2975 = vcvt.s32.f32 %v2973
    %v2976 = vcvt.s32.f32 %v2974
    %2977 = vadd.xlane.f32.xlu0 %v2975
    %v2978 = vpop.xlane.xlu0 %2977
    %2979 = vadd.xlane.f32.xlu0 %v2976
    %v2980 = vpop.xlane.xlu0 %2979
    %v2981 = vcvt.f32.s32 %v2978
    %v2982 = vcvt.f32.s32 %v2980
    %v2983 = vshll.u32 %v2982, 16
    %v2984 = vadd.s32 %v2983, %v2981
    %v2985 = vadd.s32 %v2835, %v2836
    %v2986 = vand.u32 %v2985, 65535
    %v2987 = vshrl.u32 %v2985, 16
    %v2988 = vcvt.s32.f32 %v2986
    %v2989 = vcvt.s32.f32 %v2987
    %2990 = vadd.xlane.f32.xlu0 %v2988
    %v2991 = vpop.xlane.xlu0 %2990
    %2992 = vadd.xlane.f32.xlu0 %v2989
    %v2993 = vpop.xlane.xlu0 %2992
    %v2994 = vcvt.f32.s32 %v2991
    %v2995 = vcvt.f32.s32 %v2993
    %v2996 = vshll.u32 %v2995, 16
    %v2997 = vadd.s32 %v2996, %v2994
    %v2998 = vadd.s32 %v2837, %v2838
    %v2999 = vand.u32 %v2998, 65535
    %v3000 = vshrl.u32 %v2998, 16
    %v3001 = vcvt.s32.f32 %v2999
    %v3002 = vcvt.s32.f32 %v3000
    %3003 = vadd.xlane.f32.xlu0 %v3001
    %v3004 = vpop.xlane.xlu0 %3003
    %3005 = vadd.xlane.f32.xlu0 %v3002
    %v3006 = vpop.xlane.xlu0 %3005
    %v3007 = vcvt.f32.s32 %v3004
    %v3008 = vcvt.f32.s32 %v3006
    %v3009 = vshll.u32 %v3008, 16
    %v3010 = vadd.s32 %v3009, %v3007
    %v3011 = vadd.s32 %v2839, %v2840
    %v3012 = vand.u32 %v3011, 65535
    %v3013 = vshrl.u32 %v3011, 16
    %v3014 = vcvt.s32.f32 %v3012
    %v3015 = vcvt.s32.f32 %v3013
    %3016 = vadd.xlane.f32.xlu0 %v3014
    %v3017 = vpop.xlane.xlu0 %3016
    %3018 = vadd.xlane.f32.xlu0 %v3015
    %v3019 = vpop.xlane.xlu0 %3018
    %v3020 = vcvt.f32.s32 %v3017
    %v3021 = vcvt.f32.s32 %v3019
    %v3022 = vshll.u32 %v3021, 16
    %v3023 = vadd.s32 %v3022, %v3020
    %v3024 = vadd.s32 %v2841, %v2842
    %v3025 = vand.u32 %v3024, 65535
    %v3026 = vshrl.u32 %v3024, 16
    %v3027 = vcvt.s32.f32 %v3025
    %v3028 = vcvt.s32.f32 %v3026
    %3029 = vadd.xlane.f32.xlu0 %v3027
    %v3030 = vpop.xlane.xlu0 %3029
    %3031 = vadd.xlane.f32.xlu0 %v3028
    %v3032 = vpop.xlane.xlu0 %3031
    %v3033 = vcvt.f32.s32 %v3030
    %v3034 = vcvt.f32.s32 %v3032
    %v3035 = vshll.u32 %v3034, 16
    %v3036 = vadd.s32 %v3035, %v3033
    %v3037 = vadd.s32 %v2843, %v2844
    %v3038 = vand.u32 %v3037, 65535
    %v3039 = vshrl.u32 %v3037, 16
    %v3040 = vcvt.s32.f32 %v3038
    %v3041 = vcvt.s32.f32 %v3039
    %3042 = vadd.xlane.f32.xlu0 %v3040
    %v3043 = vpop.xlane.xlu0 %3042
    %3044 = vadd.xlane.f32.xlu0 %v3041
    %v3045 = vpop.xlane.xlu0 %3044
    %v3046 = vcvt.f32.s32 %v3043
    %v3047 = vcvt.f32.s32 %v3045
    %v3048 = vshll.u32 %v3047, 16
    %v3049 = vadd.s32 %v3048, %v3046
    %v3050 = vadd.s32 %v2845, %v2846
    %v3051 = vand.u32 %v3050, 65535
    %v3052 = vshrl.u32 %v3050, 16
    %v3053 = vcvt.s32.f32 %v3051
    %v3054 = vcvt.s32.f32 %v3052
    %3055 = vadd.xlane.f32.xlu0 %v3053
    %v3056 = vpop.xlane.xlu0 %3055
    %3057 = vadd.xlane.f32.xlu0 %v3054
    %v3058 = vpop.xlane.xlu0 %3057
    %v3059 = vcvt.f32.s32 %v3056
    %v3060 = vcvt.f32.s32 %v3058
    %v3061 = vshll.u32 %v3060, 16
    %v3062 = vadd.s32 %v3061, %v3059
    %v3063 = vadd.s32 %v2847, %v2848
    %v3064 = vand.u32 %v3063, 65535
    %v3065 = vshrl.u32 %v3063, 16
    %v3066 = vcvt.s32.f32 %v3064
    %v3067 = vcvt.s32.f32 %v3065
    %3068 = vadd.xlane.f32.xlu0 %v3066
    %v3069 = vpop.xlane.xlu0 %3068
    %3070 = vadd.xlane.f32.xlu0 %v3067
    %v3071 = vpop.xlane.xlu0 %3070
    %v3072 = vcvt.f32.s32 %v3069
    %v3073 = vcvt.f32.s32 %v3071
    %v3074 = vshll.u32 %v3073, 16
    %v3075 = vadd.s32 %v3074, %v3072
    %v3076 = vadd.s32 %v2849, %v2850
    %v3077 = vand.u32 %v3076, 65535
    %v3078 = vshrl.u32 %v3076, 16
    %v3079 = vcvt.s32.f32 %v3077
    %v3080 = vcvt.s32.f32 %v3078
    %3081 = vadd.xlane.f32.xlu0 %v3079
    %v3082 = vpop.xlane.xlu0 %3081
    %3083 = vadd.xlane.f32.xlu0 %v3080
    %v3084 = vpop.xlane.xlu0 %3083
    %v3085 = vcvt.f32.s32 %v3082
    %v3086 = vcvt.f32.s32 %v3084
    %v3087 = vshll.u32 %v3086, 16
    %v3088 = vadd.s32 %v3087, %v3085
    %v3089 = vadd.s32 %v2851, %v2852
    %v3090 = vand.u32 %v3089, 65535
    %v3091 = vshrl.u32 %v3089, 16
    %v3092 = vcvt.s32.f32 %v3090
    %v3093 = vcvt.s32.f32 %v3091
    %3094 = vadd.xlane.f32.xlu0 %v3092
    %v3095 = vpop.xlane.xlu0 %3094
    %3096 = vadd.xlane.f32.xlu0 %v3093
    %v3097 = vpop.xlane.xlu0 %3096
    %v3098 = vcvt.f32.s32 %v3095
    %v3099 = vcvt.f32.s32 %v3097
    %v3100 = vshll.u32 %v3099, 16
    %v3101 = vadd.s32 %v3100, %v3098
    %v3102 = vadd.s32 %v2853, %v2854
    %v3103 = vand.u32 %v3102, 65535
    %v3104 = vshrl.u32 %v3102, 16
    %v3105 = vcvt.s32.f32 %v3103
    %v3106 = vcvt.s32.f32 %v3104
    %3107 = vadd.xlane.f32.xlu0 %v3105
    %v3108 = vpop.xlane.xlu0 %3107
    %3109 = vadd.xlane.f32.xlu0 %v3106
    %v3110 = vpop.xlane.xlu0 %3109
    %v3111 = vcvt.f32.s32 %v3108
    %v3112 = vcvt.f32.s32 %v3110
    %v3113 = vshll.u32 %v3112, 16
    %v3114 = vadd.s32 %v3113, %v3111
    %v3115 = vadd.s32 %v2855, %v2856
    %v3116 = vand.u32 %v3115, 65535
    %v3117 = vshrl.u32 %v3115, 16
    %v3118 = vcvt.s32.f32 %v3116
    %v3119 = vcvt.s32.f32 %v3117
    %3120 = vadd.xlane.f32.xlu0 %v3118
    %v3121 = vpop.xlane.xlu0 %3120
    %3122 = vadd.xlane.f32.xlu0 %v3119
    %v3123 = vpop.xlane.xlu0 %3122
    %v3124 = vcvt.f32.s32 %v3121
    %v3125 = vcvt.f32.s32 %v3123
    %v3126 = vshll.u32 %v3125, 16
    %v3127 = vadd.s32 %v3126, %v3124
    %v3128 = vadd.s32 %v2857, %v2858
    %v3129 = vand.u32 %v3128, 65535
    %v3130 = vshrl.u32 %v3128, 16
    %v3131 = vcvt.s32.f32 %v3129
    %v3132 = vcvt.s32.f32 %v3130
    %3133 = vadd.xlane.f32.xlu0 %v3131
    %v3134 = vpop.xlane.xlu0 %3133
    %3135 = vadd.xlane.f32.xlu0 %v3132
    %v3136 = vpop.xlane.xlu0 %3135
    %v3137 = vcvt.f32.s32 %v3134
    %v3138 = vcvt.f32.s32 %v3136
    %v3139 = vshll.u32 %v3138, 16
    %v3140 = vadd.s32 %v3139, %v3137
    %v3141 = vadd.s32 %v2859, %v2860
    %v3142 = vand.u32 %v3141, 65535
    %v3143 = vshrl.u32 %v3141, 16
    %v3144 = vcvt.s32.f32 %v3142
    %v3145 = vcvt.s32.f32 %v3143
    %3146 = vadd.xlane.f32.xlu0 %v3144
    %v3147 = vpop.xlane.xlu0 %3146
    %3148 = vadd.xlane.f32.xlu0 %v3145
    %v3149 = vpop.xlane.xlu0 %3148
    %v3150 = vcvt.f32.s32 %v3147
    %v3151 = vcvt.f32.s32 %v3149
    %v3152 = vshll.u32 %v3151, 16
    %v3153 = vadd.s32 %v3152, %v3150
    %v3154 = vadd.s32 %v2861, %v2862
    %v3155 = vand.u32 %v3154, 65535
    %v3156 = vshrl.u32 %v3154, 16
    %v3157 = vcvt.s32.f32 %v3155
    %v3158 = vcvt.s32.f32 %v3156
    %3159 = vadd.xlane.f32.xlu0 %v3157
    %v3160 = vpop.xlane.xlu0 %3159
    %3161 = vadd.xlane.f32.xlu0 %v3158
    %v3162 = vpop.xlane.xlu0 %3161
    %v3163 = vcvt.f32.s32 %v3160
    %v3164 = vcvt.f32.s32 %v3162
    %v3165 = vshll.u32 %v3164, 16
    %v3166 = vadd.s32 %v3165, %v3163
    %v3167 = vadd.s32 %v2863, %v2864
    %v3168 = vand.u32 %v3167, 65535
    %v3169 = vshrl.u32 %v3167, 16
    %v3170 = vcvt.s32.f32 %v3168
    %v3171 = vcvt.s32.f32 %v3169
    %3172 = vadd.xlane.f32.xlu0 %v3170
    %v3173 = vpop.xlane.xlu0 %3172
    %3174 = vadd.xlane.f32.xlu0 %v3171
    %v3175 = vpop.xlane.xlu0 %3174
    %v3176 = vcvt.f32.s32 %v3173
    %v3177 = vcvt.f32.s32 %v3175
    %v3178 = vshll.u32 %v3177, 16
    %v3179 = vadd.s32 %v3178, %v3176
    %v3180 = vadd.s32 %v2865, %v2866
    %v3181 = vand.u32 %v3180, 65535
    %v3182 = vshrl.u32 %v3180, 16
    %v3183 = vcvt.s32.f32 %v3181
    %v3184 = vcvt.s32.f32 %v3182
    %3185 = vadd.xlane.f32.xlu0 %v3183
    %v3186 = vpop.xlane.xlu0 %3185
    %3187 = vadd.xlane.f32.xlu0 %v3184
    %v3188 = vpop.xlane.xlu0 %3187
    %v3189 = vcvt.f32.s32 %v3186
    %v3190 = vcvt.f32.s32 %v3188
    %v3191 = vshll.u32 %v3190, 16
    %v3192 = vadd.s32 %v3191, %v3189
    %v3193 = vadd.s32 %v2867, %v2868
    %v3194 = vand.u32 %v3193, 65535
    %v3195 = vshrl.u32 %v3193, 16
    %v3196 = vcvt.s32.f32 %v3194
    %v3197 = vcvt.s32.f32 %v3195
    %3198 = vadd.xlane.f32.xlu0 %v3196
    %v3199 = vpop.xlane.xlu0 %3198
    %3200 = vadd.xlane.f32.xlu0 %v3197
    %v3201 = vpop.xlane.xlu0 %3200
    %v3202 = vcvt.f32.s32 %v3199
    %v3203 = vcvt.f32.s32 %v3201
    %v3204 = vshll.u32 %v3203, 16
    %v3205 = vadd.s32 %v3204, %v3202
    %v3206 = vadd.s32 %v2869, %v2870
    %v3207 = vand.u32 %v3206, 65535
    %v3208 = vshrl.u32 %v3206, 16
    %v3209 = vcvt.s32.f32 %v3207
    %v3210 = vcvt.s32.f32 %v3208
    %3211 = vadd.xlane.f32.xlu0 %v3209
    %v3212 = vpop.xlane.xlu0 %3211
    %3213 = vadd.xlane.f32.xlu0 %v3210
    %v3214 = vpop.xlane.xlu0 %3213
    %v3215 = vcvt.f32.s32 %v3212
    %v3216 = vcvt.f32.s32 %v3214
    %v3217 = vshll.u32 %v3216, 16
    %v3218 = vadd.s32 %v3217, %v3215
    %v3219 = vadd.s32 %v2871, %v2872
    %v3220 = vand.u32 %v3219, 65535
    %v3221 = vshrl.u32 %v3219, 16
    %v3222 = vcvt.s32.f32 %v3220
    %v3223 = vcvt.s32.f32 %v3221
    %3224 = vadd.xlane.f32.xlu0 %v3222
    %v3225 = vpop.xlane.xlu0 %3224
    %3226 = vadd.xlane.f32.xlu0 %v3223
    %v3227 = vpop.xlane.xlu0 %3226
    %v3228 = vcvt.f32.s32 %v3225
    %v3229 = vcvt.f32.s32 %v3227
    %v3230 = vshll.u32 %v3229, 16
    %v3231 = vadd.s32 %v3230, %v3228
    %v3232 = vadd.s32 %v2873, %v2874
    %v3233 = vand.u32 %v3232, 65535
    %v3234 = vshrl.u32 %v3232, 16
    %v3235 = vcvt.s32.f32 %v3233
    %v3236 = vcvt.s32.f32 %v3234
    %3237 = vadd.xlane.f32.xlu0 %v3235
    %v3238 = vpop.xlane.xlu0 %3237
    %3239 = vadd.xlane.f32.xlu0 %v3236
    %v3240 = vpop.xlane.xlu0 %3239
    %v3241 = vcvt.f32.s32 %v3238
    %v3242 = vcvt.f32.s32 %v3240
    %v3243 = vshll.u32 %v3242, 16
    %v3244 = vadd.s32 %v3243, %v3241
    %v3245 = vadd.s32 %v2875, %v2876
    %v3246 = vand.u32 %v3245, 65535
    %v3247 = vshrl.u32 %v3245, 16
    %v3248 = vcvt.s32.f32 %v3246
    %v3249 = vcvt.s32.f32 %v3247
    %3250 = vadd.xlane.f32.xlu0 %v3248
    %v3251 = vpop.xlane.xlu0 %3250
    %3252 = vadd.xlane.f32.xlu0 %v3249
    %v3253 = vpop.xlane.xlu0 %3252
    %v3254 = vcvt.f32.s32 %v3251
    %v3255 = vcvt.f32.s32 %v3253
    %v3256 = vshll.u32 %v3255, 16
    %v3257 = vadd.s32 %v3256, %v3254
    %v3258 = vadd.s32 %v2877, %v2878
    %v3259 = vand.u32 %v3258, 65535
    %v3260 = vshrl.u32 %v3258, 16
    %v3261 = vcvt.s32.f32 %v3259
    %v3262 = vcvt.s32.f32 %v3260
    %3263 = vadd.xlane.f32.xlu0 %v3261
    %v3264 = vpop.xlane.xlu0 %3263
    %3265 = vadd.xlane.f32.xlu0 %v3262
    %v3266 = vpop.xlane.xlu0 %3265
    %v3267 = vcvt.f32.s32 %v3264
    %v3268 = vcvt.f32.s32 %v3266
    %v3269 = vshll.u32 %v3268, 16
    %v3270 = vadd.s32 %v3269, %v3267
    %v3271 = vadd.s32 %v2879, %v2880
    %v3272 = vand.u32 %v3271, 65535
    %v3273 = vshrl.u32 %v3271, 16
    %v3274 = vcvt.s32.f32 %v3272
    %v3275 = vcvt.s32.f32 %v3273
    %3276 = vadd.xlane.f32.xlu0 %v3274
    %v3277 = vpop.xlane.xlu0 %3276
    %3278 = vadd.xlane.f32.xlu0 %v3275
    %v3279 = vpop.xlane.xlu0 %3278
    %v3280 = vcvt.f32.s32 %v3277
    %v3281 = vcvt.f32.s32 %v3279
    %v3282 = vshll.u32 %v3281, 16
    %v3283 = vadd.s32 %v3282, %v3280
    %v3284 = vadd.s32 %v2881, %v2882
    %v3285 = vand.u32 %v3284, 65535
    %v3286 = vshrl.u32 %v3284, 16
    %v3287 = vcvt.s32.f32 %v3285
    %v3288 = vcvt.s32.f32 %v3286
    %3289 = vadd.xlane.f32.xlu0 %v3287
    %v3290 = vpop.xlane.xlu0 %3289
    %3291 = vadd.xlane.f32.xlu0 %v3288
    %v3292 = vpop.xlane.xlu0 %3291
    %v3293 = vcvt.f32.s32 %v3290
    %v3294 = vcvt.f32.s32 %v3292
    %v3295 = vshll.u32 %v3294, 16
    %v3296 = vadd.s32 %v3295, %v3293
    %v3297 = vadd.s32 %v2883, %v2884
    %v3298 = vand.u32 %v3297, 65535
    %v3299 = vshrl.u32 %v3297, 16
    %v3300 = vcvt.s32.f32 %v3298
    %v3301 = vcvt.s32.f32 %v3299
    %3302 = vadd.xlane.f32.xlu0 %v3300
    %v3303 = vpop.xlane.xlu0 %3302
    %3304 = vadd.xlane.f32.xlu0 %v3301
    %v3305 = vpop.xlane.xlu0 %3304
    %v3306 = vcvt.f32.s32 %v3303
    %v3307 = vcvt.f32.s32 %v3305
    %v3308 = vshll.u32 %v3307, 16
    %v3309 = vadd.s32 %v3308, %v3306
    %v3310 = vadd.s32 %v2885, %v2886
    %v3311 = vand.u32 %v3310, 65535
    %v3312 = vshrl.u32 %v3310, 16
    %v3313 = vcvt.s32.f32 %v3311
    %v3314 = vcvt.s32.f32 %v3312
    %3315 = vadd.xlane.f32.xlu0 %v3313
    %v3316 = vpop.xlane.xlu0 %3315
    %3317 = vadd.xlane.f32.xlu0 %v3314
    %v3318 = vpop.xlane.xlu0 %3317
    %v3319 = vcvt.f32.s32 %v3316
    %v3320 = vcvt.f32.s32 %v3318
    %v3321 = vshll.u32 %v3320, 16
    %v3322 = vadd.s32 %v3321, %v3319
    %v3323 = vadd.s32 %v2887, %v2888
    %v3324 = vand.u32 %v3323, 65535
    %v3325 = vshrl.u32 %v3323, 16
    %v3326 = vcvt.s32.f32 %v3324
    %v3327 = vcvt.s32.f32 %v3325
    %3328 = vadd.xlane.f32.xlu0 %v3326
    %v3329 = vpop.xlane.xlu0 %3328
    %3330 = vadd.xlane.f32.xlu0 %v3327
    %v3331 = vpop.xlane.xlu0 %3330
    %v3332 = vcvt.f32.s32 %v3329
    %v3333 = vcvt.f32.s32 %v3331
    %v3334 = vshll.u32 %v3333, 16
    %v3335 = vadd.s32 %v3334, %v3332
    %v3336 = vadd.s32 %v2889, %v2890
    %v3337 = vand.u32 %v3336, 65535
    %v3338 = vshrl.u32 %v3336, 16
    %v3339 = vcvt.s32.f32 %v3337
    %v3340 = vcvt.s32.f32 %v3338
    %3341 = vadd.xlane.f32.xlu0 %v3339
    %v3342 = vpop.xlane.xlu0 %3341
    %3343 = vadd.xlane.f32.xlu0 %v3340
    %v3344 = vpop.xlane.xlu0 %3343
    %v3345 = vcvt.f32.s32 %v3342
    %v3346 = vcvt.f32.s32 %v3344
    %v3347 = vshll.u32 %v3346, 16
    %v3348 = vadd.s32 %v3347, %v3345
    %v3349 = vadd.s32 %v2891, %v2892
    %v3350 = vand.u32 %v3349, 65535
    %v3351 = vshrl.u32 %v3349, 16
    %v3352 = vcvt.s32.f32 %v3350
    %v3353 = vcvt.s32.f32 %v3351
    %3354 = vadd.xlane.f32.xlu0 %v3352
    %v3355 = vpop.xlane.xlu0 %3354
    %3356 = vadd.xlane.f32.xlu0 %v3353
    %v3357 = vpop.xlane.xlu0 %3356
    %v3358 = vcvt.f32.s32 %v3355
    %v3359 = vcvt.f32.s32 %v3357
    %v3360 = vshll.u32 %v3359, 16
    %v3361 = vadd.s32 %v3360, %v3358
    %v3362 = vadd.s32 %v2893, %v2894
    %v3363 = vand.u32 %v3362, 65535
    %v3364 = vshrl.u32 %v3362, 16
    %v3365 = vcvt.s32.f32 %v3363
    %v3366 = vcvt.s32.f32 %v3364
    %3367 = vadd.xlane.f32.xlu0 %v3365
    %v3368 = vpop.xlane.xlu0 %3367
    %3369 = vadd.xlane.f32.xlu0 %v3366
    %v3370 = vpop.xlane.xlu0 %3369
    %v3371 = vcvt.f32.s32 %v3368
    %v3372 = vcvt.f32.s32 %v3370
    %v3373 = vshll.u32 %v3372, 16
    %v3374 = vadd.s32 %v3373, %v3371
    %v3375 = vadd.s32 %v2895, %v2896
    %v3376 = vand.u32 %v3375, 65535
    %v3377 = vshrl.u32 %v3375, 16
    %v3378 = vcvt.s32.f32 %v3376
    %v3379 = vcvt.s32.f32 %v3377
    %3380 = vadd.xlane.f32.xlu0 %v3378
    %v3381 = vpop.xlane.xlu0 %3380
    %3382 = vadd.xlane.f32.xlu0 %v3379
    %v3383 = vpop.xlane.xlu0 %3382
    %v3384 = vcvt.f32.s32 %v3381
    %v3385 = vcvt.f32.s32 %v3383
    %v3386 = vshll.u32 %v3385, 16
    %v3387 = vadd.s32 %v3386, %v3384
    %v3388 = vadd.s32 %v2897, %v2898
    %v3389 = vand.u32 %v3388, 65535
    %v3390 = vshrl.u32 %v3388, 16
    %v3391 = vcvt.s32.f32 %v3389
    %v3392 = vcvt.s32.f32 %v3390
    %3393 = vadd.xlane.f32.xlu0 %v3391
    %v3394 = vpop.xlane.xlu0 %3393
    %3395 = vadd.xlane.f32.xlu0 %v3392
    %v3396 = vpop.xlane.xlu0 %3395
    %v3397 = vcvt.f32.s32 %v3394
    %v3398 = vcvt.f32.s32 %v3396
    %v3399 = vshll.u32 %v3398, 16
    %v3400 = vadd.s32 %v3399, %v3397
    %v3401 = vadd.s32 %v2899, %v2900
    %v3402 = vand.u32 %v3401, 65535
    %v3403 = vshrl.u32 %v3401, 16
    %v3404 = vcvt.s32.f32 %v3402
    %v3405 = vcvt.s32.f32 %v3403
    %3406 = vadd.xlane.f32.xlu0 %v3404
    %v3407 = vpop.xlane.xlu0 %3406
    %3408 = vadd.xlane.f32.xlu0 %v3405
    %v3409 = vpop.xlane.xlu0 %3408
    %v3410 = vcvt.f32.s32 %v3407
    %v3411 = vcvt.f32.s32 %v3409
    %v3412 = vshll.u32 %v3411, 16
    %v3413 = vadd.s32 %v3412, %v3410
    %v3414 = vadd.s32 %v2901, %v2902
    %v3415 = vand.u32 %v3414, 65535
    %v3416 = vshrl.u32 %v3414, 16
    %v3417 = vcvt.s32.f32 %v3415
    %v3418 = vcvt.s32.f32 %v3416
    %3419 = vadd.xlane.f32.xlu0 %v3417
    %v3420 = vpop.xlane.xlu0 %3419
    %3421 = vadd.xlane.f32.xlu0 %v3418
    %v3422 = vpop.xlane.xlu0 %3421
    %v3423 = vcvt.f32.s32 %v3420
    %v3424 = vcvt.f32.s32 %v3422
    %v3425 = vshll.u32 %v3424, 16
    %v3426 = vadd.s32 %v3425, %v3423
    %v3427 = vadd.s32 %v2903, %v2904
    %v3428 = vand.u32 %v3427, 65535
    %v3429 = vshrl.u32 %v3427, 16
    %v3430 = vcvt.s32.f32 %v3428
    %v3431 = vcvt.s32.f32 %v3429
    %3432 = vadd.xlane.f32.xlu0 %v3430
    %v3433 = vpop.xlane.xlu0 %3432
    %3434 = vadd.xlane.f32.xlu0 %v3431
    %v3435 = vpop.xlane.xlu0 %3434
    %v3436 = vcvt.f32.s32 %v3433
    %v3437 = vcvt.f32.s32 %v3435
    %v3438 = vshll.u32 %v3437, 16
    %v3439 = vadd.s32 %v3438, %v3436
    %v3440 = vadd.s32 %v2905, %v2906
    %v3441 = vand.u32 %v3440, 65535
    %v3442 = vshrl.u32 %v3440, 16
    %v3443 = vcvt.s32.f32 %v3441
    %v3444 = vcvt.s32.f32 %v3442
    %3445 = vadd.xlane.f32.xlu0 %v3443
    %v3446 = vpop.xlane.xlu0 %3445
    %3447 = vadd.xlane.f32.xlu0 %v3444
    %v3448 = vpop.xlane.xlu0 %3447
    %v3449 = vcvt.f32.s32 %v3446
    %v3450 = vcvt.f32.s32 %v3448
    %v3451 = vshll.u32 %v3450, 16
    %v3452 = vadd.s32 %v3451, %v3449
    %v3453 = vadd.s32 %v2907, %v2908
    %v3454 = vand.u32 %v3453, 65535
    %v3455 = vshrl.u32 %v3453, 16
    %v3456 = vcvt.s32.f32 %v3454
    %v3457 = vcvt.s32.f32 %v3455
    %3458 = vadd.xlane.f32.xlu0 %v3456
    %v3459 = vpop.xlane.xlu0 %3458
    %3460 = vadd.xlane.f32.xlu0 %v3457
    %v3461 = vpop.xlane.xlu0 %3460
    %v3462 = vcvt.f32.s32 %v3459
    %v3463 = vcvt.f32.s32 %v3461
    %v3464 = vshll.u32 %v3463, 16
    %v3465 = vadd.s32 %v3464, %v3462
    %v3466 = vadd.s32 %v2909, %v2910
    %v3467 = vand.u32 %v3466, 65535
    %v3468 = vshrl.u32 %v3466, 16
    %v3469 = vcvt.s32.f32 %v3467
    %v3470 = vcvt.s32.f32 %v3468
    %3471 = vadd.xlane.f32.xlu0 %v3469
    %v3472 = vpop.xlane.xlu0 %3471
    %3473 = vadd.xlane.f32.xlu0 %v3470
    %v3474 = vpop.xlane.xlu0 %3473
    %v3475 = vcvt.f32.s32 %v3472
    %v3476 = vcvt.f32.s32 %v3474
    %v3477 = vshll.u32 %v3476, 16
    %v3478 = vadd.s32 %v3477, %v3475
    %v3479 = vadd.s32 %v2911, %v2912
    %v3480 = vand.u32 %v3479, 65535
    %v3481 = vshrl.u32 %v3479, 16
    %v3482 = vcvt.s32.f32 %v3480
    %v3483 = vcvt.s32.f32 %v3481
    %3484 = vadd.xlane.f32.xlu0 %v3482
    %v3485 = vpop.xlane.xlu0 %3484
    %3486 = vadd.xlane.f32.xlu0 %v3483
    %v3487 = vpop.xlane.xlu0 %3486
    %v3488 = vcvt.f32.s32 %v3485
    %v3489 = vcvt.f32.s32 %v3487
    %v3490 = vshll.u32 %v3489, 16
    %v3491 = vadd.s32 %v3490, %v3488
    %v3492 = vadd.s32 %v2913, %v2914
    %v3493 = vand.u32 %v3492, 65535
    %v3494 = vshrl.u32 %v3492, 16
    %v3495 = vcvt.s32.f32 %v3493
    %v3496 = vcvt.s32.f32 %v3494
    %3497 = vadd.xlane.f32.xlu0 %v3495
    %v3498 = vpop.xlane.xlu0 %3497
    %3499 = vadd.xlane.f32.xlu0 %v3496
    %v3500 = vpop.xlane.xlu0 %3499
    %v3501 = vcvt.f32.s32 %v3498
    %v3502 = vcvt.f32.s32 %v3500
    %v3503 = vshll.u32 %v3502, 16
    %v3504 = vadd.s32 %v3503, %v3501
    %v3505 = vadd.s32 %v2915, %v2916
    %v3506 = vand.u32 %v3505, 65535
    %v3507 = vshrl.u32 %v3505, 16
    %v3508 = vcvt.s32.f32 %v3506
    %v3509 = vcvt.s32.f32 %v3507
    %3510 = vadd.xlane.f32.xlu0 %v3508
    %v3511 = vpop.xlane.xlu0 %3510
    %3512 = vadd.xlane.f32.xlu0 %v3509
    %v3513 = vpop.xlane.xlu0 %3512
    %v3514 = vcvt.f32.s32 %v3511
    %v3515 = vcvt.f32.s32 %v3513
    %v3516 = vshll.u32 %v3515, 16
    %v3517 = vadd.s32 %v3516, %v3514
    %v3518 = vadd.s32 %v2917, %v2918
    %v3519 = vand.u32 %v3518, 65535
    %v3520 = vshrl.u32 %v3518, 16
    %v3521 = vcvt.s32.f32 %v3519
    %v3522 = vcvt.s32.f32 %v3520
    %3523 = vadd.xlane.f32.xlu0 %v3521
    %v3524 = vpop.xlane.xlu0 %3523
    %3525 = vadd.xlane.f32.xlu0 %v3522
    %v3526 = vpop.xlane.xlu0 %3525
    %v3527 = vcvt.f32.s32 %v3524
    %v3528 = vcvt.f32.s32 %v3526
    %v3529 = vshll.u32 %v3528, 16
    %v3530 = vadd.s32 %v3529, %v3527
    %v3531 = vadd.s32 %v2919, %v2920
    %v3532 = vand.u32 %v3531, 65535
    %v3533 = vshrl.u32 %v3531, 16
    %v3534 = vcvt.s32.f32 %v3532
    %v3535 = vcvt.s32.f32 %v3533
    %3536 = vadd.xlane.f32.xlu0 %v3534
    %v3537 = vpop.xlane.xlu0 %3536
    %3538 = vadd.xlane.f32.xlu0 %v3535
    %v3539 = vpop.xlane.xlu0 %3538
    %v3540 = vcvt.f32.s32 %v3537
    %v3541 = vcvt.f32.s32 %v3539
    %v3542 = vshll.u32 %v3541, 16
    %v3543 = vadd.s32 %v3542, %v3540
    %v3544 = vadd.s32 %v2921, %v2922
    %v3545 = vand.u32 %v3544, 65535
    %v3546 = vshrl.u32 %v3544, 16
    %v3547 = vcvt.s32.f32 %v3545
    %v3548 = vcvt.s32.f32 %v3546
    %3549 = vadd.xlane.f32.xlu0 %v3547
    %v3550 = vpop.xlane.xlu0 %3549
    %3551 = vadd.xlane.f32.xlu0 %v3548
    %v3552 = vpop.xlane.xlu0 %3551
    %v3553 = vcvt.f32.s32 %v3550
    %v3554 = vcvt.f32.s32 %v3552
    %v3555 = vshll.u32 %v3554, 16
    %v3556 = vadd.s32 %v3555, %v3553
    %v3557 = vadd.s32 %v2923, %v2924
    %v3558 = vand.u32 %v3557, 65535
    %v3559 = vshrl.u32 %v3557, 16
    %v3560 = vcvt.s32.f32 %v3558
    %v3561 = vcvt.s32.f32 %v3559
    %3562 = vadd.xlane.f32.xlu0 %v3560
    %v3563 = vpop.xlane.xlu0 %3562
    %3564 = vadd.xlane.f32.xlu0 %v3561
    %v3565 = vpop.xlane.xlu0 %3564
    %v3566 = vcvt.f32.s32 %v3563
    %v3567 = vcvt.f32.s32 %v3565
    %v3568 = vshll.u32 %v3567, 16
    %v3569 = vadd.s32 %v3568, %v3566
    %v3570 = vadd.s32 %v2925, %v2926
    %v3571 = vand.u32 %v3570, 65535
    %v3572 = vshrl.u32 %v3570, 16
    %v3573 = vcvt.s32.f32 %v3571
    %v3574 = vcvt.s32.f32 %v3572
    %3575 = vadd.xlane.f32.xlu0 %v3573
    %v3576 = vpop.xlane.xlu0 %3575
    %3577 = vadd.xlane.f32.xlu0 %v3574
    %v3578 = vpop.xlane.xlu0 %3577
    %v3579 = vcvt.f32.s32 %v3576
    %v3580 = vcvt.f32.s32 %v3578
    %v3581 = vshll.u32 %v3580, 16
    %v3582 = vadd.s32 %v3581, %v3579
    %v3583 = vadd.s32 %v2927, %v2928
    %v3584 = vand.u32 %v3583, 65535
    %v3585 = vshrl.u32 %v3583, 16
    %v3586 = vcvt.s32.f32 %v3584
    %v3587 = vcvt.s32.f32 %v3585
    %3588 = vadd.xlane.f32.xlu0 %v3586
    %v3589 = vpop.xlane.xlu0 %3588
    %3590 = vadd.xlane.f32.xlu0 %v3587
    %v3591 = vpop.xlane.xlu0 %3590
    %v3592 = vcvt.f32.s32 %v3589
    %v3593 = vcvt.f32.s32 %v3591
    %v3594 = vshll.u32 %v3593, 16
    %v3595 = vadd.s32 %v3594, %v3592
    %v3596 = vadd.s32 %v2929, %v2930
    %v3597 = vand.u32 %v3596, 65535
    %v3598 = vshrl.u32 %v3596, 16
    %v3599 = vcvt.s32.f32 %v3597
    %v3600 = vcvt.s32.f32 %v3598
    %3601 = vadd.xlane.f32.xlu0 %v3599
    %v3602 = vpop.xlane.xlu0 %3601
    %3603 = vadd.xlane.f32.xlu0 %v3600
    %v3604 = vpop.xlane.xlu0 %3603
    %v3605 = vcvt.f32.s32 %v3602
    %v3606 = vcvt.f32.s32 %v3604
    %v3607 = vshll.u32 %v3606, 16
    %v3608 = vadd.s32 %v3607, %v3605
    %v3609 = vadd.s32 %v2931, %v2932
    %v3610 = vand.u32 %v3609, 65535
    %v3611 = vshrl.u32 %v3609, 16
    %v3612 = vcvt.s32.f32 %v3610
    %v3613 = vcvt.s32.f32 %v3611
    %3614 = vadd.xlane.f32.xlu0 %v3612
    %v3615 = vpop.xlane.xlu0 %3614
    %3616 = vadd.xlane.f32.xlu0 %v3613
    %v3617 = vpop.xlane.xlu0 %3616
    %v3618 = vcvt.f32.s32 %v3615
    %v3619 = vcvt.f32.s32 %v3617
    %v3620 = vshll.u32 %v3619, 16
    %v3621 = vadd.s32 %v3620, %v3618
    %v3622 = vadd.s32 %v2933, %v2934
    %v3623 = vand.u32 %v3622, 65535
    %v3624 = vshrl.u32 %v3622, 16
    %v3625 = vcvt.s32.f32 %v3623
    %v3626 = vcvt.s32.f32 %v3624
    %3627 = vadd.xlane.f32.xlu0 %v3625
    %v3628 = vpop.xlane.xlu0 %3627
    %3629 = vadd.xlane.f32.xlu0 %v3626
    %v3630 = vpop.xlane.xlu0 %3629
    %v3631 = vcvt.f32.s32 %v3628
    %v3632 = vcvt.f32.s32 %v3630
    %v3633 = vshll.u32 %v3632, 16
    %v3634 = vadd.s32 %v3633, %v3631
    %v3635 = vadd.s32 %v2935, %v2936
    %v3636 = vand.u32 %v3635, 65535
    %v3637 = vshrl.u32 %v3635, 16
    %v3638 = vcvt.s32.f32 %v3636
    %v3639 = vcvt.s32.f32 %v3637
    %3640 = vadd.xlane.f32.xlu0 %v3638
    %v3641 = vpop.xlane.xlu0 %3640
    %3642 = vadd.xlane.f32.xlu0 %v3639
    %v3643 = vpop.xlane.xlu0 %3642
    %v3644 = vcvt.f32.s32 %v3641
    %v3645 = vcvt.f32.s32 %v3643
    %v3646 = vshll.u32 %v3645, 16
    %v3647 = vadd.s32 %v3646, %v3644
    %v3648 = vadd.s32 %v2937, %v2938
    %v3649 = vand.u32 %v3648, 65535
    %v3650 = vshrl.u32 %v3648, 16
    %v3651 = vcvt.s32.f32 %v3649
    %v3652 = vcvt.s32.f32 %v3650
    %3653 = vadd.xlane.f32.xlu0 %v3651
    %v3654 = vpop.xlane.xlu0 %3653
    %3655 = vadd.xlane.f32.xlu0 %v3652
    %v3656 = vpop.xlane.xlu0 %3655
    %v3657 = vcvt.f32.s32 %v3654
    %v3658 = vcvt.f32.s32 %v3656
    %v3659 = vshll.u32 %v3658, 16
    %v3660 = vadd.s32 %v3659, %v3657
    %v3661 = vadd.s32 %v2939, %v2940
    %v3662 = vand.u32 %v3661, 65535
    %v3663 = vshrl.u32 %v3661, 16
    %v3664 = vcvt.s32.f32 %v3662
    %v3665 = vcvt.s32.f32 %v3663
    %3666 = vadd.xlane.f32.xlu0 %v3664
    %v3667 = vpop.xlane.xlu0 %3666
    %3668 = vadd.xlane.f32.xlu0 %v3665
    %v3669 = vpop.xlane.xlu0 %3668
    %v3670 = vcvt.f32.s32 %v3667
    %v3671 = vcvt.f32.s32 %v3669
    %v3672 = vshll.u32 %v3671, 16
    %v3673 = vadd.s32 %v3672, %v3670
    %v3674 = vadd.s32 %v2941, %v2942
    %v3675 = vand.u32 %v3674, 65535
    %v3676 = vshrl.u32 %v3674, 16
    %v3677 = vcvt.s32.f32 %v3675
    %v3678 = vcvt.s32.f32 %v3676
    %3679 = vadd.xlane.f32.xlu0 %v3677
    %v3680 = vpop.xlane.xlu0 %3679
    %3681 = vadd.xlane.f32.xlu0 %v3678
    %v3682 = vpop.xlane.xlu0 %3681
    %v3683 = vcvt.f32.s32 %v3680
    %v3684 = vcvt.f32.s32 %v3682
    %v3685 = vshll.u32 %v3684, 16
    %v3686 = vadd.s32 %v3685, %v3683
    %v3687 = vadd.s32 %v2943, %v2944
    %v3688 = vand.u32 %v3687, 65535
    %v3689 = vshrl.u32 %v3687, 16
    %v3690 = vcvt.s32.f32 %v3688
    %v3691 = vcvt.s32.f32 %v3689
    %3692 = vadd.xlane.f32.xlu0 %v3690
    %v3693 = vpop.xlane.xlu0 %3692
    %3694 = vadd.xlane.f32.xlu0 %v3691
    %v3695 = vpop.xlane.xlu0 %3694
    %v3696 = vcvt.f32.s32 %v3693
    %v3697 = vcvt.f32.s32 %v3695
    %v3698 = vshll.u32 %v3697, 16
    %v3699 = vadd.s32 %v3698, %v3696
    %v3700 = vadd.s32 %v2945, %v2946
    %v3701 = vand.u32 %v3700, 65535
    %v3702 = vshrl.u32 %v3700, 16
    %v3703 = vcvt.s32.f32 %v3701
    %v3704 = vcvt.s32.f32 %v3702
    %3705 = vadd.xlane.f32.xlu0 %v3703
    %v3706 = vpop.xlane.xlu0 %3705
    %3707 = vadd.xlane.f32.xlu0 %v3704
    %v3708 = vpop.xlane.xlu0 %3707
    %v3709 = vcvt.f32.s32 %v3706
    %v3710 = vcvt.f32.s32 %v3708
    %v3711 = vshll.u32 %v3710, 16
    %v3712 = vadd.s32 %v3711, %v3709
    %v3713 = vadd.s32 %v2947, %v2948
    %v3714 = vand.u32 %v3713, 65535
    %v3715 = vshrl.u32 %v3713, 16
    %v3716 = vcvt.s32.f32 %v3714
    %v3717 = vcvt.s32.f32 %v3715
    %3718 = vadd.xlane.f32.xlu0 %v3716
    %v3719 = vpop.xlane.xlu0 %3718
    %3720 = vadd.xlane.f32.xlu0 %v3717
    %v3721 = vpop.xlane.xlu0 %3720
    %v3722 = vcvt.f32.s32 %v3719
    %v3723 = vcvt.f32.s32 %v3721
    %v3724 = vshll.u32 %v3723, 16
    %v3725 = vadd.s32 %v3724, %v3722
    %v3726 = vadd.s32 %v2949, %v2950
    %v3727 = vand.u32 %v3726, 65535
    %v3728 = vshrl.u32 %v3726, 16
    %v3729 = vcvt.s32.f32 %v3727
    %v3730 = vcvt.s32.f32 %v3728
    %3731 = vadd.xlane.f32.xlu0 %v3729
    %v3732 = vpop.xlane.xlu0 %3731
    %3733 = vadd.xlane.f32.xlu0 %v3730
    %v3734 = vpop.xlane.xlu0 %3733
    %v3735 = vcvt.f32.s32 %v3732
    %v3736 = vcvt.f32.s32 %v3734
    %v3737 = vshll.u32 %v3736, 16
    %v3738 = vadd.s32 %v3737, %v3735
    %v3739 = vadd.s32 %v2951, %v2952
    %v3740 = vand.u32 %v3739, 65535
    %v3741 = vshrl.u32 %v3739, 16
    %v3742 = vcvt.s32.f32 %v3740
    %v3743 = vcvt.s32.f32 %v3741
    %3744 = vadd.xlane.f32.xlu0 %v3742
    %v3745 = vpop.xlane.xlu0 %3744
    %3746 = vadd.xlane.f32.xlu0 %v3743
    %v3747 = vpop.xlane.xlu0 %3746
    %v3748 = vcvt.f32.s32 %v3745
    %v3749 = vcvt.f32.s32 %v3747
    %v3750 = vshll.u32 %v3749, 16
    %v3751 = vadd.s32 %v3750, %v3748
    %v3752 = vadd.s32 %v2953, %v2954
    %v3753 = vand.u32 %v3752, 65535
    %v3754 = vshrl.u32 %v3752, 16
    %v3755 = vcvt.s32.f32 %v3753
    %v3756 = vcvt.s32.f32 %v3754
    %3757 = vadd.xlane.f32.xlu0 %v3755
    %v3758 = vpop.xlane.xlu0 %3757
    %3759 = vadd.xlane.f32.xlu0 %v3756
    %v3760 = vpop.xlane.xlu0 %3759
    %v3761 = vcvt.f32.s32 %v3758
    %v3762 = vcvt.f32.s32 %v3760
    %v3763 = vshll.u32 %v3762, 16
    %v3764 = vadd.s32 %v3763, %v3761
    %v3765 = vadd.s32 %v2955, %v2956
    %v3766 = vand.u32 %v3765, 65535
    %v3767 = vshrl.u32 %v3765, 16
    %v3768 = vcvt.s32.f32 %v3766
    %v3769 = vcvt.s32.f32 %v3767
    %3770 = vadd.xlane.f32.xlu0 %v3768
    %v3771 = vpop.xlane.xlu0 %3770
    %3772 = vadd.xlane.f32.xlu0 %v3769
    %v3773 = vpop.xlane.xlu0 %3772
    %v3774 = vcvt.f32.s32 %v3771
    %v3775 = vcvt.f32.s32 %v3773
    %v3776 = vshll.u32 %v3775, 16
    %v3777 = vadd.s32 %v3776, %v3774
    %v3778 = vadd.s32 %v2957, %v2958
    %v3779 = vand.u32 %v3778, 65535
    %v3780 = vshrl.u32 %v3778, 16
    %v3781 = vcvt.s32.f32 %v3779
    %v3782 = vcvt.s32.f32 %v3780
    %3783 = vadd.xlane.f32.xlu0 %v3781
    %v3784 = vpop.xlane.xlu0 %3783
    %3785 = vadd.xlane.f32.xlu0 %v3782
    %v3786 = vpop.xlane.xlu0 %3785
    %v3787 = vcvt.f32.s32 %v3784
    %v3788 = vcvt.f32.s32 %v3786
    %v3789 = vshll.u32 %v3788, 16
    %v3790 = vadd.s32 %v3789, %v3787
    %v3791 = vld [vmem:[#allocation2] sm:$0x3]
    %v3792 = vsel %vm453, %v2771, %v2709
    %v3793 = vsel %vm453, %v2802, %v2740
    %v3794 = vsel %vm451, %v3792, 0
    %v3795 = vsel %vm451, %v3793, 0
    %v3796 = vadd.s32 %v3794, %v3795
    %v3797 = vand.u32 %v3796, 65535
    %v3798 = vshrl.u32 %v3796, 16
    %v3799 = vcvt.s32.f32 %v3797
    %v3800 = vcvt.s32.f32 %v3798
    %3801 = vadd.xlane.f32.xlu0 %v3799
    %v3802 = vpop.xlane.xlu0 %3801
    %3803 = vadd.xlane.f32.xlu0 %v3800
    %v3804 = vpop.xlane.xlu0 %3803
    %v3805 = vcvt.f32.s32 %v3802
    %v3806 = vcvt.f32.s32 %v3804
    %v3807 = vshll.u32 %v3806, 16
    %v3808 = vadd.s32 %v3807, %v3805
    %v3809 = vadd.s32 %v3791, %v3808
    %3810 = vset.pattern.permute.xlu0 0
    %3811 = vperm.xlu0 %3810, %v3791
    %v3812 = vpop.permute.xlu0 %3811
    %v3813 = vperm.slane %v2971, %v51
    %v3814 = vperm.slane %v2984, %v2650
    %v3815 = vsel %vm2652, %v3814, %v3813
    %v3816 = vperm.slane %v2997, %v2654
    %v3817 = vsel %vm2656, %v3816, %v3815
    %v3818 = vperm.slane %v3010, %v2658
    %v3819 = vsel %vm2660, %v3818, %v3817
    %v3820 = vperm.slane %v3023, %v2662
    %v3821 = vsel %vm2664, %v3820, %v3819
    %v3822 = vperm.slane %v3036, %v2666
    %v3823 = vsel %vm2668, %v3822, %v3821
    %v3824 = vperm.slane %v3049, %v2670
    %v3825 = vsel %vm2672, %v3824, %v3823
    %v3826 = vperm.slane %v3062, %v2674
    %v3827 = vsel %vm2676, %v3826, %v3825
    %v3828 = vperm.slane %v3075, %v2678
    %v3829 = vsel %vm2680, %v3828, %v3827
    %v3830 = vperm.slane %v3088, %v2682
    %v3831 = vsel %vm2684, %v3830, %v3829
    %v3832 = vperm.slane %v3101, %v2686
    %v3833 = vsel %vm2688, %v3832, %v3831
    %v3834 = vperm.slane %v3114, %v2690
    %v3835 = vsel %vm2692, %v3834, %v3833
    %v3836 = vperm.slane %v3127, %v2694
    %v3837 = vsel %vm2696, %v3836, %v3835
    %v3838 = vperm.slane %v3140, %v2698
    %v3839 = vsel %vm2700, %v3838, %v3837
    %v3840 = vperm.slane %v3153, %v2702
    %v3841 = vsel %vm2704, %v3840, %v3839
    %v3842 = vperm.slane %v3166, %v2706
    %v3843 = vsel %vm2708, %v3842, %v3841
    %v3844 = vperm.slane %v3179, %v51
    %v3845 = vperm.slane %v3192, %v2650
    %v3846 = vsel %vm2652, %v3845, %v3844
    %v3847 = vperm.slane %v3205, %v2654
    %v3848 = vsel %vm2656, %v3847, %v3846
    %v3849 = vperm.slane %v3218, %v2658
    %v3850 = vsel %vm2660, %v3849, %v3848
    %v3851 = vperm.slane %v3231, %v2662
    %v3852 = vsel %vm2664, %v3851, %v3850
    %v3853 = vperm.slane %v3244, %v2666
    %v3854 = vsel %vm2668, %v3853, %v3852
    %v3855 = vperm.slane %v3257, %v2670
    %v3856 = vsel %vm2672, %v3855, %v3854
    %v3857 = vperm.slane %v3270, %v2674
    %v3858 = vsel %vm2676, %v3857, %v3856
    %v3859 = vperm.slane %v3283, %v2678
    %v3860 = vsel %vm2680, %v3859, %v3858
    %v3861 = vperm.slane %v3296, %v2682
    %v3862 = vsel %vm2684, %v3861, %v3860
    %v3863 = vperm.slane %v3309, %v2686
    %v3864 = vsel %vm2688, %v3863, %v3862
    %v3865 = vperm.slane %v3322, %v2690
    %v3866 = vsel %vm2692, %v3865, %v3864
    %v3867 = vperm.slane %v3335, %v2694
    %v3868 = vsel %vm2696, %v3867, %v3866
    %v3869 = vperm.slane %v3348, %v2698
    %v3870 = vsel %vm2700, %v3869, %v3868
    %v3871 = vperm.slane %v3361, %v2702
    %v3872 = vsel %vm2704, %v3871, %v3870
    %v3873 = vperm.slane %v3374, %v2706
    %v3874 = vsel %vm2708, %v3873, %v3872
    %v3875 = vperm.slane %v3387, %v51
    %v3876 = vperm.slane %v3400, %v2650
    %v3877 = vsel %vm2652, %v3876, %v3875
    %v3878 = vperm.slane %v3413, %v2654
    %v3879 = vsel %vm2656, %v3878, %v3877
    %v3880 = vperm.slane %v3426, %v2658
    %v3881 = vsel %vm2660, %v3880, %v3879
    %v3882 = vperm.slane %v3439, %v2662
    %v3883 = vsel %vm2664, %v3882, %v3881
    %v3884 = vperm.slane %v3452, %v2666
    %v3885 = vsel %vm2668, %v3884, %v3883
    %v3886 = vperm.slane %v3465, %v2670
    %v3887 = vsel %vm2672, %v3886, %v3885
    %v3888 = vperm.slane %v3478, %v2674
    %v3889 = vsel %vm2676, %v3888, %v3887
    %v3890 = vperm.slane %v3491, %v2678
    %v3891 = vsel %vm2680, %v3890, %v3889
    %v3892 = vperm.slane %v3504, %v2682
    %v3893 = vsel %vm2684, %v3892, %v3891
    %v3894 = vperm.slane %v3517, %v2686
    %v3895 = vsel %vm2688, %v3894, %v3893
    %v3896 = vperm.slane %v3530, %v2690
    %v3897 = vsel %vm2692, %v3896, %v3895
    %v3898 = vperm.slane %v3543, %v2694
    %v3899 = vsel %vm2696, %v3898, %v3897
    %v3900 = vperm.slane %v3556, %v2698
    %v3901 = vsel %vm2700, %v3900, %v3899
    %v3902 = vperm.slane %v3569, %v2702
    %v3903 = vsel %vm2704, %v3902, %v3901
    %v3904 = vperm.slane %v3582, %v2706
    %v3905 = vsel %vm2708, %v3904, %v3903
    %v3906 = vperm.slane %v3595, %v51
    %v3907 = vperm.slane %v3608, %v2650
    %v3908 = vsel %vm2652, %v3907, %v3906
    %v3909 = vperm.slane %v3621, %v2654
    %v3910 = vsel %vm2656, %v3909, %v3908
    %v3911 = vperm.slane %v3634, %v2658
    %v3912 = vsel %vm2660, %v3911, %v3910
    %v3913 = vperm.slane %v3647, %v2662
    %v3914 = vsel %vm2664, %v3913, %v3912
    %v3915 = vperm.slane %v3660, %v2666
    %v3916 = vsel %vm2668, %v3915, %v3914
    %v3917 = vperm.slane %v3673, %v2670
    %v3918 = vsel %vm2672, %v3917, %v3916
    %v3919 = vperm.slane %v3686, %v2674
    %v3920 = vsel %vm2676, %v3919, %v3918
    %v3921 = vperm.slane %v3699, %v2678
    %v3922 = vsel %vm2680, %v3921, %v3920
    %v3923 = vperm.slane %v3712, %v2682
    %v3924 = vsel %vm2684, %v3923, %v3922
    %v3925 = vperm.slane %v3725, %v2686
    %v3926 = vsel %vm2688, %v3925, %v3924
    %v3927 = vperm.slane %v3738, %v2690
    %v3928 = vsel %vm2692, %v3927, %v3926
    %v3929 = vperm.slane %v3751, %v2694
    %v3930 = vsel %vm2696, %v3929, %v3928
    %v3931 = vperm.slane %v3764, %v2698
    %v3932 = vsel %vm2700, %v3931, %v3930
    %v3933 = vperm.slane %v3777, %v2702
    %v3934 = vsel %vm2704, %v3933, %v3932
    %v3935 = vperm.slane %v3790, %v2706
    %v3936 = vsel %vm2708, %v3935, %v3934
    %v3937 = vsel %vm453, %v3905, %v3843
    %v3938 = vsel %vm453, %v3936, %v3874
    %v3939 = vadd.s32 %v3812, %v3937
    %v3940 = vadd.s32 %v3812, %v3938
    %v3941 = vperm.slane %v3939, 0
    %v3942 = vlaneseq
    %v3943 = vshrl.u32 %v3942, 7
    %3945 = vset.pattern.permute.xlu0 %v3943
    %3946 = vperm.xlu0 %3945, %v3941
    %v3947 = vpop.permute.xlu0 %3946
    %v3948 = vlaneseq
    %v3949 = vshrl.u32 %v3948, 7
    %v3950 = vadd.s32 %v3949, 8
    %3951 = vset.pattern.permute.xlu0 %v3950
    %3952 = vperm.xlu0 %3951, %v3941
    %v3953 = vpop.permute.xlu0 %3952
    %v3954 = vlaneseq
    %v3955 = vshrl.u32 %v3954, 7
    %v3956 = vadd.s32 %v3955, 16
    %3957 = vset.pattern.permute.xlu0 %v3956
    %3958 = vperm.xlu0 %3957, %v3941
    %v3959 = vpop.permute.xlu0 %3958
    %v3960 = vlaneseq
    %v3961 = vshrl.u32 %v3960, 7
    %v3962 = vadd.s32 %v3961, 24
    %3963 = vset.pattern.permute.xlu0 %v3962
    %3964 = vperm.xlu0 %3963, %v3941
    %v3965 = vpop.permute.xlu0 %3964
    %v3966 = vlaneseq
    %v3967 = vshrl.u32 %v3966, 7
    %v3968 = vadd.s32 %v3967, 32
    %3969 = vset.pattern.permute.xlu0 %v3968
    %3970 = vperm.xlu0 %3969, %v3941
    %v3971 = vpop.permute.xlu0 %3970
    %v3972 = vlaneseq
    %v3973 = vshrl.u32 %v3972, 7
    %v3974 = vadd.s32 %v3973, 40
    %3975 = vset.pattern.permute.xlu0 %v3974
    %3976 = vperm.xlu0 %3975, %v3941
    %v3977 = vpop.permute.xlu0 %3976
    %v3978 = vlaneseq
    %v3979 = vshrl.u32 %v3978, 7
    %v3980 = vadd.s32 %v3979, 48
    %3981 = vset.pattern.permute.xlu0 %v3980
    %3982 = vperm.xlu0 %3981, %v3941
    %v3983 = vpop.permute.xlu0 %3982
    %v3984 = vlaneseq
    %v3985 = vshrl.u32 %v3984, 7
    %v3986 = vadd.s32 %v3985, 56
    %3987 = vset.pattern.permute.xlu0 %v3986
    %3988 = vperm.xlu0 %3987, %v3941
    %v3989 = vpop.permute.xlu0 %3988
    %v3990 = vlaneseq
    %v3991 = vshrl.u32 %v3990, 7
    %v3992 = vadd.s32 %v3991, 64
    %3993 = vset.pattern.permute.xlu0 %v3992
    %3994 = vperm.xlu0 %3993, %v3941
    %v3995 = vpop.permute.xlu0 %3994
    %v3996 = vlaneseq
    %v3997 = vshrl.u32 %v3996, 7
    %v3998 = vadd.s32 %v3997, 72
    %3999 = vset.pattern.permute.xlu0 %v3998
    %4000 = vperm.xlu0 %3999, %v3941
    %v4001 = vpop.permute.xlu0 %4000
    %v4002 = vlaneseq
    %v4003 = vshrl.u32 %v4002, 7
    %v4004 = vadd.s32 %v4003, 80
    %4005 = vset.pattern.permute.xlu0 %v4004
    %4006 = vperm.xlu0 %4005, %v3941
    %v4007 = vpop.permute.xlu0 %4006
    %v4008 = vlaneseq
    %v4009 = vshrl.u32 %v4008, 7
    %v4010 = vadd.s32 %v4009, 88
    %4011 = vset.pattern.permute.xlu0 %v4010
    %4012 = vperm.xlu0 %4011, %v3941
    %v4013 = vpop.permute.xlu0 %4012
    %v4014 = vlaneseq
    %v4015 = vshrl.u32 %v4014, 7
    %v4016 = vadd.s32 %v4015, 96
    %4017 = vset.pattern.permute.xlu0 %v4016
    %4018 = vperm.xlu0 %4017, %v3941
    %v4019 = vpop.permute.xlu0 %4018
    %v4020 = vlaneseq
    %v4021 = vshrl.u32 %v4020, 7
    %v4022 = vadd.s32 %v4021, 104
    %4023 = vset.pattern.permute.xlu0 %v4022
    %4024 = vperm.xlu0 %4023, %v3941
    %v4025 = vpop.permute.xlu0 %4024
    %v4026 = vlaneseq
    %v4027 = vshrl.u32 %v4026, 7
    %v4028 = vadd.s32 %v4027, 112
    %4029 = vset.pattern.permute.xlu0 %v4028
    %4030 = vperm.xlu0 %4029, %v3941
    %v4031 = vpop.permute.xlu0 %4030
    %v4032 = vlaneseq
    %v4033 = vshrl.u32 %v4032, 7
    %v4034 = vadd.s32 %v4033, 120
    %4035 = vset.pattern.permute.xlu0 %v4034
    %4036 = vperm.xlu0 %4035, %v3941
    %v4037 = vpop.permute.xlu0 %4036
    %v4038 = vperm.slane %v3940, 0
    %v4039 = vlaneseq
    %v4040 = vshrl.u32 %v4039, 7
    %4042 = vset.pattern.permute.xlu0 %v4040
    %4043 = vperm.xlu0 %4042, %v4038
    %v4044 = vpop.permute.xlu0 %4043
    %v4045 = vlaneseq
    %v4046 = vshrl.u32 %v4045, 7
    %v4047 = vadd.s32 %v4046, 8
    %4048 = vset.pattern.permute.xlu0 %v4047
    %4049 = vperm.xlu0 %4048, %v4038
    %v4050 = vpop.permute.xlu0 %4049
    %v4051 = vlaneseq
    %v4052 = vshrl.u32 %v4051, 7
    %v4053 = vadd.s32 %v4052, 16
    %4054 = vset.pattern.permute.xlu0 %v4053
    %4055 = vperm.xlu0 %4054, %v4038
    %v4056 = vpop.permute.xlu0 %4055
    %v4057 = vlaneseq
    %v4058 = vshrl.u32 %v4057, 7
    %v4059 = vadd.s32 %v4058, 24
    %4060 = vset.pattern.permute.xlu0 %v4059
    %4061 = vperm.xlu0 %4060, %v4038
    %v4062 = vpop.permute.xlu0 %4061
    %v4063 = vlaneseq
    %v4064 = vshrl.u32 %v4063, 7
    %v4065 = vadd.s32 %v4064, 32
    %4066 = vset.pattern.permute.xlu0 %v4065
    %4067 = vperm.xlu0 %4066, %v4038
    %v4068 = vpop.permute.xlu0 %4067
    %v4069 = vlaneseq
    %v4070 = vshrl.u32 %v4069, 7
    %v4071 = vadd.s32 %v4070, 40
    %4072 = vset.pattern.permute.xlu0 %v4071
    %4073 = vperm.xlu0 %4072, %v4038
    %v4074 = vpop.permute.xlu0 %4073
    %v4075 = vlaneseq
    %v4076 = vshrl.u32 %v4075, 7
    %v4077 = vadd.s32 %v4076, 48
    %4078 = vset.pattern.permute.xlu0 %v4077
    %4079 = vperm.xlu0 %4078, %v4038
    %v4080 = vpop.permute.xlu0 %4079
    %v4081 = vlaneseq
    %v4082 = vshrl.u32 %v4081, 7
    %v4083 = vadd.s32 %v4082, 56
    %4084 = vset.pattern.permute.xlu0 %v4083
    %4085 = vperm.xlu0 %4084, %v4038
    %v4086 = vpop.permute.xlu0 %4085
    %v4087 = vlaneseq
    %v4088 = vshrl.u32 %v4087, 7
    %v4089 = vadd.s32 %v4088, 64
    %4090 = vset.pattern.permute.xlu0 %v4089
    %4091 = vperm.xlu0 %4090, %v4038
    %v4092 = vpop.permute.xlu0 %4091
    %v4093 = vlaneseq
    %v4094 = vshrl.u32 %v4093, 7
    %v4095 = vadd.s32 %v4094, 72
    %4096 = vset.pattern.permute.xlu0 %v4095
    %4097 = vperm.xlu0 %4096, %v4038
    %v4098 = vpop.permute.xlu0 %4097
    %v4099 = vlaneseq
    %v4100 = vshrl.u32 %v4099, 7
    %v4101 = vadd.s32 %v4100, 80
    %4102 = vset.pattern.permute.xlu0 %v4101
    %4103 = vperm.xlu0 %4102, %v4038
    %v4104 = vpop.permute.xlu0 %4103
    %v4105 = vlaneseq
    %v4106 = vshrl.u32 %v4105, 7
    %v4107 = vadd.s32 %v4106, 88
    %4108 = vset.pattern.permute.xlu0 %v4107
    %4109 = vperm.xlu0 %4108, %v4038
    %v4110 = vpop.permute.xlu0 %4109
    %v4111 = vlaneseq
    %v4112 = vshrl.u32 %v4111, 7
    %v4113 = vadd.s32 %v4112, 96
    %4114 = vset.pattern.permute.xlu0 %v4113
    %4115 = vperm.xlu0 %4114, %v4038
    %v4116 = vpop.permute.xlu0 %4115
    %v4117 = vlaneseq
    %v4118 = vshrl.u32 %v4117, 7
    %v4119 = vadd.s32 %v4118, 104
    %4120 = vset.pattern.permute.xlu0 %v4119
    %4121 = vperm.xlu0 %4120, %v4038
    %v4122 = vpop.permute.xlu0 %4121
    %v4123 = vlaneseq
    %v4124 = vshrl.u32 %v4123, 7
    %v4125 = vadd.s32 %v4124, 112
    %4126 = vset.pattern.permute.xlu0 %v4125
    %4127 = vperm.xlu0 %4126, %v4038
    %v4128 = vpop.permute.xlu0 %4127
    %v4129 = vlaneseq
    %v4130 = vshrl.u32 %v4129, 7
    %v4131 = vadd.s32 %v4130, 120
    %4132 = vset.pattern.permute.xlu0 %v4131
    %4133 = vperm.xlu0 %4132, %v4038
    %v4134 = vpop.permute.xlu0 %4133
    %v4135 = vperm.slane %v3939, 1
    %v4136 = vlaneseq
    %v4137 = vshrl.u32 %v4136, 7
    %4139 = vset.pattern.permute.xlu0 %v4137
    %4140 = vperm.xlu0 %4139, %v4135
    %v4141 = vpop.permute.xlu0 %4140
    %v4142 = vlaneseq
    %v4143 = vshrl.u32 %v4142, 7
    %v4144 = vadd.s32 %v4143, 8
    %4145 = vset.pattern.permute.xlu0 %v4144
    %4146 = vperm.xlu0 %4145, %v4135
    %v4147 = vpop.permute.xlu0 %4146
    %v4148 = vlaneseq
    %v4149 = vshrl.u32 %v4148, 7
    %v4150 = vadd.s32 %v4149, 16
    %4151 = vset.pattern.permute.xlu0 %v4150
    %4152 = vperm.xlu0 %4151, %v4135
    %v4153 = vpop.permute.xlu0 %4152
    %v4154 = vlaneseq
    %v4155 = vshrl.u32 %v4154, 7
    %v4156 = vadd.s32 %v4155, 24
    %4157 = vset.pattern.permute.xlu0 %v4156
    %4158 = vperm.xlu0 %4157, %v4135
    %v4159 = vpop.permute.xlu0 %4158
    %v4160 = vlaneseq
    %v4161 = vshrl.u32 %v4160, 7
    %v4162 = vadd.s32 %v4161, 32
    %4163 = vset.pattern.permute.xlu0 %v4162
    %4164 = vperm.xlu0 %4163, %v4135
    %v4165 = vpop.permute.xlu0 %4164
    %v4166 = vlaneseq
    %v4167 = vshrl.u32 %v4166, 7
    %v4168 = vadd.s32 %v4167, 40
    %4169 = vset.pattern.permute.xlu0 %v4168
    %4170 = vperm.xlu0 %4169, %v4135
    %v4171 = vpop.permute.xlu0 %4170
    %v4172 = vlaneseq
    %v4173 = vshrl.u32 %v4172, 7
    %v4174 = vadd.s32 %v4173, 48
    %4175 = vset.pattern.permute.xlu0 %v4174
    %4176 = vperm.xlu0 %4175, %v4135
    %v4177 = vpop.permute.xlu0 %4176
    %v4178 = vlaneseq
    %v4179 = vshrl.u32 %v4178, 7
    %v4180 = vadd.s32 %v4179, 56
    %4181 = vset.pattern.permute.xlu0 %v4180
    %4182 = vperm.xlu0 %4181, %v4135
    %v4183 = vpop.permute.xlu0 %4182
    %v4184 = vlaneseq
    %v4185 = vshrl.u32 %v4184, 7
    %v4186 = vadd.s32 %v4185, 64
    %4187 = vset.pattern.permute.xlu0 %v4186
    %4188 = vperm.xlu0 %4187, %v4135
    %v4189 = vpop.permute.xlu0 %4188
    %v4190 = vlaneseq
    %v4191 = vshrl.u32 %v4190, 7
    %v4192 = vadd.s32 %v4191, 72
    %4193 = vset.pattern.permute.xlu0 %v4192
    %4194 = vperm.xlu0 %4193, %v4135
    %v4195 = vpop.permute.xlu0 %4194
    %v4196 = vlaneseq
    %v4197 = vshrl.u32 %v4196, 7
    %v4198 = vadd.s32 %v4197, 80
    %4199 = vset.pattern.permute.xlu0 %v4198
    %4200 = vperm.xlu0 %4199, %v4135
    %v4201 = vpop.permute.xlu0 %4200
    %v4202 = vlaneseq
    %v4203 = vshrl.u32 %v4202, 7
    %v4204 = vadd.s32 %v4203, 88
    %4205 = vset.pattern.permute.xlu0 %v4204
    %4206 = vperm.xlu0 %4205, %v4135
    %v4207 = vpop.permute.xlu0 %4206
    %v4208 = vlaneseq
    %v4209 = vshrl.u32 %v4208, 7
    %v4210 = vadd.s32 %v4209, 96
    %4211 = vset.pattern.permute.xlu0 %v4210
    %4212 = vperm.xlu0 %4211, %v4135
    %v4213 = vpop.permute.xlu0 %4212
    %v4214 = vlaneseq
    %v4215 = vshrl.u32 %v4214, 7
    %v4216 = vadd.s32 %v4215, 104
    %4217 = vset.pattern.permute.xlu0 %v4216
    %4218 = vperm.xlu0 %4217, %v4135
    %v4219 = vpop.permute.xlu0 %4218
    %v4220 = vlaneseq
    %v4221 = vshrl.u32 %v4220, 7
    %v4222 = vadd.s32 %v4221, 112
    %4223 = vset.pattern.permute.xlu0 %v4222
    %4224 = vperm.xlu0 %4223, %v4135
    %v4225 = vpop.permute.xlu0 %4224
    %v4226 = vlaneseq
    %v4227 = vshrl.u32 %v4226, 7
    %v4228 = vadd.s32 %v4227, 120
    %4229 = vset.pattern.permute.xlu0 %v4228
    %4230 = vperm.xlu0 %4229, %v4135
    %v4231 = vpop.permute.xlu0 %4230
    %v4232 = vperm.slane %v3940, 1
    %v4233 = vlaneseq
    %v4234 = vshrl.u32 %v4233, 7
    %4236 = vset.pattern.permute.xlu0 %v4234
    %4237 = vperm.xlu0 %4236, %v4232
    %v4238 = vpop.permute.xlu0 %4237
    %v4239 = vlaneseq
    %v4240 = vshrl.u32 %v4239, 7
    %v4241 = vadd.s32 %v4240, 8
    %4242 = vset.pattern.permute.xlu0 %v4241
    %4243 = vperm.xlu0 %4242, %v4232
    %v4244 = vpop.permute.xlu0 %4243
    %v4245 = vlaneseq
    %v4246 = vshrl.u32 %v4245, 7
    %v4247 = vadd.s32 %v4246, 16
    %4248 = vset.pattern.permute.xlu0 %v4247
    %4249 = vperm.xlu0 %4248, %v4232
    %v4250 = vpop.permute.xlu0 %4249
    %v4251 = vlaneseq
    %v4252 = vshrl.u32 %v4251, 7
    %v4253 = vadd.s32 %v4252, 24
    %4254 = vset.pattern.permute.xlu0 %v4253
    %4255 = vperm.xlu0 %4254, %v4232
    %v4256 = vpop.permute.xlu0 %4255
    %v4257 = vlaneseq
    %v4258 = vshrl.u32 %v4257, 7
    %v4259 = vadd.s32 %v4258, 32
    %4260 = vset.pattern.permute.xlu0 %v4259
    %4261 = vperm.xlu0 %4260, %v4232
    %v4262 = vpop.permute.xlu0 %4261
    %v4263 = vlaneseq
    %v4264 = vshrl.u32 %v4263, 7
    %v4265 = vadd.s32 %v4264, 40
    %4266 = vset.pattern.permute.xlu0 %v4265
    %4267 = vperm.xlu0 %4266, %v4232
    %v4268 = vpop.permute.xlu0 %4267
    %v4269 = vlaneseq
    %v4270 = vshrl.u32 %v4269, 7
    %v4271 = vadd.s32 %v4270, 48
    %4272 = vset.pattern.permute.xlu0 %v4271
    %4273 = vperm.xlu0 %4272, %v4232
    %v4274 = vpop.permute.xlu0 %4273
    %v4275 = vlaneseq
    %v4276 = vshrl.u32 %v4275, 7
    %v4277 = vadd.s32 %v4276, 56
    %4278 = vset.pattern.permute.xlu0 %v4277
    %4279 = vperm.xlu0 %4278, %v4232
    %v4280 = vpop.permute.xlu0 %4279
    %v4281 = vlaneseq
    %v4282 = vshrl.u32 %v4281, 7
    %v4283 = vadd.s32 %v4282, 64
    %4284 = vset.pattern.permute.xlu0 %v4283
    %4285 = vperm.xlu0 %4284, %v4232
    %v4286 = vpop.permute.xlu0 %4285
    %v4287 = vlaneseq
    %v4288 = vshrl.u32 %v4287, 7
    %v4289 = vadd.s32 %v4288, 72
    %4290 = vset.pattern.permute.xlu0 %v4289
    %4291 = vperm.xlu0 %4290, %v4232
    %v4292 = vpop.permute.xlu0 %4291
    %v4293 = vlaneseq
    %v4294 = vshrl.u32 %v4293, 7
    %v4295 = vadd.s32 %v4294, 80
    %4296 = vset.pattern.permute.xlu0 %v4295
    %4297 = vperm.xlu0 %4296, %v4232
    %v4298 = vpop.permute.xlu0 %4297
    %v4299 = vlaneseq
    %v4300 = vshrl.u32 %v4299, 7
    %v4301 = vadd.s32 %v4300, 88
    %4302 = vset.pattern.permute.xlu0 %v4301
    %4303 = vperm.xlu0 %4302, %v4232
    %v4304 = vpop.permute.xlu0 %4303
    %v4305 = vlaneseq
    %v4306 = vshrl.u32 %v4305, 7
    %v4307 = vadd.s32 %v4306, 96
    %4308 = vset.pattern.permute.xlu0 %v4307
    %4309 = vperm.xlu0 %4308, %v4232
    %v4310 = vpop.permute.xlu0 %4309
    %v4311 = vlaneseq
    %v4312 = vshrl.u32 %v4311, 7
    %v4313 = vadd.s32 %v4312, 104
    %4314 = vset.pattern.permute.xlu0 %v4313
    %4315 = vperm.xlu0 %4314, %v4232
    %v4316 = vpop.permute.xlu0 %4315
    %v4317 = vlaneseq
    %v4318 = vshrl.u32 %v4317, 7
    %v4319 = vadd.s32 %v4318, 112
    %4320 = vset.pattern.permute.xlu0 %v4319
    %4321 = vperm.xlu0 %4320, %v4232
    %v4322 = vpop.permute.xlu0 %4321
    %v4323 = vlaneseq
    %v4324 = vshrl.u32 %v4323, 7
    %v4325 = vadd.s32 %v4324, 120
    %4326 = vset.pattern.permute.xlu0 %v4325
    %4327 = vperm.xlu0 %4326, %v4232
    %v4328 = vpop.permute.xlu0 %4327
    %v4329 = vsel %vm2232, %v3947, 4294967295
    %v4330 = vsel %vm2233, %v3953, 4294967295
    %v4331 = vsel %vm2234, %v3959, 4294967295
    %v4332 = vsel %vm2235, %v3965, 4294967295
    %v4333 = vsel %vm2236, %v3971, 4294967295
    %v4334 = vsel %vm2237, %v3977, 4294967295
    %v4335 = vsel %vm2238, %v3983, 4294967295
    %v4336 = vsel %vm2239, %v3989, 4294967295
    %v4337 = vsel %vm2240, %v3995, 4294967295
    %v4338 = vsel %vm2241, %v4001, 4294967295
    %v4339 = vsel %vm2242, %v4007, 4294967295
    %v4340 = vsel %vm2243, %v4013, 4294967295
    %v4341 = vsel %vm2244, %v4019, 4294967295
    %v4342 = vsel %vm2245, %v4025, 4294967295
    %v4343 = vsel %vm2246, %v4031, 4294967295
    %v4344 = vsel %vm2247, %v4037, 4294967295
    %v4345 = vsel %vm2248, %v4044, 4294967295
    %v4346 = vsel %vm2249, %v4050, 4294967295
    %v4347 = vsel %vm2250, %v4056, 4294967295
    %v4348 = vsel %vm2251, %v4062, 4294967295
    %v4349 = vsel %vm2252, %v4068, 4294967295
    %v4350 = vsel %vm2253, %v4074, 4294967295
    %v4351 = vsel %vm2254, %v4080, 4294967295
    %v4352 = vsel %vm2255, %v4086, 4294967295
    %v4353 = vsel %vm2256, %v4092, 4294967295
    %v4354 = vsel %vm2257, %v4098, 4294967295
    %v4355 = vsel %vm2258, %v4104, 4294967295
    %v4356 = vsel %vm2259, %v4110, 4294967295
    %v4357 = vsel %vm2260, %v4116, 4294967295
    %v4358 = vsel %vm2261, %v4122, 4294967295
    %v4359 = vsel %vm2262, %v4128, 4294967295
    %v4360 = vsel %vm2263, %v4134, 4294967295
    %v4361 = vsel %vm2264, %v4141, 4294967295
    %v4362 = vsel %vm2265, %v4147, 4294967295
    %v4363 = vsel %vm2266, %v4153, 4294967295
    %v4364 = vsel %vm2267, %v4159, 4294967295
    %v4365 = vsel %vm2268, %v4165, 4294967295
    %v4366 = vsel %vm2269, %v4171, 4294967295
    %v4367 = vsel %vm2270, %v4177, 4294967295
    %v4368 = vsel %vm2271, %v4183, 4294967295
    %v4369 = vsel %vm2272, %v4189, 4294967295
    %v4370 = vsel %vm2273, %v4195, 4294967295
    %v4371 = vsel %vm2274, %v4201, 4294967295
    %v4372 = vsel %vm2275, %v4207, 4294967295
    %v4373 = vsel %vm2276, %v4213, 4294967295
    %v4374 = vsel %vm2277, %v4219, 4294967295
    %v4375 = vsel %vm2278, %v4225, 4294967295
    %v4376 = vsel %vm2279, %v4231, 4294967295
    %v4377 = vsel %vm2280, %v4238, 4294967295
    %v4378 = vsel %vm2281, %v4244, 4294967295
    %v4379 = vsel %vm2282, %v4250, 4294967295
    %v4380 = vsel %vm2283, %v4256, 4294967295
    %v4381 = vsel %vm2284, %v4262, 4294967295
    %v4382 = vsel %vm2285, %v4268, 4294967295
    %v4383 = vsel %vm2286, %v4274, 4294967295
    %v4384 = vsel %vm2287, %v4280, 4294967295
    %v4385 = vsel %vm2288, %v4286, 4294967295
    %v4386 = vsel %vm2289, %v4292, 4294967295
    %v4387 = vsel %vm2290, %v4298, 4294967295
    %v4388 = vsel %vm2291, %v4304, 4294967295
    %v4389 = vsel %vm2292, %v4310, 4294967295
    %v4390 = vsel %vm2293, %v4316, 4294967295
    %v4391 = vsel %vm2294, %v4322, 4294967295
    %v4392 = vsel %vm2295, %v4328, 4294967295
    %v4393 = vrot.slane %v4329, 2
    %v4394 = vrot.slane %v4329, 4
    %v4395 = vrot.slane %v4329, 6
    %v4396 = vrot.slane %v4330, 2
    %v4397 = vrot.slane %v4330, 4
    %v4398 = vrot.slane %v4330, 6
    %v4399 = vrot.slane %v4331, 2
    %v4400 = vrot.slane %v4331, 4
    %v4401 = vrot.slane %v4331, 6
    %v4402 = vrot.slane %v4332, 2
    %v4403 = vrot.slane %v4332, 4
    %v4404 = vrot.slane %v4332, 6
    %v4405 = vrot.slane %v4333, 2
    %v4406 = vrot.slane %v4333, 4
    %v4407 = vrot.slane %v4333, 6
    %v4408 = vrot.slane %v4334, 2
    %v4409 = vrot.slane %v4334, 4
    %v4410 = vrot.slane %v4334, 6
    %v4411 = vrot.slane %v4335, 2
    %v4412 = vrot.slane %v4335, 4
    %v4413 = vrot.slane %v4335, 6
    %v4414 = vrot.slane %v4336, 2
    %v4415 = vrot.slane %v4336, 4
    %v4416 = vrot.slane %v4336, 6
    %v4417 = vrot.slane %v4337, 2
    %v4418 = vrot.slane %v4337, 4
    %v4419 = vrot.slane %v4337, 6
    %v4420 = vrot.slane %v4338, 2
    %v4421 = vrot.slane %v4338, 4
    %v4422 = vrot.slane %v4338, 6
    %v4423 = vrot.slane %v4339, 2
    %v4424 = vrot.slane %v4339, 4
    %v4425 = vrot.slane %v4339, 6
    %v4426 = vrot.slane %v4340, 2
    %v4427 = vrot.slane %v4340, 4
    %v4428 = vrot.slane %v4340, 6
    %v4429 = vrot.slane %v4341, 2
    %v4430 = vrot.slane %v4341, 4
    %v4431 = vrot.slane %v4341, 6
    %v4432 = vrot.slane %v4342, 2
    %v4433 = vrot.slane %v4342, 4
    %v4434 = vrot.slane %v4342, 6
    %v4435 = vrot.slane %v4343, 2
    %v4436 = vrot.slane %v4343, 4
    %v4437 = vrot.slane %v4343, 6
    %v4438 = vrot.slane %v4344, 2
    %v4439 = vrot.slane %v4344, 4
    %v4440 = vrot.slane %v4344, 6
    %v4441 = vrot.slane %v4345, 2
    %v4442 = vrot.slane %v4345, 4
    %v4443 = vrot.slane %v4345, 6
    %v4444 = vrot.slane %v4346, 2
    %v4445 = vrot.slane %v4346, 4
    %v4446 = vrot.slane %v4346, 6
    %v4447 = vrot.slane %v4347, 2
    %v4448 = vrot.slane %v4347, 4
    %v4449 = vrot.slane %v4347, 6
    %v4450 = vrot.slane %v4348, 2
    %v4451 = vrot.slane %v4348, 4
    %v4452 = vrot.slane %v4348, 6
    %v4453 = vrot.slane %v4349, 2
    %v4454 = vrot.slane %v4349, 4
    %v4455 = vrot.slane %v4349, 6
    %v4456 = vrot.slane %v4350, 2
    %v4457 = vrot.slane %v4350, 4
    %v4458 = vrot.slane %v4350, 6
    %v4459 = vrot.slane %v4351, 2
    %v4460 = vrot.slane %v4351, 4
    %v4461 = vrot.slane %v4351, 6
    %v4462 = vrot.slane %v4352, 2
    %v4463 = vrot.slane %v4352, 4
    %v4464 = vrot.slane %v4352, 6
    %v4465 = vrot.slane %v4353, 2
    %v4466 = vrot.slane %v4353, 4
    %v4467 = vrot.slane %v4353, 6
    %v4468 = vrot.slane %v4354, 2
    %v4469 = vrot.slane %v4354, 4
    %v4470 = vrot.slane %v4354, 6
    %v4471 = vrot.slane %v4355, 2
    %v4472 = vrot.slane %v4355, 4
    %v4473 = vrot.slane %v4355, 6
    %v4474 = vrot.slane %v4356, 2
    %v4475 = vrot.slane %v4356, 4
    %v4476 = vrot.slane %v4356, 6
    %v4477 = vrot.slane %v4357, 2
    %v4478 = vrot.slane %v4357, 4
    %v4479 = vrot.slane %v4357, 6
    %v4480 = vrot.slane %v4358, 2
    %v4481 = vrot.slane %v4358, 4
    %v4482 = vrot.slane %v4358, 6
    %v4483 = vrot.slane %v4359, 2
    %v4484 = vrot.slane %v4359, 4
    %v4485 = vrot.slane %v4359, 6
    %v4486 = vrot.slane %v4360, 2
    %v4487 = vrot.slane %v4360, 4
    %v4488 = vrot.slane %v4360, 6
    %v4489 = vrot.slane %v4361, 2
    %v4490 = vrot.slane %v4361, 4
    %v4491 = vrot.slane %v4361, 6
    %v4492 = vrot.slane %v4362, 2
    %v4493 = vrot.slane %v4362, 4
    %v4494 = vrot.slane %v4362, 6
    %v4495 = vrot.slane %v4363, 2
    %v4496 = vrot.slane %v4363, 4
    %v4497 = vrot.slane %v4363, 6
    %v4498 = vrot.slane %v4364, 2
    %v4499 = vrot.slane %v4364, 4
    %v4500 = vrot.slane %v4364, 6
    %v4501 = vrot.slane %v4365, 2
    %v4502 = vrot.slane %v4365, 4
    %v4503 = vrot.slane %v4365, 6
    %v4504 = vrot.slane %v4366, 2
    %v4505 = vrot.slane %v4366, 4
    %v4506 = vrot.slane %v4366, 6
    %v4507 = vrot.slane %v4367, 2
    %v4508 = vrot.slane %v4367, 4
    %v4509 = vrot.slane %v4367, 6
    %v4510 = vrot.slane %v4368, 2
    %v4511 = vrot.slane %v4368, 4
    %v4512 = vrot.slane %v4368, 6
    %v4513 = vrot.slane %v4369, 2
    %v4514 = vrot.slane %v4369, 4
    %v4515 = vrot.slane %v4369, 6
    %v4516 = vrot.slane %v4370, 2
    %v4517 = vrot.slane %v4370, 4
    %v4518 = vrot.slane %v4370, 6
    %v4519 = vrot.slane %v4371, 2
    %v4520 = vrot.slane %v4371, 4
    %v4521 = vrot.slane %v4371, 6
    %v4522 = vrot.slane %v4372, 2
    %v4523 = vrot.slane %v4372, 4
    %v4524 = vrot.slane %v4372, 6
    %v4525 = vrot.slane %v4373, 2
    %v4526 = vrot.slane %v4373, 4
    %v4527 = vrot.slane %v4373, 6
    %v4528 = vrot.slane %v4374, 2
    %v4529 = vrot.slane %v4374, 4
    %v4530 = vrot.slane %v4374, 6
    %v4531 = vrot.slane %v4375, 2
    %v4532 = vrot.slane %v4375, 4
    %v4533 = vrot.slane %v4375, 6
    %v4534 = vrot.slane %v4376, 2
    %v4535 = vrot.slane %v4376, 4
    %v4536 = vrot.slane %v4376, 6
    %v4537 = vrot.slane %v4377, 2
    %v4538 = vrot.slane %v4377, 4
    %v4539 = vrot.slane %v4377, 6
    %v4540 = vrot.slane %v4378, 2
    %v4541 = vrot.slane %v4378, 4
    %v4542 = vrot.slane %v4378, 6
    %v4543 = vrot.slane %v4379, 2
    %v4544 = vrot.slane %v4379, 4
    %v4545 = vrot.slane %v4379, 6
    %v4546 = vrot.slane %v4380, 2
    %v4547 = vrot.slane %v4380, 4
    %v4548 = vrot.slane %v4380, 6
    %v4549 = vrot.slane %v4381, 2
    %v4550 = vrot.slane %v4381, 4
    %v4551 = vrot.slane %v4381, 6
    %v4552 = vrot.slane %v4382, 2
    %v4553 = vrot.slane %v4382, 4
    %v4554 = vrot.slane %v4382, 6
    %v4555 = vrot.slane %v4383, 2
    %v4556 = vrot.slane %v4383, 4
    %v4557 = vrot.slane %v4383, 6
    %v4558 = vrot.slane %v4384, 2
    %v4559 = vrot.slane %v4384, 4
    %v4560 = vrot.slane %v4384, 6
    %v4561 = vrot.slane %v4385, 2
    %v4562 = vrot.slane %v4385, 4
    %v4563 = vrot.slane %v4385, 6
    %v4564 = vrot.slane %v4386, 2
    %v4565 = vrot.slane %v4386, 4
    %v4566 = vrot.slane %v4386, 6
    %v4567 = vrot.slane %v4387, 2
    %v4568 = vrot.slane %v4387, 4
    %v4569 = vrot.slane %v4387, 6
    %v4570 = vrot.slane %v4388, 2
    %v4571 = vrot.slane %v4388, 4
    %v4572 = vrot.slane %v4388, 6
    %v4573 = vrot.slane %v4389, 2
    %v4574 = vrot.slane %v4389, 4
    %v4575 = vrot.slane %v4389, 6
    %v4576 = vrot.slane %v4390, 2
    %v4577 = vrot.slane %v4390, 4
    %v4578 = vrot.slane %v4390, 6
    %v4579 = vrot.slane %v4391, 2
    %v4580 = vrot.slane %v4391, 4
    %v4581 = vrot.slane %v4391, 6
    %v4582 = vrot.slane %v4392, 2
    %v4583 = vrot.slane %v4392, 4
    %v4584 = vrot.slane %v4392, 6
    %4585 = vst [vmem:[#allocation1] ss:$4 sm:$0xff] %v4329
    %s4586 = scalar_lea.vmem [#allocation1], 1
    %4587 = vst [vmem:[%s4586] ss:$4 sm:$0xff] %v4393
    %s4588 = scalar_lea.vmem [#allocation1], 2
    %4589 = vst [vmem:[%s4588] ss:$4 sm:$0xff] %v4394
    %s4590 = scalar_lea.vmem [#allocation1], 3
    %4591 = vst [vmem:[%s4590] ss:$4 sm:$0xff] %v4395
    %s4592 = scalar_lea.vmem [#allocation1], 32
    %4593 = vst [vmem:[%s4592] ss:$4 sm:$0xff] %v4330
    %s4594 = scalar_lea.vmem [#allocation1], 33
    %4595 = vst [vmem:[%s4594] ss:$4 sm:$0xff] %v4396
    %s4596 = scalar_lea.vmem [#allocation1], 34
    %4597 = vst [vmem:[%s4596] ss:$4 sm:$0xff] %v4397
    %s4598 = scalar_lea.vmem [#allocation1], 35
    %4599 = vst [vmem:[%s4598] ss:$4 sm:$0xff] %v4398
    %v4600 = vld.sshfl [vmem:[#allocation1] sm:$0xff pattern:$0x73625140]
    %v4601 = vld.sshfl [vmem:[#allocation1 + $0x20] sm:$0xff pattern:$0x73625140]
    %4602 = vst [vmem:[#allocation1] ss:$4 sm:$0xff] %v4331
    %4603 = vst [vmem:[%s4586] ss:$4 sm:$0xff] %v4399
    %4604 = vst [vmem:[%s4588] ss:$4 sm:$0xff] %v4400
    %4605 = vst [vmem:[%s4590] ss:$4 sm:$0xff] %v4401
    %4606 = vst [vmem:[%s4592] ss:$4 sm:$0xff] %v4332
    %4607 = vst [vmem:[%s4594] ss:$4 sm:$0xff] %v4402
    %4608 = vst [vmem:[%s4596] ss:$4 sm:$0xff] %v4403
    %4609 = vst [vmem:[%s4598] ss:$4 sm:$0xff] %v4404
    %v4610 = vld.sshfl [vmem:[#allocation1] sm:$0xff pattern:$0x73625140]
    %v4611 = vld.sshfl [vmem:[#allocation1 + $0x20] sm:$0xff pattern:$0x73625140]
    %4612 = vst [vmem:[#allocation1] ss:$4 sm:$0xff] %v4333
    %4613 = vst [vmem:[%s4586] ss:$4 sm:$0xff] %v4405
    %4614 = vst [vmem:[%s4588] ss:$4 sm:$0xff] %v4406
    %4615 = vst [vmem:[%s4590] ss:$4 sm:$0xff] %v4407
    %4616 = vst [vmem:[%s4592] ss:$4 sm:$0xff] %v4334
    %4617 = vst [vmem:[%s4594] ss:$4 sm:$0xff] %v4408
    %4618 = vst [vmem:[%s4596] ss:$4 sm:$0xff] %v4409
    %4619 = vst [vmem:[%s4598] ss:$4 sm:$0xff] %v4410
    %v4620 = vld.sshfl [vmem:[#allocation1] sm:$0xff pattern:$0x73625140]
    %v4621 = vld.sshfl [vmem:[#allocation1 + $0x20] sm:$0xff pattern:$0x73625140]
    %4622 = vst [vmem:[#allocation1] ss:$4 sm:$0xff] %v4335
    %4623 = vst [vmem:[%s4586] ss:$4 sm:$0xff] %v4411
    %4624 = vst [vmem:[%s4588] ss:$4 sm:$0xff] %v4412
    %4625 = vst [vmem:[%s4590] ss:$4 sm:$0xff] %v4413
    %4626 = vst [vmem:[%s4592] ss:$4 sm:$0xff] %v4336
    %4627 = vst [vmem:[%s4594] ss:$4 sm:$0xff] %v4414
    %4628 = vst [vmem:[%s4596] ss:$4 sm:$0xff] %v4415
    %4629 = vst [vmem:[%s4598] ss:$4 sm:$0xff] %v4416
    %v4630 = vld.sshfl [vmem:[#allocation1] sm:$0xff pattern:$0x73625140]
    %v4631 = vld.sshfl [vmem:[#allocation1 + $0x20] sm:$0xff pattern:$0x73625140]
    %4632 = vst [vmem:[#allocation1] ss:$4 sm:$0xff] %v4337
    %4633 = vst [vmem:[%s4586] ss:$4 sm:$0xff] %v4417
    %4634 = vst [vmem:[%s4588] ss:$4 sm:$0xff] %v4418
    %4635 = vst [vmem:[%s4590] ss:$4 sm:$0xff] %v4419
    %4636 = vst [vmem:[%s4592] ss:$4 sm:$0xff] %v4338
    %4637 = vst [vmem:[%s4594] ss:$4 sm:$0xff] %v4420
    %4638 = vst [vmem:[%s4596] ss:$4 sm:$0xff] %v4421
    %4639 = vst [vmem:[%s4598] ss:$4 sm:$0xff] %v4422
    %v4640 = vld.sshfl [vmem:[#allocation1] sm:$0xff pattern:$0x73625140]
    %v4641 = vld.sshfl [vmem:[#allocation1 + $0x20] sm:$0xff pattern:$0x73625140]
    %4642 = vst [vmem:[#allocation1] ss:$4 sm:$0xff] %v4339
    %4643 = vst [vmem:[%s4586] ss:$4 sm:$0xff] %v4423
    %4644 = vst [vmem:[%s4588] ss:$4 sm:$0xff] %v4424
    %4645 = vst [vmem:[%s4590] ss:$4 sm:$0xff] %v4425
    %4646 = vst [vmem:[%s4592] ss:$4 sm:$0xff] %v4340
    %4647 = vst [vmem:[%s4594] ss:$4 sm:$0xff] %v4426
    %4648 = vst [vmem:[%s4596] ss:$4 sm:$0xff] %v4427
    %4649 = vst [vmem:[%s4598] ss:$4 sm:$0xff] %v4428
    %v4650 = vld.sshfl [vmem:[#allocation1] sm:$0xff pattern:$0x73625140]
    %v4651 = vld.sshfl [vmem:[#allocation1 + $0x20] sm:$0xff pattern:$0x73625140]
    %4652 = vst [vmem:[#allocation1] ss:$4 sm:$0xff] %v4341
    %4653 = vst [vmem:[%s4586] ss:$4 sm:$0xff] %v4429
    %4654 = vst [vmem:[%s4588] ss:$4 sm:$0xff] %v4430
    %4655 = vst [vmem:[%s4590] ss:$4 sm:$0xff] %v4431
    %4656 = vst [vmem:[%s4592] ss:$4 sm:$0xff] %v4342
    %4657 = vst [vmem:[%s4594] ss:$4 sm:$0xff] %v4432
    %4658 = vst [vmem:[%s4596] ss:$4 sm:$0xff] %v4433
    %4659 = vst [vmem:[%s4598] ss:$4 sm:$0xff] %v4434
    %v4660 = vld.sshfl [vmem:[#allocation1] sm:$0xff pattern:$0x73625140]
    %v4661 = vld.sshfl [vmem:[#allocation1 + $0x20] sm:$0xff pattern:$0x73625140]
    %4662 = vst [vmem:[#allocation1] ss:$4 sm:$0xff] %v4343
    %4663 = vst [vmem:[%s4586] ss:$4 sm:$0xff] %v4435
    %4664 = vst [vmem:[%s4588] ss:$4 sm:$0xff] %v4436
    %4665 = vst [vmem:[%s4590] ss:$4 sm:$0xff] %v4437
    %4666 = vst [vmem:[%s4592] ss:$4 sm:$0xff] %v4344
    %4667 = vst [vmem:[%s4594] ss:$4 sm:$0xff] %v4438
    %4668 = vst [vmem:[%s4596] ss:$4 sm:$0xff] %v4439
    %4669 = vst [vmem:[%s4598] ss:$4 sm:$0xff] %v4440
    %v4670 = vld.sshfl [vmem:[#allocation1] sm:$0xff pattern:$0x73625140]
    %v4671 = vld.sshfl [vmem:[#allocation1 + $0x20] sm:$0xff pattern:$0x73625140]
    %4672 = vst [vmem:[#allocation1] ss:$4 sm:$0xff] %v4345
    %4673 = vst [vmem:[%s4586] ss:$4 sm:$0xff] %v4441
    %4674 = vst [vmem:[%s4588] ss:$4 sm:$0xff] %v4442
    %4675 = vst [vmem:[%s4590] ss:$4 sm:$0xff] %v4443
    %4676 = vst [vmem:[%s4592] ss:$4 sm:$0xff] %v4346
    %4677 = vst [vmem:[%s4594] ss:$4 sm:$0xff] %v4444
    %4678 = vst [vmem:[%s4596] ss:$4 sm:$0xff] %v4445
    %4679 = vst [vmem:[%s4598] ss:$4 sm:$0xff] %v4446
    %v4680 = vld.sshfl [vmem:[#allocation1] sm:$0xff pattern:$0x73625140]
    %v4681 = vld.sshfl [vmem:[#allocation1 + $0x20] sm:$0xff pattern:$0x73625140]
    %4682 = vst [vmem:[#allocation1] ss:$4 sm:$0xff] %v4347
    %4683 = vst [vmem:[%s4586] ss:$4 sm:$0xff] %v4447
    %4684 = vst [vmem:[%s4588] ss:$4 sm:$0xff] %v4448
    %4685 = vst [vmem:[%s4590] ss:$4 sm:$0xff] %v4449
    %4686 = vst [vmem:[%s4592] ss:$4 sm:$0xff] %v4348
    %4687 = vst [vmem:[%s4594] ss:$4 sm:$0xff] %v4450
    %4688 = vst [vmem:[%s4596] ss:$4 sm:$0xff] %v4451
    %4689 = vst [vmem:[%s4598] ss:$4 sm:$0xff] %v4452
    %v4690 = vld.sshfl [vmem:[#allocation1] sm:$0xff pattern:$0x73625140]
    %v4691 = vld.sshfl [vmem:[#allocation1 + $0x20] sm:$0xff pattern:$0x73625140]
    %4692 = vst [vmem:[#allocation1] ss:$4 sm:$0xff] %v4349
    %4693 = vst [vmem:[%s4586] ss:$4 sm:$0xff] %v4453
    %4694 = vst [vmem:[%s4588] ss:$4 sm:$0xff] %v4454
    %4695 = vst [vmem:[%s4590] ss:$4 sm:$0xff] %v4455
    %4696 = vst [vmem:[%s4592] ss:$4 sm:$0xff] %v4350
    %4697 = vst [vmem:[%s4594] ss:$4 sm:$0xff] %v4456
    %4698 = vst [vmem:[%s4596] ss:$4 sm:$0xff] %v4457
    %4699 = vst [vmem:[%s4598] ss:$4 sm:$0xff] %v4458
    %v4700 = vld.sshfl [vmem:[#allocation1] sm:$0xff pattern:$0x73625140]
    %v4701 = vld.sshfl [vmem:[#allocation1 + $0x20] sm:$0xff pattern:$0x73625140]
    %4702 = vst [vmem:[#allocation1] ss:$4 sm:$0xff] %v4351
    %4703 = vst [vmem:[%s4586] ss:$4 sm:$0xff] %v4459
    %4704 = vst [vmem:[%s4588] ss:$4 sm:$0xff] %v4460
    %4705 = vst [vmem:[%s4590] ss:$4 sm:$0xff] %v4461
    %4706 = vst [vmem:[%s4592] ss:$4 sm:$0xff] %v4352
    %4707 = vst [vmem:[%s4594] ss:$4 sm:$0xff] %v4462
    %4708 = vst [vmem:[%s4596] ss:$4 sm:$0xff] %v4463
    %4709 = vst [vmem:[%s4598] ss:$4 sm:$0xff] %v4464
    %v4710 = vld.sshfl [vmem:[#allocation1] sm:$0xff pattern:$0x73625140]
    %v4711 = vld.sshfl [vmem:[#allocation1 + $0x20] sm:$0xff pattern:$0x73625140]
    %4712 = vst [vmem:[#allocation1] ss:$4 sm:$0xff] %v4353
    %4713 = vst [vmem:[%s4586] ss:$4 sm:$0xff] %v4465
    %4714 = vst [vmem:[%s4588] ss:$4 sm:$0xff] %v4466
    %4715 = vst [vmem:[%s4590] ss:$4 sm:$0xff] %v4467
    %4716 = vst [vmem:[%s4592] ss:$4 sm:$0xff] %v4354
    %4717 = vst [vmem:[%s4594] ss:$4 sm:$0xff] %v4468
    %4718 = vst [vmem:[%s4596] ss:$4 sm:$0xff] %v4469
    %4719 = vst [vmem:[%s4598] ss:$4 sm:$0xff] %v4470
    %v4720 = vld.sshfl [vmem:[#allocation1] sm:$0xff pattern:$0x73625140]
    %v4721 = vld.sshfl [vmem:[#allocation1 + $0x20] sm:$0xff pattern:$0x73625140]
    %4722 = vst [vmem:[#allocation1] ss:$4 sm:$0xff] %v4355
    %4723 = vst [vmem:[%s4586] ss:$4 sm:$0xff] %v4471
    %4724 = vst [vmem:[%s4588] ss:$4 sm:$0xff] %v4472
    %4725 = vst [vmem:[%s4590] ss:$4 sm:$0xff] %v4473
    %4726 = vst [vmem:[%s4592] ss:$4 sm:$0xff] %v4356
    %4727 = vst [vmem:[%s4594] ss:$4 sm:$0xff] %v4474
    %4728 = vst [vmem:[%s4596] ss:$4 sm:$0xff] %v4475
    %4729 = vst [vmem:[%s4598] ss:$4 sm:$0xff] %v4476
    %v4730 = vld.sshfl [vmem:[#allocation1] sm:$0xff pattern:$0x73625140]
    %v4731 = vld.sshfl [vmem:[#allocation1 + $0x20] sm:$0xff pattern:$0x73625140]
    %4732 = vst [vmem:[#allocation1] ss:$4 sm:$0xff] %v4357
    %4733 = vst [vmem:[%s4586] ss:$4 sm:$0xff] %v4477
    %4734 = vst [vmem:[%s4588] ss:$4 sm:$0xff] %v4478
    %4735 = vst [vmem:[%s4590] ss:$4 sm:$0xff] %v4479
    %4736 = vst [vmem:[%s4592] ss:$4 sm:$0xff] %v4358
    %4737 = vst [vmem:[%s4594] ss:$4 sm:$0xff] %v4480
    %4738 = vst [vmem:[%s4596] ss:$4 sm:$0xff] %v4481
    %4739 = vst [vmem:[%s4598] ss:$4 sm:$0xff] %v4482
    %v4740 = vld.sshfl [vmem:[#allocation1] sm:$0xff pattern:$0x73625140]
    %v4741 = vld.sshfl [vmem:[#allocation1 + $0x20] sm:$0xff pattern:$0x73625140]
    %4742 = vst [vmem:[#allocation1] ss:$4 sm:$0xff] %v4359
    %4743 = vst [vmem:[%s4586] ss:$4 sm:$0xff] %v4483
    %4744 = vst [vmem:[%s4588] ss:$4 sm:$0xff] %v4484
    %4745 = vst [vmem:[%s4590] ss:$4 sm:$0xff] %v4485
    %4746 = vst [vmem:[%s4592] ss:$4 sm:$0xff] %v4360
    %4747 = vst [vmem:[%s4594] ss:$4 sm:$0xff] %v4486
    %4748 = vst [vmem:[%s4596] ss:$4 sm:$0xff] %v4487
    %4749 = vst [vmem:[%s4598] ss:$4 sm:$0xff] %v4488
    %v4750 = vld.sshfl [vmem:[#allocation1] sm:$0xff pattern:$0x73625140]
    %v4751 = vld.sshfl [vmem:[#allocation1 + $0x20] sm:$0xff pattern:$0x73625140]
    %4752 = vst [vmem:[#allocation1] ss:$4 sm:$0xff] %v4361
    %4753 = vst [vmem:[%s4586] ss:$4 sm:$0xff] %v4489
    %4754 = vst [vmem:[%s4588] ss:$4 sm:$0xff] %v4490
    %4755 = vst [vmem:[%s4590] ss:$4 sm:$0xff] %v4491
    %4756 = vst [vmem:[%s4592] ss:$4 sm:$0xff] %v4362
    %4757 = vst [vmem:[%s4594] ss:$4 sm:$0xff] %v4492
    %4758 = vst [vmem:[%s4596] ss:$4 sm:$0xff] %v4493
    %4759 = vst [vmem:[%s4598] ss:$4 sm:$0xff] %v4494
    %v4760 = vld.sshfl [vmem:[#allocation1] sm:$0xff pattern:$0x73625140]
    %v4761 = vld.sshfl [vmem:[#allocation1 + $0x20] sm:$0xff pattern:$0x73625140]
    %4762 = vst [vmem:[#allocation1] ss:$4 sm:$0xff] %v4363
    %4763 = vst [vmem:[%s4586] ss:$4 sm:$0xff] %v4495
    %4764 = vst [vmem:[%s4588] ss:$4 sm:$0xff] %v4496
    %4765 = vst [vmem:[%s4590] ss:$4 sm:$0xff] %v4497
    %4766 = vst [vmem:[%s4592] ss:$4 sm:$0xff] %v4364
    %4767 = vst [vmem:[%s4594] ss:$4 sm:$0xff] %v4498
    %4768 = vst [vmem:[%s4596] ss:$4 sm:$0xff] %v4499
    %4769 = vst [vmem:[%s4598] ss:$4 sm:$0xff] %v4500
    %v4770 = vld.sshfl [vmem:[#allocation1] sm:$0xff pattern:$0x73625140]
    %v4771 = vld.sshfl [vmem:[#allocation1 + $0x20] sm:$0xff pattern:$0x73625140]
    %4772 = vst [vmem:[#allocation1] ss:$4 sm:$0xff] %v4365
    %4773 = vst [vmem:[%s4586] ss:$4 sm:$0xff] %v4501
    %4774 = vst [vmem:[%s4588] ss:$4 sm:$0xff] %v4502
    %4775 = vst [vmem:[%s4590] ss:$4 sm:$0xff] %v4503
    %4776 = vst [vmem:[%s4592] ss:$4 sm:$0xff] %v4366
    %4777 = vst [vmem:[%s4594] ss:$4 sm:$0xff] %v4504
    %4778 = vst [vmem:[%s4596] ss:$4 sm:$0xff] %v4505
    %4779 = vst [vmem:[%s4598] ss:$4 sm:$0xff] %v4506
    %v4780 = vld.sshfl [vmem:[#allocation1] sm:$0xff pattern:$0x73625140]
    %v4781 = vld.sshfl [vmem:[#allocation1 + $0x20] sm:$0xff pattern:$0x73625140]
    %4782 = vst [vmem:[#allocation1] ss:$4 sm:$0xff] %v4367
    %4783 = vst [vmem:[%s4586] ss:$4 sm:$0xff] %v4507
    %4784 = vst [vmem:[%s4588] ss:$4 sm:$0xff] %v4508
    %4785 = vst [vmem:[%s4590] ss:$4 sm:$0xff] %v4509
    %4786 = vst [vmem:[%s4592] ss:$4 sm:$0xff] %v4368
    %4787 = vst [vmem:[%s4594] ss:$4 sm:$0xff] %v4510
    %4788 = vst [vmem:[%s4596] ss:$4 sm:$0xff] %v4511
    %4789 = vst [vmem:[%s4598] ss:$4 sm:$0xff] %v4512
    %v4790 = vld.sshfl [vmem:[#allocation1] sm:$0xff pattern:$0x73625140]
    %v4791 = vld.sshfl [vmem:[#allocation1 + $0x20] sm:$0xff pattern:$0x73625140]
    %4792 = vst [vmem:[#allocation1] ss:$4 sm:$0xff] %v4369
    %4793 = vst [vmem:[%s4586] ss:$4 sm:$0xff] %v4513
    %4794 = vst [vmem:[%s4588] ss:$4 sm:$0xff] %v4514
    %4795 = vst [vmem:[%s4590] ss:$4 sm:$0xff] %v4515
    %4796 = vst [vmem:[%s4592] ss:$4 sm:$0xff] %v4370
    %4797 = vst [vmem:[%s4594] ss:$4 sm:$0xff] %v4516
    %4798 = vst [vmem:[%s4596] ss:$4 sm:$0xff] %v4517
    %4799 = vst [vmem:[%s4598] ss:$4 sm:$0xff] %v4518
    %v4800 = vld.sshfl [vmem:[#allocation1] sm:$0xff pattern:$0x73625140]
    %v4801 = vld.sshfl [vmem:[#allocation1 + $0x20] sm:$0xff pattern:$0x73625140]
    %4802 = vst [vmem:[#allocation1] ss:$4 sm:$0xff] %v4371
    %4803 = vst [vmem:[%s4586] ss:$4 sm:$0xff] %v4519
    %4804 = vst [vmem:[%s4588] ss:$4 sm:$0xff] %v4520
    %4805 = vst [vmem:[%s4590] ss:$4 sm:$0xff] %v4521
    %4806 = vst [vmem:[%s4592] ss:$4 sm:$0xff] %v4372
    %4807 = vst [vmem:[%s4594] ss:$4 sm:$0xff] %v4522
    %4808 = vst [vmem:[%s4596] ss:$4 sm:$0xff] %v4523
    %4809 = vst [vmem:[%s4598] ss:$4 sm:$0xff] %v4524
    %v4810 = vld.sshfl [vmem:[#allocation1] sm:$0xff pattern:$0x73625140]
    %v4811 = vld.sshfl [vmem:[#allocation1 + $0x20] sm:$0xff pattern:$0x73625140]
    %4812 = vst [vmem:[#allocation1] ss:$4 sm:$0xff] %v4373
    %4813 = vst [vmem:[%s4586] ss:$4 sm:$0xff] %v4525
    %4814 = vst [vmem:[%s4588] ss:$4 sm:$0xff] %v4526
    %4815 = vst [vmem:[%s4590] ss:$4 sm:$0xff] %v4527
    %4816 = vst [vmem:[%s4592] ss:$4 sm:$0xff] %v4374
    %4817 = vst [vmem:[%s4594] ss:$4 sm:$0xff] %v4528
    %4818 = vst [vmem:[%s4596] ss:$4 sm:$0xff] %v4529
    %4819 = vst [vmem:[%s4598] ss:$4 sm:$0xff] %v4530
    %v4820 = vld.sshfl [vmem:[#allocation1] sm:$0xff pattern:$0x73625140]
    %v4821 = vld.sshfl [vmem:[#allocation1 + $0x20] sm:$0xff pattern:$0x73625140]
    %4822 = vst [vmem:[#allocation1] ss:$4 sm:$0xff] %v4375
    %4823 = vst [vmem:[%s4586] ss:$4 sm:$0xff] %v4531
    %4824 = vst [vmem:[%s4588] ss:$4 sm:$0xff] %v4532
    %4825 = vst [vmem:[%s4590] ss:$4 sm:$0xff] %v4533
    %4826 = vst [vmem:[%s4592] ss:$4 sm:$0xff] %v4376
    %4827 = vst [vmem:[%s4594] ss:$4 sm:$0xff] %v4534
    %4828 = vst [vmem:[%s4596] ss:$4 sm:$0xff] %v4535
    %4829 = vst [vmem:[%s4598] ss:$4 sm:$0xff] %v4536
    %v4830 = vld.sshfl [vmem:[#allocation1] sm:$0xff pattern:$0x73625140]
    %v4831 = vld.sshfl [vmem:[#allocation1 + $0x20] sm:$0xff pattern:$0x73625140]
    %4832 = vst [vmem:[#allocation1] ss:$4 sm:$0xff] %v4377
    %4833 = vst [vmem:[%s4586] ss:$4 sm:$0xff] %v4537
    %4834 = vst [vmem:[%s4588] ss:$4 sm:$0xff] %v4538
    %4835 = vst [vmem:[%s4590] ss:$4 sm:$0xff] %v4539
    %4836 = vst [vmem:[%s4592] ss:$4 sm:$0xff] %v4378
    %4837 = vst [vmem:[%s4594] ss:$4 sm:$0xff] %v4540
    %4838 = vst [vmem:[%s4596] ss:$4 sm:$0xff] %v4541
    %4839 = vst [vmem:[%s4598] ss:$4 sm:$0xff] %v4542
    %v4840 = vld.sshfl [vmem:[#allocation1] sm:$0xff pattern:$0x73625140]
    %v4841 = vld.sshfl [vmem:[#allocation1 + $0x20] sm:$0xff pattern:$0x73625140]
    %4842 = vst [vmem:[#allocation1] ss:$4 sm:$0xff] %v4379
    %4843 = vst [vmem:[%s4586] ss:$4 sm:$0xff] %v4543
    %4844 = vst [vmem:[%s4588] ss:$4 sm:$0xff] %v4544
    %4845 = vst [vmem:[%s4590] ss:$4 sm:$0xff] %v4545
    %4846 = vst [vmem:[%s4592] ss:$4 sm:$0xff] %v4380
    %4847 = vst [vmem:[%s4594] ss:$4 sm:$0xff] %v4546
    %4848 = vst [vmem:[%s4596] ss:$4 sm:$0xff] %v4547
    %4849 = vst [vmem:[%s4598] ss:$4 sm:$0xff] %v4548
    %v4850 = vld.sshfl [vmem:[#allocation1] sm:$0xff pattern:$0x73625140]
    %v4851 = vld.sshfl [vmem:[#allocation1 + $0x20] sm:$0xff pattern:$0x73625140]
    %4852 = vst [vmem:[#allocation1] ss:$4 sm:$0xff] %v4381
    %4853 = vst [vmem:[%s4586] ss:$4 sm:$0xff] %v4549
    %4854 = vst [vmem:[%s4588] ss:$4 sm:$0xff] %v4550
    %4855 = vst [vmem:[%s4590] ss:$4 sm:$0xff] %v4551
    %4856 = vst [vmem:[%s4592] ss:$4 sm:$0xff] %v4382
    %4857 = vst [vmem:[%s4594] ss:$4 sm:$0xff] %v4552
    %4858 = vst [vmem:[%s4596] ss:$4 sm:$0xff] %v4553
    %4859 = vst [vmem:[%s4598] ss:$4 sm:$0xff] %v4554
    %v4860 = vld.sshfl [vmem:[#allocation1] sm:$0xff pattern:$0x73625140]
    %v4861 = vld.sshfl [vmem:[#allocation1 + $0x20] sm:$0xff pattern:$0x73625140]
    %4862 = vst [vmem:[#allocation1] ss:$4 sm:$0xff] %v4383
    %4863 = vst [vmem:[%s4586] ss:$4 sm:$0xff] %v4555
    %4864 = vst [vmem:[%s4588] ss:$4 sm:$0xff] %v4556
    %4865 = vst [vmem:[%s4590] ss:$4 sm:$0xff] %v4557
    %4866 = vst [vmem:[%s4592] ss:$4 sm:$0xff] %v4384
    %4867 = vst [vmem:[%s4594] ss:$4 sm:$0xff] %v4558
    %4868 = vst [vmem:[%s4596] ss:$4 sm:$0xff] %v4559
    %4869 = vst [vmem:[%s4598] ss:$4 sm:$0xff] %v4560
    %v4870 = vld.sshfl [vmem:[#allocation1] sm:$0xff pattern:$0x73625140]
    %v4871 = vld.sshfl [vmem:[#allocation1 + $0x20] sm:$0xff pattern:$0x73625140]
    %4872 = vst [vmem:[#allocation1] ss:$4 sm:$0xff] %v4385
    %4873 = vst [vmem:[%s4586] ss:$4 sm:$0xff] %v4561
    %4874 = vst [vmem:[%s4588] ss:$4 sm:$0xff] %v4562
    %4875 = vst [vmem:[%s4590] ss:$4 sm:$0xff] %v4563
    %4876 = vst [vmem:[%s4592] ss:$4 sm:$0xff] %v4386
    %4877 = vst [vmem:[%s4594] ss:$4 sm:$0xff] %v4564
    %4878 = vst [vmem:[%s4596] ss:$4 sm:$0xff] %v4565
    %4879 = vst [vmem:[%s4598] ss:$4 sm:$0xff] %v4566
    %v4880 = vld.sshfl [vmem:[#allocation1] sm:$0xff pattern:$0x73625140]
    %v4881 = vld.sshfl [vmem:[#allocation1 + $0x20] sm:$0xff pattern:$0x73625140]
    %4882 = vst [vmem:[#allocation1] ss:$4 sm:$0xff] %v4387
    %4883 = vst [vmem:[%s4586] ss:$4 sm:$0xff] %v4567
    %4884 = vst [vmem:[%s4588] ss:$4 sm:$0xff] %v4568
    %4885 = vst [vmem:[%s4590] ss:$4 sm:$0xff] %v4569
    %4886 = vst [vmem:[%s4592] ss:$4 sm:$0xff] %v4388
    %4887 = vst [vmem:[%s4594] ss:$4 sm:$0xff] %v4570
    %4888 = vst [vmem:[%s4596] ss:$4 sm:$0xff] %v4571
    %4889 = vst [vmem:[%s4598] ss:$4 sm:$0xff] %v4572
    %v4890 = vld.sshfl [vmem:[#allocation1] sm:$0xff pattern:$0x73625140]
    %v4891 = vld.sshfl [vmem:[#allocation1 + $0x20] sm:$0xff pattern:$0x73625140]
    %4892 = vst [vmem:[#allocation1] ss:$4 sm:$0xff] %v4389
    %4893 = vst [vmem:[%s4586] ss:$4 sm:$0xff] %v4573
    %4894 = vst [vmem:[%s4588] ss:$4 sm:$0xff] %v4574
    %4895 = vst [vmem:[%s4590] ss:$4 sm:$0xff] %v4575
    %4896 = vst [vmem:[%s4592] ss:$4 sm:$0xff] %v4390
    %4897 = vst [vmem:[%s4594] ss:$4 sm:$0xff] %v4576
    %4898 = vst [vmem:[%s4596] ss:$4 sm:$0xff] %v4577
    %4899 = vst [vmem:[%s4598] ss:$4 sm:$0xff] %v4578
    %v4900 = vld.sshfl [vmem:[#allocation1] sm:$0xff pattern:$0x73625140]
    %v4901 = vld.sshfl [vmem:[#allocation1 + $0x20] sm:$0xff pattern:$0x73625140]
    %4902 = vst [vmem:[#allocation1] ss:$4 sm:$0xff] %v4391
    %4903 = vst [vmem:[%s4586] ss:$4 sm:$0xff] %v4579
    %4904 = vst [vmem:[%s4588] ss:$4 sm:$0xff] %v4580
    %4905 = vst [vmem:[%s4590] ss:$4 sm:$0xff] %v4581
    %4906 = vst [vmem:[%s4592] ss:$4 sm:$0xff] %v4392
    %4907 = vst [vmem:[%s4594] ss:$4 sm:$0xff] %v4582
    %4908 = vst [vmem:[%s4596] ss:$4 sm:$0xff] %v4583
    %4909 = vst [vmem:[%s4598] ss:$4 sm:$0xff] %v4584
    %v4910 = vld.sshfl [vmem:[#allocation1] sm:$0xff pattern:$0x73625140]
    %v4911 = vld.sshfl [vmem:[#allocation1 + $0x20] sm:$0xff pattern:$0x73625140]
    %4912 = vset.pattern.permute.xlu0 0
    %4913 = vperm.xlu0 %4912, %v4600
    %v4914 = vpop.permute.xlu0 %4913
    %4915 = vset.pattern.permute.xlu0 0
    %4916 = vperm.xlu0 %4915, %v4601
    %v4917 = vpop.permute.xlu0 %4916
    %4918 = vset.pattern.permute.xlu0 0
    %4919 = vperm.xlu0 %4918, %v4610
    %v4920 = vpop.permute.xlu0 %4919
    %4921 = vset.pattern.permute.xlu0 0
    %4922 = vperm.xlu0 %4921, %v4611
    %v4923 = vpop.permute.xlu0 %4922
    %4924 = vset.pattern.permute.xlu0 0
    %4925 = vperm.xlu0 %4924, %v4620
    %v4926 = vpop.permute.xlu0 %4925
    %4927 = vset.pattern.permute.xlu0 0
    %4928 = vperm.xlu0 %4927, %v4621
    %v4929 = vpop.permute.xlu0 %4928
    %4930 = vset.pattern.permute.xlu0 0
    %4931 = vperm.xlu0 %4930, %v4630
    %v4932 = vpop.permute.xlu0 %4931
    %4933 = vset.pattern.permute.xlu0 0
    %4934 = vperm.xlu0 %4933, %v4631
    %v4935 = vpop.permute.xlu0 %4934
    %4936 = vset.pattern.permute.xlu0 0
    %4937 = vperm.xlu0 %4936, %v4640
    %v4938 = vpop.permute.xlu0 %4937
    %4939 = vset.pattern.permute.xlu0 0
    %4940 = vperm.xlu0 %4939, %v4641
    %v4941 = vpop.permute.xlu0 %4940
    %4942 = vset.pattern.permute.xlu0 0
    %4943 = vperm.xlu0 %4942, %v4650
    %v4944 = vpop.permute.xlu0 %4943
    %4945 = vset.pattern.permute.xlu0 0
    %4946 = vperm.xlu0 %4945, %v4651
    %v4947 = vpop.permute.xlu0 %4946
    %4948 = vset.pattern.permute.xlu0 0
    %4949 = vperm.xlu0 %4948, %v4660
    %v4950 = vpop.permute.xlu0 %4949
    %4951 = vset.pattern.permute.xlu0 0
    %4952 = vperm.xlu0 %4951, %v4661
    %v4953 = vpop.permute.xlu0 %4952
    %4954 = vset.pattern.permute.xlu0 0
    %4955 = vperm.xlu0 %4954, %v4670
    %v4956 = vpop.permute.xlu0 %4955
    %4957 = vset.pattern.permute.xlu0 0
    %4958 = vperm.xlu0 %4957, %v4671
    %v4959 = vpop.permute.xlu0 %4958
    %4960 = vset.pattern.permute.xlu0 0
    %4961 = vperm.xlu0 %4960, %v4680
    %v4962 = vpop.permute.xlu0 %4961
    %4963 = vset.pattern.permute.xlu0 0
    %4964 = vperm.xlu0 %4963, %v4681
    %v4965 = vpop.permute.xlu0 %4964
    %4966 = vset.pattern.permute.xlu0 0
    %4967 = vperm.xlu0 %4966, %v4690
    %v4968 = vpop.permute.xlu0 %4967
    %4969 = vset.pattern.permute.xlu0 0
    %4970 = vperm.xlu0 %4969, %v4691
    %v4971 = vpop.permute.xlu0 %4970
    %4972 = vset.pattern.permute.xlu0 0
    %4973 = vperm.xlu0 %4972, %v4700
    %v4974 = vpop.permute.xlu0 %4973
    %4975 = vset.pattern.permute.xlu0 0
    %4976 = vperm.xlu0 %4975, %v4701
    %v4977 = vpop.permute.xlu0 %4976
    %4978 = vset.pattern.permute.xlu0 0
    %4979 = vperm.xlu0 %4978, %v4710
    %v4980 = vpop.permute.xlu0 %4979
    %4981 = vset.pattern.permute.xlu0 0
    %4982 = vperm.xlu0 %4981, %v4711
    %v4983 = vpop.permute.xlu0 %4982
    %4984 = vset.pattern.permute.xlu0 0
    %4985 = vperm.xlu0 %4984, %v4720
    %v4986 = vpop.permute.xlu0 %4985
    %4987 = vset.pattern.permute.xlu0 0
    %4988 = vperm.xlu0 %4987, %v4721
    %v4989 = vpop.permute.xlu0 %4988
    %4990 = vset.pattern.permute.xlu0 0
    %4991 = vperm.xlu0 %4990, %v4730
    %v4992 = vpop.permute.xlu0 %4991
    %4993 = vset.pattern.permute.xlu0 0
    %4994 = vperm.xlu0 %4993, %v4731
    %v4995 = vpop.permute.xlu0 %4994
    %4996 = vset.pattern.permute.xlu0 0
    %4997 = vperm.xlu0 %4996, %v4740
    %v4998 = vpop.permute.xlu0 %4997
    %4999 = vset.pattern.permute.xlu0 0
    %5000 = vperm.xlu0 %4999, %v4741
    %v5001 = vpop.permute.xlu0 %5000
    %5002 = vset.pattern.permute.xlu0 0
    %5003 = vperm.xlu0 %5002, %v4750
    %v5004 = vpop.permute.xlu0 %5003
    %5005 = vset.pattern.permute.xlu0 0
    %5006 = vperm.xlu0 %5005, %v4751
    %v5007 = vpop.permute.xlu0 %5006
    %5008 = vset.pattern.permute.xlu0 0
    %5009 = vperm.xlu0 %5008, %v4760
    %v5010 = vpop.permute.xlu0 %5009
    %5011 = vset.pattern.permute.xlu0 0
    %5012 = vperm.xlu0 %5011, %v4761
    %v5013 = vpop.permute.xlu0 %5012
    %5014 = vset.pattern.permute.xlu0 0
    %5015 = vperm.xlu0 %5014, %v4770
    %v5016 = vpop.permute.xlu0 %5015
    %5017 = vset.pattern.permute.xlu0 0
    %5018 = vperm.xlu0 %5017, %v4771
    %v5019 = vpop.permute.xlu0 %5018
    %5020 = vset.pattern.permute.xlu0 0
    %5021 = vperm.xlu0 %5020, %v4780
    %v5022 = vpop.permute.xlu0 %5021
    %5023 = vset.pattern.permute.xlu0 0
    %5024 = vperm.xlu0 %5023, %v4781
    %v5025 = vpop.permute.xlu0 %5024
    %5026 = vset.pattern.permute.xlu0 0
    %5027 = vperm.xlu0 %5026, %v4790
    %v5028 = vpop.permute.xlu0 %5027
    %5029 = vset.pattern.permute.xlu0 0
    %5030 = vperm.xlu0 %5029, %v4791
    %v5031 = vpop.permute.xlu0 %5030
    %5032 = vset.pattern.permute.xlu0 0
    %5033 = vperm.xlu0 %5032, %v4800
    %v5034 = vpop.permute.xlu0 %5033
    %5035 = vset.pattern.permute.xlu0 0
    %5036 = vperm.xlu0 %5035, %v4801
    %v5037 = vpop.permute.xlu0 %5036
    %5038 = vset.pattern.permute.xlu0 0
    %5039 = vperm.xlu0 %5038, %v4810
    %v5040 = vpop.permute.xlu0 %5039
    %5041 = vset.pattern.permute.xlu0 0
    %5042 = vperm.xlu0 %5041, %v4811
    %v5043 = vpop.permute.xlu0 %5042
    %5044 = vset.pattern.permute.xlu0 0
    %5045 = vperm.xlu0 %5044, %v4820
    %v5046 = vpop.permute.xlu0 %5045
    %5047 = vset.pattern.permute.xlu0 0
    %5048 = vperm.xlu0 %5047, %v4821
    %v5049 = vpop.permute.xlu0 %5048
    %5050 = vset.pattern.permute.xlu0 0
    %5051 = vperm.xlu0 %5050, %v4830
    %v5052 = vpop.permute.xlu0 %5051
    %5053 = vset.pattern.permute.xlu0 0
    %5054 = vperm.xlu0 %5053, %v4831
    %v5055 = vpop.permute.xlu0 %5054
    %5056 = vset.pattern.permute.xlu0 0
    %5057 = vperm.xlu0 %5056, %v4840
    %v5058 = vpop.permute.xlu0 %5057
    %5059 = vset.pattern.permute.xlu0 0
    %5060 = vperm.xlu0 %5059, %v4841
    %v5061 = vpop.permute.xlu0 %5060
    %5062 = vset.pattern.permute.xlu0 0
    %5063 = vperm.xlu0 %5062, %v4850
    %v5064 = vpop.permute.xlu0 %5063
    %5065 = vset.pattern.permute.xlu0 0
    %5066 = vperm.xlu0 %5065, %v4851
    %v5067 = vpop.permute.xlu0 %5066
    %5068 = vset.pattern.permute.xlu0 0
    %5069 = vperm.xlu0 %5068, %v4860
    %v5070 = vpop.permute.xlu0 %5069
    %5071 = vset.pattern.permute.xlu0 0
    %5072 = vperm.xlu0 %5071, %v4861
    %v5073 = vpop.permute.xlu0 %5072
    %5074 = vset.pattern.permute.xlu0 0
    %5075 = vperm.xlu0 %5074, %v4870
    %v5076 = vpop.permute.xlu0 %5075
    %5077 = vset.pattern.permute.xlu0 0
    %5078 = vperm.xlu0 %5077, %v4871
    %v5079 = vpop.permute.xlu0 %5078
    %5080 = vset.pattern.permute.xlu0 0
    %5081 = vperm.xlu0 %5080, %v4880
    %v5082 = vpop.permute.xlu0 %5081
    %5083 = vset.pattern.permute.xlu0 0
    %5084 = vperm.xlu0 %5083, %v4881
    %v5085 = vpop.permute.xlu0 %5084
    %5086 = vset.pattern.permute.xlu0 0
    %5087 = vperm.xlu0 %5086, %v4890
    %v5088 = vpop.permute.xlu0 %5087
    %5089 = vset.pattern.permute.xlu0 0
    %5090 = vperm.xlu0 %5089, %v4891
    %v5091 = vpop.permute.xlu0 %5090
    %5092 = vset.pattern.permute.xlu0 0
    %5093 = vperm.xlu0 %5092, %v4900
    %v5094 = vpop.permute.xlu0 %5093
    %5095 = vset.pattern.permute.xlu0 0
    %5096 = vperm.xlu0 %5095, %v4901
    %v5097 = vpop.permute.xlu0 %5096
    %5098 = vset.pattern.permute.xlu0 0
    %5099 = vperm.xlu0 %5098, %v4910
    %v5100 = vpop.permute.xlu0 %5099
    %5101 = vset.pattern.permute.xlu0 0
    %5102 = vperm.xlu0 %5101, %v4911
    %v5103 = vpop.permute.xlu0 %5102
    %v5104 = vperm.slane %v4914, %v51
    %v5105 = vperm.slane %v4917, %v2650
    %v5106 = vsel %vm2652, %v5105, %v5104
    %v5107 = vperm.slane %v4920, %v2654
    %v5108 = vsel %vm2656, %v5107, %v5106
    %v5109 = vperm.slane %v4923, %v2658
    %v5110 = vsel %vm2660, %v5109, %v5108
    %v5111 = vperm.slane %v4926, %v2662
    %v5112 = vsel %vm2664, %v5111, %v5110
    %v5113 = vperm.slane %v4929, %v2666
    %v5114 = vsel %vm2668, %v5113, %v5112
    %v5115 = vperm.slane %v4932, %v2670
    %v5116 = vsel %vm2672, %v5115, %v5114
    %v5117 = vperm.slane %v4935, %v2674
    %v5118 = vsel %vm2676, %v5117, %v5116
    %v5119 = vperm.slane %v4938, %v2678
    %v5120 = vsel %vm2680, %v5119, %v5118
    %v5121 = vperm.slane %v4941, %v2682
    %v5122 = vsel %vm2684, %v5121, %v5120
    %v5123 = vperm.slane %v4944, %v2686
    %v5124 = vsel %vm2688, %v5123, %v5122
    %v5125 = vperm.slane %v4947, %v2690
    %v5126 = vsel %vm2692, %v5125, %v5124
    %v5127 = vperm.slane %v4950, %v2694
    %v5128 = vsel %vm2696, %v5127, %v5126
    %v5129 = vperm.slane %v4953, %v2698
    %v5130 = vsel %vm2700, %v5129, %v5128
    %v5131 = vperm.slane %v4956, %v2702
    %v5132 = vsel %vm2704, %v5131, %v5130
    %v5133 = vperm.slane %v4959, %v2706
    %v5134 = vsel %vm2708, %v5133, %v5132
    %v5135 = vperm.slane %v4962, %v51
    %v5136 = vperm.slane %v4965, %v2650
    %v5137 = vsel %vm2652, %v5136, %v5135
    %v5138 = vperm.slane %v4968, %v2654
    %v5139 = vsel %vm2656, %v5138, %v5137
    %v5140 = vperm.slane %v4971, %v2658
    %v5141 = vsel %vm2660, %v5140, %v5139
    %v5142 = vperm.slane %v4974, %v2662
    %v5143 = vsel %vm2664, %v5142, %v5141
    %v5144 = vperm.slane %v4977, %v2666
    %v5145 = vsel %vm2668, %v5144, %v5143
    %v5146 = vperm.slane %v4980, %v2670
    %v5147 = vsel %vm2672, %v5146, %v5145
    %v5148 = vperm.slane %v4983, %v2674
    %v5149 = vsel %vm2676, %v5148, %v5147
    %v5150 = vperm.slane %v4986, %v2678
    %v5151 = vsel %vm2680, %v5150, %v5149
    %v5152 = vperm.slane %v4989, %v2682
    %v5153 = vsel %vm2684, %v5152, %v5151
    %v5154 = vperm.slane %v4992, %v2686
    %v5155 = vsel %vm2688, %v5154, %v5153
    %v5156 = vperm.slane %v4995, %v2690
    %v5157 = vsel %vm2692, %v5156, %v5155
    %v5158 = vperm.slane %v4998, %v2694
    %v5159 = vsel %vm2696, %v5158, %v5157
    %v5160 = vperm.slane %v5001, %v2698
    %v5161 = vsel %vm2700, %v5160, %v5159
    %v5162 = vperm.slane %v5004, %v2702
    %v5163 = vsel %vm2704, %v5162, %v5161
    %v5164 = vperm.slane %v5007, %v2706
    %v5165 = vsel %vm2708, %v5164, %v5163
    %v5166 = vperm.slane %v5010, %v51
    %v5167 = vperm.slane %v5013, %v2650
    %v5168 = vsel %vm2652, %v5167, %v5166
    %v5169 = vperm.slane %v5016, %v2654
    %v5170 = vsel %vm2656, %v5169, %v5168
    %v5171 = vperm.slane %v5019, %v2658
    %v5172 = vsel %vm2660, %v5171, %v5170
    %v5173 = vperm.slane %v5022, %v2662
    %v5174 = vsel %vm2664, %v5173, %v5172
    %v5175 = vperm.slane %v5025, %v2666
    %v5176 = vsel %vm2668, %v5175, %v5174
    %v5177 = vperm.slane %v5028, %v2670
    %v5178 = vsel %vm2672, %v5177, %v5176
    %v5179 = vperm.slane %v5031, %v2674
    %v5180 = vsel %vm2676, %v5179, %v5178
    %v5181 = vperm.slane %v5034, %v2678
    %v5182 = vsel %vm2680, %v5181, %v5180
    %v5183 = vperm.slane %v5037, %v2682
    %v5184 = vsel %vm2684, %v5183, %v5182
    %v5185 = vperm.slane %v5040, %v2686
    %v5186 = vsel %vm2688, %v5185, %v5184
    %v5187 = vperm.slane %v5043, %v2690
    %v5188 = vsel %vm2692, %v5187, %v5186
    %v5189 = vperm.slane %v5046, %v2694
    %v5190 = vsel %vm2696, %v5189, %v5188
    %v5191 = vperm.slane %v5049, %v2698
    %v5192 = vsel %vm2700, %v5191, %v5190
    %v5193 = vperm.slane %v5052, %v2702
    %v5194 = vsel %vm2704, %v5193, %v5192
    %v5195 = vperm.slane %v5055, %v2706
    %v5196 = vsel %vm2708, %v5195, %v5194
    %v5197 = vperm.slane %v5058, %v51
    %v5198 = vperm.slane %v5061, %v2650
    %v5199 = vsel %vm2652, %v5198, %v5197
    %v5200 = vperm.slane %v5064, %v2654
    %v5201 = vsel %vm2656, %v5200, %v5199
    %v5202 = vperm.slane %v5067, %v2658
    %v5203 = vsel %vm2660, %v5202, %v5201
    %v5204 = vperm.slane %v5070, %v2662
    %v5205 = vsel %vm2664, %v5204, %v5203
    %v5206 = vperm.slane %v5073, %v2666
    %v5207 = vsel %vm2668, %v5206, %v5205
    %v5208 = vperm.slane %v5076, %v2670
    %v5209 = vsel %vm2672, %v5208, %v5207
    %v5210 = vperm.slane %v5079, %v2674
    %v5211 = vsel %vm2676, %v5210, %v5209
    %v5212 = vperm.slane %v5082, %v2678
    %v5213 = vsel %vm2680, %v5212, %v5211
    %v5214 = vperm.slane %v5085, %v2682
    %v5215 = vsel %vm2684, %v5214, %v5213
    %v5216 = vperm.slane %v5088, %v2686
    %v5217 = vsel %vm2688, %v5216, %v5215
    %v5218 = vperm.slane %v5091, %v2690
    %v5219 = vsel %vm2692, %v5218, %v5217
    %v5220 = vperm.slane %v5094, %v2694
    %v5221 = vsel %vm2696, %v5220, %v5219
    %v5222 = vperm.slane %v5097, %v2698
    %v5223 = vsel %vm2700, %v5222, %v5221
    %v5224 = vperm.slane %v5100, %v2702
    %v5225 = vsel %vm2704, %v5224, %v5223
    %v5226 = vperm.slane %v5103, %v2706
    %v5227 = vsel %vm2708, %v5226, %v5225
    %v5228 = vsel %vm453, %v5196, %v5134
    %v5229 = vsel %vm453, %v5227, %v5165
    %v5230 = vrot.slane %v5229, 6
    %v5231 = vsel %vm451, %v5228, %v5230
    %5232 = vst [vmem:[#allocation8] sm:$0xf] %v5231
    %vm5233 = vcmask 1024
    %5234 = vst.msk [vmem:[#allocation2] sm:$0x3] %vm5233, %v3809
    %5235 = vst.msk [vmem:[%s3] sm:$0x3] %vm5233, %v3809
    // Predicated region
    $region22: #{tpu_custom_call.1} parent=1 // pred_check
      _
    $region23: #{tpu_custom_call.1} parent=1 // pred_check_branch
      %5237 = sbr.rel (0) target = $region25
    $region24: #{tpu_custom_call.1} parent=1 // pred_region
      %5239 = vsyncadd [#allocation5], 0
      %s5241 = sshll.u32 [#allocation8], 4
      %s5242 = int_to_ptr.vmem [resolvable:$true] %s5241
      %s5243 = sshll.u32 %s2, 4
      %s5244 = int_to_ptr.hbm [resolvable:$true] %s5243
      %5246 = dma.vmem_to_hbm [thread:$0]  %s5242, 64, %s5244, [#allocation5]
    $region25: #{tpu_custom_call.1} parent=1 // pred_fallthru
      _
    // Predicated region
    $region26: #{tpu_custom_call.1} parent=1 // pred_check
      _
    $region27: #{tpu_custom_call.1} parent=1 // pred_check_branch
      %5248 = sbr.rel (0) target = $region29
    $region28: #{tpu_custom_call.1} parent=1 // pred_region
      _
    $region29: #{tpu_custom_call.1} parent=1 // pred_fallthru
      _
    // Predicated region
    $region30: #{tpu_custom_call.1} parent=1 // pred_check
      _
    $region31: #{tpu_custom_call.1} parent=1 // pred_check_branch
      %5250 = sbr.rel (0) target = $region33
    $region32: #{tpu_custom_call.1} parent=1 // pred_region
      %5252 = dma.done [#allocation5], 64
    $region33: #{tpu_custom_call.1} parent=1 // pred_fallthru
      _
    // Predicated region
    $region34: #{tpu_custom_call.1} parent=1 // pred_check
      _
    $region35: #{tpu_custom_call.1} parent=1 // pred_check_branch
      %5254 = sbr.rel (0) target = $region37
    $region36: #{tpu_custom_call.1} parent=1 // pred_region
      _
    $region37: #{tpu_custom_call.1} parent=1 // pred_fallthru
      _
    %5255 = vsyncpa [#allocation4], 1
    %5256 = vsyncpa [#allocation7], 1
    %5257 = vsyncpa [#allocation5], 1

</llo_original>
